<compile_context>
chip_gen: v5e
topology: v5e:2x2
jax: 0.10.0
libtpu: 0.0.40
codegen_flags: <defaults>
</compile_context>

<pallas_src>
import jax
import jax.numpy as jnp
from jax.experimental import pallas as pl
from jax.experimental.pallas import tpu as pltpu

_BN_EPS = 1e-5
_VMEM_LIMIT = 32 * 1024 * 1024  # explicit, <= scoped default on v5e/v6e/v7x (kernels use KBs here)


def _params(dims):
    return pltpu.CompilerParams(dimension_semantics=dims, vmem_limit_bytes=_VMEM_LIMIT)


def _pick_tile(n, mult, cap=512):
    """Largest divisor of n that is a multiple of `mult` and <= cap, else n (== full dim)."""
    best, t = n, mult
    while t <= min(n, cap):
        if n % t == 0:
            best = t
        t += mult
    return best


# ----------------------------- Pallas kernels -----------------------------

def _upsample_kernel(x_ref, w0_ref, w1_ref, b_ref, y_ref):
    """ConvTranspose2d(k=2,s=2): y[b,2h+ky,2w+kx,co] = sum_ci x[b,h,w,ci]*W[ci,co,ky,kx] + b[co].

    w{0,1}_ref are the ky=0/1 halves with columns ordered (kx, co); the output block is
    (1, TH, 2, W2, 2*Cout) so the final (B, 2H, 2W, Cout) view is a pure reshape.
    """
    _, TH, W2, Cin = x_ref.shape
    n2c = w0_ref.shape[1]                                  # 2 * Cout
    xf = x_ref[0].reshape(TH * W2, Cin)                    # merge leading dims (layout no-op)
    bias = b_ref[...]                                      # (1, 2*Cout) f32
    r0 = jnp.dot(xf, w0_ref[...], preferred_element_type=jnp.float32) + bias   # ky = 0
    r1 = jnp.dot(xf, w1_ref[...], preferred_element_type=jnp.float32) + bias   # ky = 1
    y_ref[0, :, 0, :, :] = r0.reshape(TH, W2, n2c).astype(y_ref.dtype)
    y_ref[0, :, 1, :, :] = r1.reshape(TH, W2, n2c).astype(y_ref.dtype)


def _make_conv_kernel(n_in):
    """3x3 conv (zero padding already applied to the inputs), `n_in` inputs that are logically
    concatenated along channels (concat fused away via split weights). One im2col matmul with
    K = 9*Ci per input, f32 accumulation, plus per-tile BN partial statistics (sum, sum_sq)."""

    def kernel(*refs):
        x_refs = refs[:n_in]
        w_refs = refs[n_in:2 * n_in]
        b_ref = refs[2 * n_in]
        z_ref = refs[2 * n_in + 1]
        st_ref = refs[2 * n_in + 2]

        _, TH, W, Cout = z_ref.shape
        h = pl.program_id(1)
        row0 = pl.multiple_of(h * TH, TH)

        acc = jnp.zeros((TH * W, Cout), jnp.float32)
        for x_ref, w_ref in zip(x_refs, w_refs):
            C = x_ref.shape[-1]
            # (TH+2)-row window of the VMEM-resident padded image (halo rows included).
            xt = x_ref[0, pl.ds(row0, TH + 2), :, :]                     # (TH+2, W+2, C) bf16
            slabs = [xt[dy:dy + TH, dx:dx + W, :]
                     for dy in range(3) for dx in range(3)]
            patches = jnp.concatenate(slabs, axis=-1)                    # (TH, W, 9*C)
            patches = patches.reshape(TH * W, 9 * C)                     # merge leading dims
            acc = acc + jnp.dot(patches, w_ref[...],
                                preferred_element_type=jnp.float32)      # single K=9*C matmul
        acc = acc + b_ref[...]                                           # conv bias (f32)

        z_ref[0] = acc.reshape(TH, W, Cout)                              # split leading dim (free)
        # Per-tile BatchNorm partial sums; the tiny cross-tile reduction happens outside.
        s1 = jnp.sum(acc, axis=0, keepdims=True)
        s2 = jnp.sum(acc * acc, axis=0, keepdims=True)
        st_ref[0, 0] = jnp.concatenate([s1, s2], axis=0)                 # (2, Cout)

    return kernel


def _bn_relu_kernel(z_ref, scale_ref, shift_ref, o_ref):
    """Elementwise normalize (precomputed scale/shift) + ReLU on a lane-dense (H, W*C) view."""
    o_ref[...] = jnp.maximum(z_ref[...] * scale_ref[...] + shift_ref[...], 0.0).astype(o_ref.dtype)


# ----------------------------- Pallas wrappers -----------------------------

def conv_transpose2x2(x_nhwc, up_w, up_b):
    """x: (B,H2,W2,Cin) f32 -> upsampled (B,2H2,2W2,Cout) bf16."""
    B, H2, W2, Cin = x_nhwc.shape
    Cout = up_w.shape[1]
    TH = 8 if H2 % 8 == 0 else H2
    nH = H2 // TH

    # per-ky weight matrices, columns ordered (kx, co); bias tiled the same way
    wk = [jnp.transpose(up_w[:, :, ky, :], (0, 2, 1)).reshape(Cin, 2 * Cout).astype(jnp.bfloat16)
          for ky in range(2)]
    bias2 = jnp.tile(up_b, 2).reshape(1, 2 * Cout).astype(jnp.float32)
    xb = x_nhwc.astype(jnp.bfloat16)

    flops = 2 * B * H2 * W2 * Cin * 4 * Cout
    bytes_acc = xb.size * 2 + 2 * wk[0].size * 2 + bias2.size * 4 + B * H2 * W2 * 4 * Cout * 2

    y6 = pl.pallas_call(
        _upsample_kernel,
        out_shape=jax.ShapeDtypeStruct((B, H2, 2, W2, 2 * Cout), jnp.bfloat16),
        grid=(B, nH),
        in_specs=[
            pl.BlockSpec((1, TH, W2, Cin), lambda b, h: (b, h, 0, 0)),
            pl.BlockSpec((Cin, 2 * Cout), lambda b, h: (0, 0)),
            pl.BlockSpec((Cin, 2 * Cout), lambda b, h: (0, 0)),
            pl.BlockSpec((1, 2 * Cout), lambda b, h: (0, 0)),
        ],
        out_specs=pl.BlockSpec((1, TH, 2, W2, 2 * Cout), lambda b, h: (b, h, 0, 0, 0)),
        compiler_params=_params(("parallel", "parallel")),
        cost_estimate=pl.CostEstimate(flops=int(flops), transcendentals=0,
                                      bytes_accessed=int(bytes_acc)),
    )(xb, wk[0], wk[1], bias2)
    # Element order of (B,H2,2,W2,2,Cout) equals (B,2H2,2W2,Cout): free reshape, no scatter.
    return y6.reshape(B, 2 * H2, 2 * W2, Cout)


def conv3x3_with_stats(inputs_padded, weights_im2col, bias, out_ch):
    """3x3 conv (pad already applied). Multiple inputs == fused channel concat.
    Returns z (B,H,W,out_ch) f32 pre-BN output and stats (B,nH,2,out_ch) per-tile sum/sum_sq."""
    B, Hp, Wp, _ = inputs_padded[0].shape
    for x in inputs_padded[1:]:
        assert x.shape[:3] == inputs_padded[0].shape[:3], "concat inputs must share spatial shape"
    H, W = Hp - 2, Wp - 2
    TH = 8 if H % 8 == 0 else H
    nH = H // TH
    n_in = len(inputs_padded)

    in_specs = []
    for x in inputs_padded:
        C = x.shape[-1]
        # Full padded image is VMEM-resident across all row tiles of this batch element
        # (index_map ignores the row-tile index -> one HBM fetch per image).
        in_specs.append(pl.BlockSpec((1, Hp, Wp, C), lambda b, h: (b, 0, 0, 0)))
    for w in weights_im2col:
        K = w.shape[0]
        in_specs.append(pl.BlockSpec((K, out_ch), lambda b, h: (0, 0)))
    in_specs.append(pl.BlockSpec((1, out_ch), lambda b, h: (0, 0)))

    flops = 2 * B * H * W * out_ch * sum(w.shape[0] for w in weights_im2col)
    bytes_acc = (sum(x.size * x.dtype.itemsize for x in inputs_padded)
                 + sum(w.size * w.dtype.itemsize for w in weights_im2col)
                 + B * H * W * out_ch * 4 + B * nH * 2 * out_ch * 4)

    z, stats = pl.pallas_call(
        _make_conv_kernel(n_in),
        out_shape=(jax.ShapeDtypeStruct((B, H, W, out_ch), jnp.float32),
                   jax.ShapeDtypeStruct((B, nH, 2, out_ch), jnp.float32)),
        grid=(B, nH),
        in_specs=in_specs,
        out_specs=(pl.BlockSpec((1, TH, W, out_ch), lambda b, h: (b, h, 0, 0)),
                   pl.BlockSpec((1, 1, 2, out_ch), lambda b, h: (b, h, 0, 0))),
        compiler_params=_params(("parallel", "parallel")),
        cost_estimate=pl.CostEstimate(flops=int(flops), transcendentals=0,
                                      bytes_accessed=int(bytes_acc)),
    )(*inputs_padded, *weights_im2col, bias)
    return z, stats


def _batch_stats(stats, count):
    """Finalize training-mode BatchNorm statistics from per-tile partial sums (biased variance)."""
    s = jnp.sum(stats[:, :, 0, :], axis=(0, 1))
    sq = jnp.sum(stats[:, :, 1, :], axis=(0, 1))
    mean = s / count
    var = jnp.maximum(sq / count - mean * mean, 0.0)
    return mean, var


def bn_relu(z_nhwc, mean, var, gamma, beta, out_dtype):
    """BatchNorm (precomputed batch stats) + ReLU as an elementwise Pallas pass over (B,H,W*C)."""
    B, H, W, C = z_nhwc.shape
    scale = (gamma * jax.lax.rsqrt(var + _BN_EPS)).astype(jnp.float32)
    shift = (beta - mean * scale).astype(jnp.float32)
    WC = W * C
    zf = z_nhwc.reshape(B, H, WC)                       # same linear layout -> free reshape
    scale_t = jnp.tile(scale, W).reshape(1, 1, WC)
    shift_t = jnp.tile(shift, W).reshape(1, 1, WC)
    TH = _pick_tile(H, 16)
    nH = H // TH
    out_bytes = B * H * WC * jnp.dtype(out_dtype).itemsize

    out = pl.pallas_call(
        _bn_relu_kernel,
        out_shape=jax.ShapeDtypeStruct((B, H, WC), out_dtype),
        grid=(B, nH),
        in_specs=[pl.BlockSpec((1, TH, WC), lambda b, h: (b, h, 0)),
                  pl.BlockSpec((1, 1, WC), lambda b, h: (0, 0, 0)),
                  pl.BlockSpec((1, 1, WC), lambda b, h: (0, 0, 0))],
        out_specs=pl.BlockSpec((1, TH, WC), lambda b, h: (b, h, 0)),
        compiler_params=_params(("parallel", "parallel")),
        cost_estimate=pl.CostEstimate(flops=int(2 * B * H * WC), transcendentals=0,
                                      bytes_accessed=int(zf.size * 4 + 2 * WC * 4 + out_bytes)),
    )(zf, scale_t, shift_t)
    return out.reshape(B, H, W, C)


def _im2col_weight(w):
    """(Cout, Cin, 3, 3) -> (9*Cin, Cout) bf16, rows ordered (dy, dx, ci) to match the kernel."""
    Cout, Cin = w.shape[0], w.shape[1]
    return jnp.transpose(w, (2, 3, 1, 0)).reshape(9 * Cin, Cout).astype(jnp.bfloat16)


# ----------------------------- Upsampl forward -----------------------------

def upsampl_forward(params, x2, x1):
    """x2: (B, Cin, H2, W2), x1: (B, Cin - Cout, H1, W1) NCHW -> (B, Cout, H1, W1) NCHW."""
    bf16 = jnp.bfloat16
    up_w, up_b = params["up_w"], params["up_b"]
    Cout = up_w.shape[1]

    x2n = jnp.transpose(x2, (0, 2, 3, 1))                # NCHW -> NHWC
    x1n = jnp.transpose(x1, (0, 2, 3, 1))
    B = x2n.shape[0]

    # 1) ConvTranspose2d(kernel=2, stride=2)
    y = conv_transpose2x2(x2n, up_w, up_b)               # (B, 2H2, 2W2, Cout) bf16

    # 2) F.pad exactly as in the PyTorch source (note: `diffY + 1 // 2` == diffY, kept on
    #    purpose), fused with the first conv's own padding=1. The channel concat is fused
    #    into the conv kernel itself (split weights), so no concatenated tensor hits HBM.
    H1, W1 = x1n.shape[1], x1n.shape[2]
    diffY = H1 - y.shape[1]
    diffX = W1 - y.shape[2]
    pad_l, pad_r = (diffX + 1) // 2, diffX // 2
    pad_t, pad_b = diffY + 1 // 2, diffY // 2
    yp = jnp.pad(y, ((0, 0), (pad_t + 1, pad_b + 1), (pad_l + 1, pad_r + 1), (0, 0)))
    x1p = jnp.pad(x1n.astype(bf16), ((0, 0), (1, 1), (1, 1), (0, 0)))

    # 3) DoubleConv, conv #1 (weights split along input channels: skip part / upsampled part)
    C1 = x1n.shape[-1]
    wa = _im2col_weight(params["c1_w"][:, :C1])
    wb = _im2col_weight(params["c1_w"][:, C1:])
    b1 = params["c1_b"].reshape(1, Cout).astype(jnp.float32)
    z1, st1 = conv3x3_with_stats([x1p, yp], [wa, wb], b1, Cout)
    mean1, var1 = _batch_stats(st1, float(B * H1 * W1))
    a1 = bn_relu(z1, mean1, var1, params["bn1_g"], params["bn1_b"], out_dtype=bf16)

    # 4) DoubleConv, conv #2
    a1p = jnp.pad(a1, ((0, 0), (1, 1), (1, 1), (0, 0)))
    w2 = _im2col_weight(params["c2_w"])
    b2 = params["c2_b"].reshape(1, Cout).astype(jnp.float32)
    z2, st2 = conv3x3_with_stats([a1p], [w2], b2, Cout)
    mean2, var2 = _batch_stats(st2, float(B * H1 * W1))
    out = bn_relu(z2, mean2, var2, params["bn2_g"], params["bn2_b"], out_dtype=jnp.float32)

    return jnp.transpose(out, (0, 3, 1, 2))              # back to NCHW


# ----------------------------- pure-JAX reference -----------------------------

def ref_forward(params, x2, x1):
    """Reference mirroring the kernels' numerics: matmul inputs in bf16, f32 accumulation."""
    f32, bf16 = jnp.float32, jnp.bfloat16
    up_w, up_b = params["up_w"], params["up_b"]
    B, Cin, H2, W2 = x2.shape
    Cout = up_w.shape[1]

    y6 = jnp.einsum('bchw,cokl->bhkwlo', x2.astype(bf16), up_w.astype(bf16),
                    preferred_element_type=f32)
    y = (y6.reshape(B, 2 * H2, 2 * W2, Cout) + up_b).astype(bf16)

    x1n = jnp.transpose(x1, (0, 2, 3, 1))
    diffY = x1n.shape[1] - y.shape[1]
    diffX = x1n.shape[2] - y.shape[2]
    y = jnp.pad(y, ((0, 0), (diffY + 1 // 2, diffY // 2),
                    ((diffX + 1) // 2, diffX // 2), (0, 0)))
    x = jnp.concatenate([x1n.astype(bf16), y], axis=-1)

    def conv3x3(xb, w, b):
        Bq, Hq, Wq, _ = xb.shape
        Co = w.shape[0]
        xp = jnp.pad(xb, ((0, 0), (1, 1), (1, 1), (0, 0)))
        wb = w.astype(bf16)
        acc = jnp.zeros((Bq, Hq, Wq, Co), f32)
        for dy in range(3):
            for dx in range(3):
                acc = acc + jnp.einsum('bhwc,oc->bhwo',
                                       xp[:, dy:dy + Hq, dx:dx + Wq, :], wb[:, :, dy, dx],
                                       preferred_element_type=f32)
        return acc + b

    def bn_relu_ref(z, g, beta):
        mean = z.mean(axis=(0, 1, 2), keepdims=True)
        var = ((z - mean) ** 2).mean(axis=(0, 1, 2), keepdims=True)
        return jnp.maximum((z - mean) * (g * jax.lax.rsqrt(var + _BN_EPS)) + beta, 0.0)

    z1 = conv3x3(x, params["c1_w"], params["c1_b"])
    a1 = bn_relu_ref(z1, params["bn1_g"], params["bn1_b"]).astype(bf16)
    z2 = conv3x3(a1, params["c2_w"], params["c2_b"])
    out = bn_relu_ref(z2, params["bn2_g"], params["bn2_b"])
    return jnp.transpose(out, (0, 3, 1, 2)).astype(f32)


# ----------------------------- main -----------------------------

if __name__ == "__main__":
    key = jax.random.PRNGKey(0)
    in_channels, out_channels = 8, 4
    B, H2, W2 = 2, 8, 8
    ks = jax.random.split(key, 12)

    params = {
        "up_w": 0.1 * jax.random.normal(ks[0], (in_channels, out_channels, 2, 2), jnp.float32),
        "up_b": 0.1 * jax.random.normal(ks[1], (out_channels,), jnp.float32),
        "c1_w": 0.1 * jax.random.normal(ks[2], (out_channels, in_channels, 3, 3), jnp.float32),
        "c1_b": 0.1 * jax.random.normal(ks[3], (out_channels,), jnp.float32),
        "bn1_g": 1.0 + 0.1 * jax.random.normal(ks[4], (out_channels,), jnp.float32),
        "bn1_b": 0.1 * jax.random.normal(ks[5], (out_channels,), jnp.float32),
        "c2_w": 0.1 * jax.random.normal(ks[6], (out_channels, out_channels, 3, 3), jnp.float32),
        "c2_b": 0.1 * jax.random.normal(ks[7], (out_channels,), jnp.float32),
        "bn2_g": 1.0 + 0.1 * jax.random.normal(ks[8], (out_channels,), jnp.float32),
        "bn2_b": 0.1 * jax.random.normal(ks[9], (out_channels,), jnp.float32),
    }

    # x2: low-res / high-channel feature map; x1: skip connection.
    x2 = jax.random.normal(ks[10], (B, in_channels, H2, W2), jnp.float32)
    x1 = jax.random.normal(ks[11], (B, in_channels - out_channels, 2 * H2, 2 * W2), jnp.float32)

    out = jax.block_until_ready(jax.jit(upsampl_forward)(params, x2, x1))
    ref = jax.block_until_ready(jax.jit(ref_forward)(params, x2, x1))

    assert out.shape == (B, out_channels, 2 * H2, 2 * W2), out.shape
    err = float(jnp.max(jnp.abs(out - ref)))
    # Both paths feed the MXU bf16 and accumulate f32; residual differences come from summation
    # order and bf16 rounding of the mid-pipeline activation -> expected O(1e-3) on O(1) outputs.
    assert err < 1e-2, f"max abs err {err}"
    print("KERNEL_OK")
</pallas_src>

<mosaic_0001>
module attributes {stable_mosaic.version = 11 : i64} {
  func.func @_upsample_kernel(%arg0: i32, %arg1: i32, %arg2: memref<1x8x8x8xbf16, #tpu.memory_space<vmem>>, %arg3: memref<8x8xbf16, #tpu.memory_space<vmem>>, %arg4: memref<8x8xbf16, #tpu.memory_space<vmem>>, %arg5: memref<1x8xf32, #tpu.memory_space<vmem>>, %arg6: memref<1x8x2x8x8xbf16, #tpu.memory_space<vmem>>) attributes {dimension_semantics = [#tpu.dimension_semantics<parallel>, #tpu.dimension_semantics<parallel>], iteration_bounds = array<i64: 2, 1>, scalar_prefetch = 0 : i64, scratch_operands = 0 : i64, tpu.core_type = #tpu.core_type<tc>, window_params = [{transform_indices = @transform_0, window_bounds = array<i64: 1, 8, 8, 8>}, {pipeline_mode = #tpu.pipeline_mode<synchronous>, transform_indices = @transform_1, window_bounds = array<i64: 8, 8>}, {pipeline_mode = #tpu.pipeline_mode<synchronous>, transform_indices = @transform_2, window_bounds = array<i64: 8, 8>}, {pipeline_mode = #tpu.pipeline_mode<synchronous>, transform_indices = @transform_3, window_bounds = array<i64: 1, 8>}, {transform_indices = @transform_4, window_bounds = array<i64: 1, 8, 2, 8, 8>}]} {
    %c0 = arith.constant 0 : index
    %c0_0 = arith.constant 0 : index
    %c0_1 = arith.constant 0 : index
    %c0_2 = arith.constant 0 : index
    %0 = vector.load %arg2[%c0, %c0_0, %c0_1, %c0_2] : memref<1x8x8x8xbf16, #tpu.memory_space<vmem>>, vector<1x8x8x8xbf16>
    %1 = vector.shape_cast %0 : vector<1x8x8x8xbf16> to vector<8x8x8xbf16>
    %2 = vector.shape_cast %1 : vector<8x8x8xbf16> to vector<64x8xbf16>
    %c0_3 = arith.constant 0 : index
    %c0_4 = arith.constant 0 : index
    %3 = vector.load %arg5[%c0_3, %c0_4] : memref<1x8xf32, #tpu.memory_space<vmem>>, vector<1x8xf32>
    %c0_5 = arith.constant 0 : index
    %c0_6 = arith.constant 0 : index
    %4 = vector.load %arg3[%c0_5, %c0_6] : memref<8x8xbf16, #tpu.memory_space<vmem>>, vector<8x8xbf16>
    %cst = arith.constant dense<0.000000e+00> : vector<64x8xf32>
    %5 = tpu.matmul %2, %4, %cst {dimension_numbers = #tpu.dot_dimension_numbers<[1], [0], [0], [1], [0, 0, 1, 1], [], []>} : vector<64x8xbf16>, vector<8x8xbf16>, vector<64x8xf32> -> vector<64x8xf32>
    %6 = vector.broadcast %3 : vector<1x8xf32> to vector<64x8xf32>
    %7 = arith.addf %5, %6 : vector<64x8xf32>
    %c0_7 = arith.constant 0 : index
    %c0_8 = arith.constant 0 : index
    %8 = vector.load %arg4[%c0_7, %c0_8] : memref<8x8xbf16, #tpu.memory_space<vmem>>, vector<8x8xbf16>
    %cst_9 = arith.constant dense<0.000000e+00> : vector<64x8xf32>
    %9 = tpu.matmul %2, %8, %cst_9 {dimension_numbers = #tpu.dot_dimension_numbers<[1], [0], [0], [1], [0, 0, 1, 1], [], []>} : vector<64x8xbf16>, vector<8x8xbf16>, vector<64x8xf32> -> vector<64x8xf32>
    %10 = vector.broadcast %3 : vector<1x8xf32> to vector<64x8xf32>
    %11 = arith.addf %9, %10 : vector<64x8xf32>
    %12 = vector.shape_cast %7 : vector<64x8xf32> to vector<8x8x8xf32>
    %13 = arith.truncf %12 : vector<8x8x8xf32> to vector<8x8x8xbf16>
    %c0_10 = arith.constant 0 : index
    %c0_11 = arith.constant 0 : index
    %c0_12 = arith.constant 0 : index
    %c0_13 = arith.constant 0 : index
    %c0_14 = arith.constant 0 : index
    %14 = vector.load %arg6[%c0_10, %c0_11, %c0_12, %c0_13, %c0_14] : memref<1x8x2x8x8xbf16, #tpu.memory_space<vmem>>, vector<1x8x1x8x8xbf16>
    %15 = vector.shape_cast %14 : vector<1x8x1x8x8xbf16> to vector<8x8x8xbf16>
    %16 = vector.shape_cast %13 : vector<8x8x8xbf16> to vector<1x8x1x8x8xbf16>
    tpu.vector_store %arg6[%c0_10, %c0_11, %c0_12, %c0_13, %c0_14], %16 {strides = array<i32>} : memref<1x8x2x8x8xbf16, #tpu.memory_space<vmem>>, vector<1x8x1x8x8xbf16>,
    %17 = vector.shape_cast %11 : vector<64x8xf32> to vector<8x8x8xf32>
    %18 = arith.truncf %17 : vector<8x8x8xf32> to vector<8x8x8xbf16>
    %c0_15 = arith.constant 0 : index
    %c0_16 = arith.constant 0 : index
    %c1 = arith.constant 1 : index
    %c0_17 = arith.constant 0 : index
    %c0_18 = arith.constant 0 : index
    %19 = vector.load %arg6[%c0_15, %c0_16, %c1, %c0_17, %c0_18] : memref<1x8x2x8x8xbf16, #tpu.memory_space<vmem>>, vector<1x8x1x8x8xbf16>
    %20 = vector.shape_cast %19 : vector<1x8x1x8x8xbf16> to vector<8x8x8xbf16>
    %21 = vector.shape_cast %18 : vector<8x8x8xbf16> to vector<1x8x1x8x8xbf16>
    tpu.vector_store %arg6[%c0_15, %c0_16, %c1, %c0_17, %c0_18], %21 {strides = array<i32>} : memref<1x8x2x8x8xbf16, #tpu.memory_space<vmem>>, vector<1x8x1x8x8xbf16>,
    return
  }
  func.func @transform_0(%arg0: i32, %arg1: i32) -> (i32, i32, i32, i32) {
    %c0_i32 = arith.constant 0 : i32
    %c0_i32_0 = arith.constant 0 : i32
    %c0_i32_1 = arith.constant 0 : i32
    return %arg0, %arg1, %c0_i32, %c0_i32_0 : i32, i32, i32, i32
  }
  func.func @transform_1(%arg0: i32, %arg1: i32) -> (i32, i32) {
    %c0_i32 = arith.constant 0 : i32
    %c0_i32_0 = arith.constant 0 : i32
    %c0_i32_1 = arith.constant 0 : i32
    return %c0_i32, %c0_i32_0 : i32, i32
  }
  func.func @transform_2(%arg0: i32, %arg1: i32) -> (i32, i32) {
    %c0_i32 = arith.constant 0 : i32
    %c0_i32_0 = arith.constant 0 : i32
    %c0_i32_1 = arith.constant 0 : i32
    return %c0_i32, %c0_i32_0 : i32, i32
  }
  func.func @transform_3(%arg0: i32, %arg1: i32) -> (i32, i32) {
    %c0_i32 = arith.constant 0 : i32
    %c0_i32_0 = arith.constant 0 : i32
    %c0_i32_1 = arith.constant 0 : i32
    return %c0_i32, %c0_i32_0 : i32, i32
  }
  func.func @transform_4(%arg0: i32, %arg1: i32) -> (i32, i32, i32, i32, i32) {
    %c0_i32 = arith.constant 0 : i32
    %c0_i32_0 = arith.constant 0 : i32
    %c0_i32_1 = arith.constant 0 : i32
    %c0_i32_2 = arith.constant 0 : i32
    return %arg0, %arg1, %c0_i32, %c0_i32_0, %c0_i32_1 : i32, i32, i32, i32, i32
  }
}

module attributes {stable_mosaic.version = 11 : i64} {
  func.func @kernel(%arg0: i32, %arg1: i32, %arg2: memref<1x18x18x4xbf16, #tpu.memory_space<vmem>>, %arg3: memref<1x18x18x4xbf16, #tpu.memory_space<vmem>>, %arg4: memref<36x4xbf16, #tpu.memory_space<vmem>>, %arg5: memref<36x4xbf16, #tpu.memory_space<vmem>>, %arg6: memref<1x4xf32, #tpu.memory_space<vmem>>, %arg7: memref<1x8x16x4xf32, #tpu.memory_space<vmem>>, %arg8: memref<1x1x2x4xf32, #tpu.memory_space<vmem>>) attributes {dimension_semantics = [#tpu.dimension_semantics<parallel>, #tpu.dimension_semantics<parallel>], iteration_bounds = array<i64: 2, 2>, scalar_prefetch = 0 : i64, scratch_operands = 0 : i64, tpu.core_type = #tpu.core_type<tc>, window_params = [{transform_indices = @transform_0, window_bounds = array<i64: 1, 18, 18, 4>}, {transform_indices = @transform_1, window_bounds = array<i64: 1, 18, 18, 4>}, {pipeline_mode = #tpu.pipeline_mode<synchronous>, transform_indices = @transform_2, window_bounds = array<i64: 36, 4>}, {pipeline_mode = #tpu.pipeline_mode<synchronous>, transform_indices = @transform_3, window_bounds = array<i64: 36, 4>}, {pipeline_mode = #tpu.pipeline_mode<synchronous>, transform_indices = @transform_4, window_bounds = array<i64: 1, 4>}, {transform_indices = @transform_5, window_bounds = array<i64: 1, 8, 16, 4>}, {transform_indices = @transform_6, window_bounds = array<i64: 1, 1, 2, 4>}]} {
    %c8_i32 = arith.constant 8 : i32
    %0 = arith.muli %arg1, %c8_i32 : i32
    %1 = tpu.assume_multiple %0, 8 : i32
    %cst = arith.constant 0.000000e+00 : f32
    %2 = vector.broadcast %cst : f32 to vector<128x4xf32>
    %c0 = arith.constant 0 : index
    %3 = arith.index_cast %1 : i32 to index
    %c0_0 = arith.constant 0 : index
    %c0_1 = arith.constant 0 : index
    %4 = vector.load %arg2[%c0, %3, %c0_0, %c0_1] : memref<1x18x18x4xbf16, #tpu.memory_space<vmem>>, vector<1x10x18x4xbf16>
    %5 = vector.shape_cast %4 : vector<1x10x18x4xbf16> to vector<10x18x4xbf16>
    %6 = vector.extract_strided_slice %5 {offsets = [0, 0, 0], sizes = [8, 16, 4], strides = [1, 1, 1]} : vector<10x18x4xbf16> to vector<8x16x4xbf16>
    %7 = vector.extract_strided_slice %5 {offsets = [0, 1, 0], sizes = [8, 16, 4], strides = [1, 1, 1]} : vector<10x18x4xbf16> to vector<8x16x4xbf16>
    %8 = vector.extract_strided_slice %5 {offsets = [0, 2, 0], sizes = [8, 16, 4], strides = [1, 1, 1]} : vector<10x18x4xbf16> to vector<8x16x4xbf16>
    %9 = vector.extract_strided_slice %5 {offsets = [1, 0, 0], sizes = [8, 16, 4], strides = [1, 1, 1]} : vector<10x18x4xbf16> to vector<8x16x4xbf16>
    %10 = vector.extract_strided_slice %5 {offsets = [1, 1, 0], sizes = [8, 16, 4], strides = [1, 1, 1]} : vector<10x18x4xbf16> to vector<8x16x4xbf16>
    %11 = vector.extract_strided_slice %5 {offsets = [1, 2, 0], sizes = [8, 16, 4], strides = [1, 1, 1]} : vector<10x18x4xbf16> to vector<8x16x4xbf16>
    %12 = vector.extract_strided_slice %5 {offsets = [2, 0, 0], sizes = [8, 16, 4], strides = [1, 1, 1]} : vector<10x18x4xbf16> to vector<8x16x4xbf16>
    %13 = vector.extract_strided_slice %5 {offsets = [2, 1, 0], sizes = [8, 16, 4], strides = [1, 1, 1]} : vector<10x18x4xbf16> to vector<8x16x4xbf16>
    %14 = vector.extract_strided_slice %5 {offsets = [2, 2, 0], sizes = [8, 16, 4], strides = [1, 1, 1]} : vector<10x18x4xbf16> to vector<8x16x4xbf16>
    %15 = tpu.concatenate %6, %7, %8, %9, %10, %11, %12, %13, %14 in 2 : vector<8x16x4xbf16>, vector<8x16x4xbf16>, vector<8x16x4xbf16>, vector<8x16x4xbf16>, vector<8x16x4xbf16>, vector<8x16x4xbf16>, vector<8x16x4xbf16>, vector<8x16x4xbf16>, vector<8x16x4xbf16> -> vector<8x16x36xbf16>
    %16 = vector.shape_cast %15 : vector<8x16x36xbf16> to vector<128x36xbf16>
    %c0_2 = arith.constant 0 : index
    %c0_3 = arith.constant 0 : index
    %17 = vector.load %arg4[%c0_2, %c0_3] : memref<36x4xbf16, #tpu.memory_space<vmem>>, vector<36x4xbf16>
    %cst_4 = arith.constant dense<0.000000e+00> : vector<128x4xf32>
    %18 = tpu.matmul %16, %17, %cst_4 {dimension_numbers = #tpu.dot_dimension_numbers<[1], [0], [0], [1], [0, 0, 1, 1], [], []>} : vector<128x36xbf16>, vector<36x4xbf16>, vector<128x4xf32> -> vector<128x4xf32>
    %19 = arith.addf %2, %18 : vector<128x4xf32>
    %c0_5 = arith.constant 0 : index
    %20 = arith.index_cast %1 : i32 to index
    %c0_6 = arith.constant 0 : index
    %c0_7 = arith.constant 0 : index
    %21 = vector.load %arg3[%c0_5, %20, %c0_6, %c0_7] : memref<1x18x18x4xbf16, #tpu.memory_space<vmem>>, vector<1x10x18x4xbf16>
    %22 = vector.shape_cast %21 : vector<1x10x18x4xbf16> to vector<10x18x4xbf16>
    %23 = vector.extract_strided_slice %22 {offsets = [0, 0, 0], sizes = [8, 16, 4], strides = [1, 1, 1]} : vector<10x18x4xbf16> to vector<8x16x4xbf16>
    %24 = vector.extract_strided_slice %22 {offsets = [0, 1, 0], sizes = [8, 16, 4], strides = [1, 1, 1]} : vector<10x18x4xbf16> to vector<8x16x4xbf16>
    %25 = vector.extract_strided_slice %22 {offsets = [0, 2, 0], sizes = [8, 16, 4], strides = [1, 1, 1]} : vector<10x18x4xbf16> to vector<8x16x4xbf16>
    %26 = vector.extract_strided_slice %22 {offsets = [1, 0, 0], sizes = [8, 16, 4], strides = [1, 1, 1]} : vector<10x18x4xbf16> to vector<8x16x4xbf16>
    %27 = vector.extract_strided_slice %22 {offsets = [1, 1, 0], sizes = [8, 16, 4], strides = [1, 1, 1]} : vector<10x18x4xbf16> to vector<8x16x4xbf16>
    %28 = vector.extract_strided_slice %22 {offsets = [1, 2, 0], sizes = [8, 16, 4], strides = [1, 1, 1]} : vector<10x18x4xbf16> to vector<8x16x4xbf16>
    %29 = vector.extract_strided_slice %22 {offsets = [2, 0, 0], sizes = [8, 16, 4], strides = [1, 1, 1]} : vector<10x18x4xbf16> to vector<8x16x4xbf16>
    %30 = vector.extract_strided_slice %22 {offsets = [2, 1, 0], sizes = [8, 16, 4], strides = [1, 1, 1]} : vector<10x18x4xbf16> to vector<8x16x4xbf16>
    %31 = vector.extract_strided_slice %22 {offsets = [2, 2, 0], sizes = [8, 16, 4], strides = [1, 1, 1]} : vector<10x18x4xbf16> to vector<8x16x4xbf16>
    %32 = tpu.concatenate %23, %24, %25, %26, %27, %28, %29, %30, %31 in 2 : vector<8x16x4xbf16>, vector<8x16x4xbf16>, vector<8x16x4xbf16>, vector<8x16x4xbf16>, vector<8x16x4xbf16>, vector<8x16x4xbf16>, vector<8x16x4xbf16>, vector<8x16x4xbf16>, vector<8x16x4xbf16> -> vector<8x16x36xbf16>
    %33 = vector.shape_cast %32 : vector<8x16x36xbf16> to vector<128x36xbf16>
    %c0_8 = arith.constant 0 : index
    %c0_9 = arith.constant 0 : index
    %34 = vector.load %arg5[%c0_8, %c0_9] : memref<36x4xbf16, #tpu.memory_space<vmem>>, vector<36x4xbf16>
    %cst_10 = arith.constant dense<0.000000e+00> : vector<128x4xf32>
    %35 = tpu.matmul %33, %34, %cst_10 {dimension_numbers = #tpu.dot_dimension_numbers<[1], [0], [0], [1], [0, 0, 1, 1], [], []>} : vector<128x36xbf16>, vector<36x4xbf16>, vector<128x4xf32> -> vector<128x4xf32>
    %36 = arith.addf %19, %35 : vector<128x4xf32>
    %c0_11 = arith.constant 0 : index
    %c0_12 = arith.constant 0 : index
    %37 = vector.load %arg6[%c0_11, %c0_12] : memref<1x4xf32, #tpu.memory_space<vmem>>, vector<1x4xf32>
    %38 = vector.broadcast %37 : vector<1x4xf32> to vector<128x4xf32>
    %39 = arith.addf %36, %38 : vector<128x4xf32>
    %40 = vector.shape_cast %39 : vector<128x4xf32> to vector<8x16x4xf32>
    %c0_13 = arith.constant 0 : index
    %c0_14 = arith.constant 0 : index
    %c0_15 = arith.constant 0 : index
    %c0_16 = arith.constant 0 : index
    %41 = vector.load %arg7[%c0_13, %c0_14, %c0_15, %c0_16] : memref<1x8x16x4xf32, #tpu.memory_space<vmem>>, vector<1x8x16x4xf32>
    %42 = vector.shape_cast %41 : vector<1x8x16x4xf32> to vector<8x16x4xf32>
    %43 = vector.shape_cast %40 : vector<8x16x4xf32> to vector<1x8x16x4xf32>
    tpu.vector_store %arg7[%c0_13, %c0_14, %c0_15, %c0_16], %43 {strides = array<i32>} : memref<1x8x16x4xf32, #tpu.memory_space<vmem>>, vector<1x8x16x4xf32>,
    %cst_17 = arith.constant dense<0.000000e+00> : vector<4xf32>
    %44 = vector.multi_reduction <add>, %39, %cst_17 [0] : vector<128x4xf32> to vector<4xf32>
    %45 = vector.shape_cast %44 : vector<4xf32> to vector<1x4xf32>
    %46 = arith.mulf %39, %39 : vector<128x4xf32>
    %cst_18 = arith.constant dense<0.000000e+00> : vector<4xf32>
    %47 = vector.multi_reduction <add>, %46, %cst_18 [0] : vector<128x4xf32> to vector<4xf32>
    %48 = vector.shape_cast %47 : vector<4xf32> to vector<1x4xf32>
    %49 = tpu.concatenate %45, %48 in 0 : vector<1x4xf32>, vector<1x4xf32> -> vector<2x4xf32>
    %c0_19 = arith.constant 0 : index
    %c0_20 = arith.constant 0 : index
    %c0_21 = arith.constant 0 : index
    %c0_22 = arith.constant 0 : index
    %50 = vector.load %arg8[%c0_19, %c0_20, %c0_21, %c0_22] : memref<1x1x2x4xf32, #tpu.memory_space<vmem>>, vector<1x1x2x4xf32>
    %51 = vector.shape_cast %50 : vector<1x1x2x4xf32> to vector<2x4xf32>
    %52 = vector.shape_cast %49 : vector<2x4xf32> to vector<1x1x2x4xf32>
    tpu.vector_store %arg8[%c0_19, %c0_20, %c0_21, %c0_22], %52 {strides = array<i32>} : memref<1x1x2x4xf32, #tpu.memory_space<vmem>>, vector<1x1x2x4xf32>,
    return
  }
  func.func @transform_0(%arg0: i32, %arg1: i32) -> (i32, i32, i32, i32) {
    %c0_i32 = arith.constant 0 : i32
    %c0_i32_0 = arith.constant 0 : i32
    %c0_i32_1 = arith.constant 0 : i32
    %c0_i32_2 = arith.constant 0 : i32
    return %arg0, %c0_i32, %c0_i32_0, %c0_i32_1 : i32, i32, i32, i32
  }
  func.func @transform_1(%arg0: i32, %arg1: i32) -> (i32, i32, i32, i32) {
    %c0_i32 = arith.constant 0 : i32
    %c0_i32_0 = arith.constant 0 : i32
    %c0_i32_1 = arith.constant 0 : i32
    %c0_i32_2 = arith.constant 0 : i32
    return %arg0, %c0_i32, %c0_i32_0, %c0_i32_1 : i32, i32, i32, i32
  }
  func.func @transform_2(%arg0: i32, %arg1: i32) -> (i32, i32) {
    %c0_i32 = arith.constant 0 : i32
    %c0_i32_0 = arith.constant 0 : i32
    %c0_i32_1 = arith.constant 0 : i32
    return %c0_i32, %c0_i32_0 : i32, i32
  }
  func.func @transform_3(%arg0: i32, %arg1: i32) -> (i32, i32) {
    %c0_i32 = arith.constant 0 : i32
    %c0_i32_0 = arith.constant 0 : i32
    %c0_i32_1 = arith.constant 0 : i32
    return %c0_i32, %c0_i32_0 : i32, i32
  }
  func.func @transform_4(%arg0: i32, %arg1: i32) -> (i32, i32) {
    %c0_i32 = arith.constant 0 : i32
    %c0_i32_0 = arith.constant 0 : i32
    %c0_i32_1 = arith.constant 0 : i32
    return %c0_i32, %c0_i32_0 : i32, i32
  }
  func.func @transform_5(%arg0: i32, %arg1: i32) -> (i32, i32, i32, i32) {
    %c0_i32 = arith.constant 0 : i32
    %c0_i32_0 = arith.constant 0 : i32
    %c0_i32_1 = arith.constant 0 : i32
    return %arg0, %arg1, %c0_i32, %c0_i32_0 : i32, i32, i32, i32
  }
  func.func @transform_6(%arg0: i32, %arg1: i32) -> (i32, i32, i32, i32) {
    %c0_i32 = arith.constant 0 : i32
    %c0_i32_0 = arith.constant 0 : i32
    %c0_i32_1 = arith.constant 0 : i32
    return %arg0, %arg1, %c0_i32, %c0_i32_0 : i32, i32, i32, i32
  }
}

module attributes {stable_mosaic.version = 11 : i64} {
  func.func @_bn_relu_kernel(%arg0: i32, %arg1: i32, %arg2: memref<1x16x64xf32, #tpu.memory_space<vmem>>, %arg3: memref<1x1x64xf32, #tpu.memory_space<vmem>>, %arg4: memref<1x1x64xf32, #tpu.memory_space<vmem>>, %arg5: memref<1x16x64xbf16, #tpu.memory_space<vmem>>) attributes {dimension_semantics = [#tpu.dimension_semantics<parallel>, #tpu.dimension_semantics<parallel>], iteration_bounds = array<i64: 2, 1>, scalar_prefetch = 0 : i64, scratch_operands = 0 : i64, tpu.core_type = #tpu.core_type<tc>, window_params = [{transform_indices = @transform_0, window_bounds = array<i64: 1, 16, 64>}, {pipeline_mode = #tpu.pipeline_mode<synchronous>, transform_indices = @transform_1, window_bounds = array<i64: 1, 1, 64>}, {pipeline_mode = #tpu.pipeline_mode<synchronous>, transform_indices = @transform_2, window_bounds = array<i64: 1, 1, 64>}, {transform_indices = @transform_3, window_bounds = array<i64: 1, 16, 64>}]} {
    %c0 = arith.constant 0 : index
    %c0_0 = arith.constant 0 : index
    %c0_1 = arith.constant 0 : index
    %0 = vector.load %arg2[%c0, %c0_0, %c0_1] : memref<1x16x64xf32, #tpu.memory_space<vmem>>, vector<1x16x64xf32>
    %c0_2 = arith.constant 0 : index
    %c0_3 = arith.constant 0 : index
    %c0_4 = arith.constant 0 : index
    %1 = vector.load %arg3[%c0_2, %c0_3, %c0_4] : memref<1x1x64xf32, #tpu.memory_space<vmem>>, vector<1x1x64xf32>
    %2 = vector.broadcast %1 : vector<1x1x64xf32> to vector<1x16x64xf32>
    %3 = arith.mulf %0, %2 : vector<1x16x64xf32>
    %c0_5 = arith.constant 0 : index
    %c0_6 = arith.constant 0 : index
    %c0_7 = arith.constant 0 : index
    %4 = vector.load %arg4[%c0_5, %c0_6, %c0_7] : memref<1x1x64xf32, #tpu.memory_space<vmem>>, vector<1x1x64xf32>
    %5 = vector.broadcast %4 : vector<1x1x64xf32> to vector<1x16x64xf32>
    %6 = arith.addf %3, %5 : vector<1x16x64xf32>
    %cst = arith.constant 0.000000e+00 : f32
    %7 = vector.broadcast %cst : f32 to vector<1x16x64xf32>
    %8 = arith.maximumf %6, %7 : vector<1x16x64xf32>
    %9 = arith.truncf %8 : vector<1x16x64xf32> to vector<1x16x64xbf16>
    %c0_8 = arith.constant 0 : index
    %c0_9 = arith.constant 0 : index
    %c0_10 = arith.constant 0 : index
    %10 = vector.load %arg5[%c0_8, %c0_9, %c0_10] : memref<1x16x64xbf16, #tpu.memory_space<vmem>>, vector<1x16x64xbf16>
    tpu.vector_store %arg5[%c0_8, %c0_9, %c0_10], %9 {strides = array<i32>} : memref<1x16x64xbf16, #tpu.memory_space<vmem>>, vector<1x16x64xbf16>,
    return
  }
  func.func @transform_0(%arg0: i32, %arg1: i32) -> (i32, i32, i32) {
    %c0_i32 = arith.constant 0 : i32
    %c0_i32_0 = arith.constant 0 : i32
    return %arg0, %arg1, %c0_i32 : i32, i32, i32
  }
  func.func @transform_1(%arg0: i32, %arg1: i32) -> (i32, i32, i32) {
    %c0_i32 = arith.constant 0 : i32
    %c0_i32_0 = arith.constant 0 : i32
    %c0_i32_1 = arith.constant 0 : i32
    %c0_i32_2 = arith.constant 0 : i32
    return %c0_i32, %c0_i32_0, %c0_i32_1 : i32, i32, i32
  }
  func.func @transform_2(%arg0: i32, %arg1: i32) -> (i32, i32, i32) {
    %c0_i32 = arith.constant 0 : i32
    %c0_i32_0 = arith.constant 0 : i32
    %c0_i32_1 = arith.constant 0 : i32
    %c0_i32_2 = arith.constant 0 : i32
    return %c0_i32, %c0_i32_0, %c0_i32_1 : i32, i32, i32
  }
  func.func @transform_3(%arg0: i32, %arg1: i32) -> (i32, i32, i32) {
    %c0_i32 = arith.constant 0 : i32
    %c0_i32_0 = arith.constant 0 : i32
    return %arg0, %arg1, %c0_i32 : i32, i32, i32
  }
}

module attributes {stable_mosaic.version = 11 : i64} {
  func.func @_bn_relu_kernel(%arg0: i32, %arg1: i32, %arg2: memref<1x16x64xf32, #tpu.memory_space<vmem>>, %arg3: memref<1x1x64xf32, #tpu.memory_space<vmem>>, %arg4: memref<1x1x64xf32, #tpu.memory_space<vmem>>, %arg5: memref<1x16x64xf32, #tpu.memory_space<vmem>>) attributes {dimension_semantics = [#tpu.dimension_semantics<parallel>, #tpu.dimension_semantics<parallel>], iteration_bounds = array<i64: 2, 1>, scalar_prefetch = 0 : i64, scratch_operands = 0 : i64, tpu.core_type = #tpu.core_type<tc>, window_params = [{transform_indices = @transform_0, window_bounds = array<i64: 1, 16, 64>}, {pipeline_mode = #tpu.pipeline_mode<synchronous>, transform_indices = @transform_1, window_bounds = array<i64: 1, 1, 64>}, {pipeline_mode = #tpu.pipeline_mode<synchronous>, transform_indices = @transform_2, window_bounds = array<i64: 1, 1, 64>}, {transform_indices = @transform_3, window_bounds = array<i64: 1, 16, 64>}]} {
    %c0 = arith.constant 0 : index
    %c0_0 = arith.constant 0 : index
    %c0_1 = arith.constant 0 : index
    %0 = vector.load %arg2[%c0, %c0_0, %c0_1] : memref<1x16x64xf32, #tpu.memory_space<vmem>>, vector<1x16x64xf32>
    %c0_2 = arith.constant 0 : index
    %c0_3 = arith.constant 0 : index
    %c0_4 = arith.constant 0 : index
    %1 = vector.load %arg3[%c0_2, %c0_3, %c0_4] : memref<1x1x64xf32, #tpu.memory_space<vmem>>, vector<1x1x64xf32>
    %2 = vector.broadcast %1 : vector<1x1x64xf32> to vector<1x16x64xf32>
    %3 = arith.mulf %0, %2 : vector<1x16x64xf32>
    %c0_5 = arith.constant 0 : index
    %c0_6 = arith.constant 0 : index
    %c0_7 = arith.constant 0 : index
    %4 = vector.load %arg4[%c0_5, %c0_6, %c0_7] : memref<1x1x64xf32, #tpu.memory_space<vmem>>, vector<1x1x64xf32>
    %5 = vector.broadcast %4 : vector<1x1x64xf32> to vector<1x16x64xf32>
    %6 = arith.addf %3, %5 : vector<1x16x64xf32>
    %cst = arith.constant 0.000000e+00 : f32
    %7 = vector.broadcast %cst : f32 to vector<1x16x64xf32>
    %8 = arith.maximumf %6, %7 : vector<1x16x64xf32>
    %c0_8 = arith.constant 0 : index
    %c0_9 = arith.constant 0 : index
    %c0_10 = arith.constant 0 : index
    %9 = vector.load %arg5[%c0_8, %c0_9, %c0_10] : memref<1x16x64xf32, #tpu.memory_space<vmem>>, vector<1x16x64xf32>
    tpu.vector_store %arg5[%c0_8, %c0_9, %c0_10], %8 {strides = array<i32>} : memref<1x16x64xf32, #tpu.memory_space<vmem>>, vector<1x16x64xf32>,
    return
  }
  func.func @transform_0(%arg0: i32, %arg1: i32) -> (i32, i32, i32) {
    %c0_i32 = arith.constant 0 : i32
    %c0_i32_0 = arith.constant 0 : i32
    return %arg0, %arg1, %c0_i32 : i32, i32, i32
  }
  func.func @transform_1(%arg0: i32, %arg1: i32) -> (i32, i32, i32) {
    %c0_i32 = arith.constant 0 : i32
    %c0_i32_0 = arith.constant 0 : i32
    %c0_i32_1 = arith.constant 0 : i32
    %c0_i32_2 = arith.constant 0 : i32
    return %c0_i32, %c0_i32_0, %c0_i32_1 : i32, i32, i32
  }
  func.func @transform_2(%arg0: i32, %arg1: i32) -> (i32, i32, i32) {
    %c0_i32 = arith.constant 0 : i32
    %c0_i32_0 = arith.constant 0 : i32
    %c0_i32_1 = arith.constant 0 : i32
    %c0_i32_2 = arith.constant 0 : i32
    return %c0_i32, %c0_i32_0, %c0_i32_1 : i32, i32, i32
  }
  func.func @transform_3(%arg0: i32, %arg1: i32) -> (i32, i32, i32) {
    %c0_i32 = arith.constant 0 : i32
    %c0_i32_0 = arith.constant 0 : i32
    return %arg0, %arg1, %c0_i32 : i32, i32, i32
  }
}

module attributes {stable_mosaic.version = 11 : i64} {
  func.func @kernel(%arg0: i32, %arg1: i32, %arg2: memref<1x18x18x4xbf16, #tpu.memory_space<vmem>>, %arg3: memref<36x4xbf16, #tpu.memory_space<vmem>>, %arg4: memref<1x4xf32, #tpu.memory_space<vmem>>, %arg5: memref<1x8x16x4xf32, #tpu.memory_space<vmem>>, %arg6: memref<1x1x2x4xf32, #tpu.memory_space<vmem>>) attributes {dimension_semantics = [#tpu.dimension_semantics<parallel>, #tpu.dimension_semantics<parallel>], iteration_bounds = array<i64: 2, 2>, scalar_prefetch = 0 : i64, scratch_operands = 0 : i64, tpu.core_type = #tpu.core_type<tc>, window_params = [{transform_indices = @transform_0, window_bounds = array<i64: 1, 18, 18, 4>}, {pipeline_mode = #tpu.pipeline_mode<synchronous>, transform_indices = @transform_1, window_bounds = array<i64: 36, 4>}, {pipeline_mode = #tpu.pipeline_mode<synchronous>, transform_indices = @transform_2, window_bounds = array<i64: 1, 4>}, {transform_indices = @transform_3, window_bounds = array<i64: 1, 8, 16, 4>}, {transform_indices = @transform_4, window_bounds = array<i64: 1, 1, 2, 4>}]} {
    %c8_i32 = arith.constant 8 : i32
    %0 = arith.muli %arg1, %c8_i32 : i32
    %1 = tpu.assume_multiple %0, 8 : i32
    %cst = arith.constant 0.000000e+00 : f32
    %2 = vector.broadcast %cst : f32 to vector<128x4xf32>
    %c0 = arith.constant 0 : index
    %3 = arith.index_cast %1 : i32 to index
    %c0_0 = arith.constant 0 : index
    %c0_1 = arith.constant 0 : index
    %4 = vector.load %arg2[%c0, %3, %c0_0, %c0_1] : memref<1x18x18x4xbf16, #tpu.memory_space<vmem>>, vector<1x10x18x4xbf16>
    %5 = vector.shape_cast %4 : vector<1x10x18x4xbf16> to vector<10x18x4xbf16>
    %6 = vector.extract_strided_slice %5 {offsets = [0, 0, 0], sizes = [8, 16, 4], strides = [1, 1, 1]} : vector<10x18x4xbf16> to vector<8x16x4xbf16>
    %7 = vector.extract_strided_slice %5 {offsets = [0, 1, 0], sizes = [8, 16, 4], strides = [1, 1, 1]} : vector<10x18x4xbf16> to vector<8x16x4xbf16>
    %8 = vector.extract_strided_slice %5 {offsets = [0, 2, 0], sizes = [8, 16, 4], strides = [1, 1, 1]} : vector<10x18x4xbf16> to vector<8x16x4xbf16>
    %9 = vector.extract_strided_slice %5 {offsets = [1, 0, 0], sizes = [8, 16, 4], strides = [1, 1, 1]} : vector<10x18x4xbf16> to vector<8x16x4xbf16>
    %10 = vector.extract_strided_slice %5 {offsets = [1, 1, 0], sizes = [8, 16, 4], strides = [1, 1, 1]} : vector<10x18x4xbf16> to vector<8x16x4xbf16>
    %11 = vector.extract_strided_slice %5 {offsets = [1, 2, 0], sizes = [8, 16, 4], strides = [1, 1, 1]} : vector<10x18x4xbf16> to vector<8x16x4xbf16>
    %12 = vector.extract_strided_slice %5 {offsets = [2, 0, 0], sizes = [8, 16, 4], strides = [1, 1, 1]} : vector<10x18x4xbf16> to vector<8x16x4xbf16>
    %13 = vector.extract_strided_slice %5 {offsets = [2, 1, 0], sizes = [8, 16, 4], strides = [1, 1, 1]} : vector<10x18x4xbf16> to vector<8x16x4xbf16>
    %14 = vector.extract_strided_slice %5 {offsets = [2, 2, 0], sizes = [8, 16, 4], strides = [1, 1, 1]} : vector<10x18x4xbf16> to vector<8x16x4xbf16>
    %15 = tpu.concatenate %6, %7, %8, %9, %10, %11, %12, %13, %14 in 2 : vector<8x16x4xbf16>, vector<8x16x4xbf16>, vector<8x16x4xbf16>, vector<8x16x4xbf16>, vector<8x16x4xbf16>, vector<8x16x4xbf16>, vector<8x16x4xbf16>, vector<8x16x4xbf16>, vector<8x16x4xbf16> -> vector<8x16x36xbf16>
    %16 = vector.shape_cast %15 : vector<8x16x36xbf16> to vector<128x36xbf16>
    %c0_2 = arith.constant 0 : index
    %c0_3 = arith.constant 0 : index
    %17 = vector.load %arg3[%c0_2, %c0_3] : memref<36x4xbf16, #tpu.memory_space<vmem>>, vector<36x4xbf16>
    %cst_4 = arith.constant dense<0.000000e+00> : vector<128x4xf32>
    %18 = tpu.matmul %16, %17, %cst_4 {dimension_numbers = #tpu.dot_dimension_numbers<[1], [0], [0], [1], [0, 0, 1, 1], [], []>} : vector<128x36xbf16>, vector<36x4xbf16>, vector<128x4xf32> -> vector<128x4xf32>
    %19 = arith.addf %2, %18 : vector<128x4xf32>
    %c0_5 = arith.constant 0 : index
    %c0_6 = arith.constant 0 : index
    %20 = vector.load %arg4[%c0_5, %c0_6] : memref<1x4xf32, #tpu.memory_space<vmem>>, vector<1x4xf32>
    %21 = vector.broadcast %20 : vector<1x4xf32> to vector<128x4xf32>
    %22 = arith.addf %19, %21 : vector<128x4xf32>
    %23 = vector.shape_cast %22 : vector<128x4xf32> to vector<8x16x4xf32>
    %c0_7 = arith.constant 0 : index
    %c0_8 = arith.constant 0 : index
    %c0_9 = arith.constant 0 : index
    %c0_10 = arith.constant 0 : index
    %24 = vector.load %arg5[%c0_7, %c0_8, %c0_9, %c0_10] : memref<1x8x16x4xf32, #tpu.memory_space<vmem>>, vector<1x8x16x4xf32>
    %25 = vector.shape_cast %24 : vector<1x8x16x4xf32> to vector<8x16x4xf32>
    %26 = vector.shape_cast %23 : vector<8x16x4xf32> to vector<1x8x16x4xf32>
    tpu.vector_store %arg5[%c0_7, %c0_8, %c0_9, %c0_10], %26 {strides = array<i32>} : memref<1x8x16x4xf32, #tpu.memory_space<vmem>>, vector<1x8x16x4xf32>,
    %cst_11 = arith.constant dense<0.000000e+00> : vector<4xf32>
    %27 = vector.multi_reduction <add>, %22, %cst_11 [0] : vector<128x4xf32> to vector<4xf32>
    %28 = vector.shape_cast %27 : vector<4xf32> to vector<1x4xf32>
    %29 = arith.mulf %22, %22 : vector<128x4xf32>
    %cst_12 = arith.constant dense<0.000000e+00> : vector<4xf32>
    %30 = vector.multi_reduction <add>, %29, %cst_12 [0] : vector<128x4xf32> to vector<4xf32>
    %31 = vector.shape_cast %30 : vector<4xf32> to vector<1x4xf32>
    %32 = tpu.concatenate %28, %31 in 0 : vector<1x4xf32>, vector<1x4xf32> -> vector<2x4xf32>
    %c0_13 = arith.constant 0 : index
    %c0_14 = arith.constant 0 : index
    %c0_15 = arith.constant 0 : index
    %c0_16 = arith.constant 0 : index
    %33 = vector.load %arg6[%c0_13, %c0_14, %c0_15, %c0_16] : memref<1x1x2x4xf32, #tpu.memory_space<vmem>>, vector<1x1x2x4xf32>
    %34 = vector.shape_cast %33 : vector<1x1x2x4xf32> to vector<2x4xf32>
    %35 = vector.shape_cast %32 : vector<2x4xf32> to vector<1x1x2x4xf32>
    tpu.vector_store %arg6[%c0_13, %c0_14, %c0_15, %c0_16], %35 {strides = array<i32>} : memref<1x1x2x4xf32, #tpu.memory_space<vmem>>, vector<1x1x2x4xf32>,
    return
  }
  func.func @transform_0(%arg0: i32, %arg1: i32) -> (i32, i32, i32, i32) {
    %c0_i32 = arith.constant 0 : i32
    %c0_i32_0 = arith.constant 0 : i32
    %c0_i32_1 = arith.constant 0 : i32
    %c0_i32_2 = arith.constant 0 : i32
    return %arg0, %c0_i32, %c0_i32_0, %c0_i32_1 : i32, i32, i32, i32
  }
  func.func @transform_1(%arg0: i32, %arg1: i32) -> (i32, i32) {
    %c0_i32 = arith.constant 0 : i32
    %c0_i32_0 = arith.constant 0 : i32
    %c0_i32_1 = arith.constant 0 : i32
    return %c0_i32, %c0_i32_0 : i32, i32
  }
  func.func @transform_2(%arg0: i32, %arg1: i32) -> (i32, i32) {
    %c0_i32 = arith.constant 0 : i32
    %c0_i32_0 = arith.constant 0 : i32
    %c0_i32_1 = arith.constant 0 : i32
    return %c0_i32, %c0_i32_0 : i32, i32
  }
  func.func @transform_3(%arg0: i32, %arg1: i32) -> (i32, i32, i32, i32) {
    %c0_i32 = arith.constant 0 : i32
    %c0_i32_0 = arith.constant 0 : i32
    %c0_i32_1 = arith.constant 0 : i32
    return %arg0, %arg1, %c0_i32, %c0_i32_0 : i32, i32, i32, i32
  }
  func.func @transform_4(%arg0: i32, %arg1: i32) -> (i32, i32, i32, i32) {
    %c0_i32 = arith.constant 0 : i32
    %c0_i32_0 = arith.constant 0 : i32
    %c0_i32_1 = arith.constant 0 : i32
    return %arg0, %arg1, %c0_i32, %c0_i32_0 : i32, i32, i32, i32
  }
}

</mosaic_0001>

<llo_original>
// kernel: tile.28
$region0: #{tile.28}
  #allocation0 [shape = 's32[1]{0}', space=sflag, size = 0x4, scoped, tag = 'scoped memory for tile.28']
  %s0 = inlined_call_operand.vmem [shape: f32[4], index: 0, kind: input, shape index: {}]
  %s1 = inlined_call_operand.vmem [shape: f32[2,4], index: 1, kind: output, shape index: {}]
  // Predicated region
  $region2: #{tile.28} parent=0 // pred_check
    _
  $region3: #{tile.28} parent=0 // pred_check_branch
    %3 = sbr.rel (0) target = $region5
  $region4: #{tile.28} parent=0 // pred_region
    _
  $region5: #{tile.28} parent=0 // pred_fallthru
    _
  %v4 = vld [vmem:[%s0] ss:$0 sm:$0xff]
  %5 = vst [vmem:[%s1] sm:$0x3] %v4

// kernel: tile.29
$region0: #{tile.29}
  %s0 = inlined_call_operand.vmem [shape: f32[2,4], index: 0, kind: input, shape index: {}]
  %s1 = inlined_call_operand.vmem [shape: f32[1,8], index: 1, kind: output, shape index: {}]
  $region1: #{tile.29} parent=0
    #allocation0 [shape = 'u8[4096]{0}', space=vmem, size = 0x1000, scoped, tag = 'scoped mem for output reshape']
    #allocation1 [shape = 'u8[4096]{0}', space=vmem, size = 0x1000, scoped, tag = 'scoped mem for input reshape']
    %s3 = ssub.s32 4, 1
    %v4 = vld [vmem:[%s0] sm:%s3]
    %5 = vst [vmem:[#allocation1] sm:%s3] %v4
    %v6 = vld [vmem:[#allocation1] sm:$0x1]
    %vm7 = vcmask 31744
    %8 = vst.msk [vmem:[#allocation0] sm:$0x1] %vm7, %v6
    %s9 = scalar_lea.vmem [#allocation1], 1
    %v10 = vld [vmem:[%s9] sm:$0x1]
    %11 = vrot.lane.b32.xlu0 %v10, 4
    %v12 = vpop.permute.xlu0 %11
    %vm13 = vcmask 64544
    %14 = vst.msk [vmem:[#allocation0] sm:$0x1] %vm13, %v12
    %s16 = ssub.s32 2, 1
    %v17 = vld [vmem:[#allocation0] sm:%s16]
    %s19 = ssub.s32 2, 1
    %20 = vst [vmem:[%s1] sm:%s19] %v17

// kernel: tile.33
$region0: #{tile.33}
  #allocation0 [shape = 's32[1]{0}', space=sflag, size = 0x4, scoped, tag = 'scoped memory for tile.33']
  %s0 = inlined_call_operand.vmem [shape: f32[4], index: 0, kind: input, shape index: {}]
  %s1 = inlined_call_operand.vmem [shape: f32[16,4], index: 1, kind: output, shape index: {}]
  // Predicated region
  $region2: #{tile.33} parent=0 // pred_check
    _
  $region3: #{tile.33} parent=0 // pred_check_branch
    %3 = sbr.rel (0) target = $region5
  $region4: #{tile.33} parent=0 // pred_region
    _
  $region5: #{tile.33} parent=0 // pred_fallthru
    _
  %v4 = vld [vmem:[%s0] ss:$0 sm:$0xff]
  %5 = vst [vmem:[%s1] sm:$0xff] %v4
  %s6 = scalar_lea.vmem %s1, 8
  %7 = vst [vmem:[%s6] sm:$0xff] %v4

// kernel: tile.34
$region0: #{tile.34}
  %s0 = inlined_call_operand.vmem [shape: f32[16,4], index: 0, kind: input, shape index: {}]
  %s1 = inlined_call_operand.vmem [shape: f32[1,1,64], index: 1, kind: output, shape index: {}]
  $region1: #{tile.34} parent=0
    #allocation0 [shape = 'u8[4096]{0}', space=vmem, size = 0x1000, scoped, tag = 'scoped mem for output reshape']
    %v2 = vld [vmem:[%s0] sm:$0x1]
    %vm3 = vcmask 31744
    %4 = vst.msk [vmem:[#allocation0] sm:$0x1] %vm3, %v2
    %s5 = scalar_lea.vmem %s0, 15
    %v6 = vld [vmem:[%s5] sm:$0x1]
    %7 = vrot.lane.b32.xlu0 %v6, 60
    %v8 = vpop.permute.xlu0 %7
    %vm9 = vcmask 523744
    %10 = vst.msk [vmem:[#allocation0] sm:$0x1] %vm9, %v8
    %s11 = scalar_lea.vmem %s0, 14
    %v12 = vld [vmem:[%s11] sm:$0x1]
    %13 = vrot.lane.b32.xlu0 %v12, 56
    %v14 = vpop.permute.xlu0 %13
    %vm15 = vcmask 490944
    %16 = vst.msk [vmem:[#allocation0] sm:$0x1] %vm15, %v14
    %s17 = scalar_lea.vmem %s0, 13
    %v18 = vld [vmem:[%s17] sm:$0x1]
    %19 = vrot.lane.b32.xlu0 %v18, 52
    %v20 = vpop.permute.xlu0 %19
    %vm21 = vcmask 458144
    %22 = vst.msk [vmem:[#allocation0] sm:$0x1] %vm21, %v20
    %s23 = scalar_lea.vmem %s0, 12
    %v24 = vld [vmem:[%s23] sm:$0x1]
    %25 = vrot.lane.b32.xlu0 %v24, 48
    %v26 = vpop.permute.xlu0 %25
    %vm27 = vcmask 425344
    %28 = vst.msk [vmem:[#allocation0] sm:$0x1] %vm27, %v26
    %s29 = scalar_lea.vmem %s0, 11
    %v30 = vld [vmem:[%s29] sm:$0x1]
    %31 = vrot.lane.b32.xlu0 %v30, 44
    %v32 = vpop.permute.xlu0 %31
    %vm33 = vcmask 392544
    %34 = vst.msk [vmem:[#allocation0] sm:$0x1] %vm33, %v32
    %s35 = scalar_lea.vmem %s0, 10
    %v36 = vld [vmem:[%s35] sm:$0x1]
    %37 = vrot.lane.b32.xlu0 %v36, 40
    %v38 = vpop.permute.xlu0 %37
    %vm39 = vcmask 359744
    %40 = vst.msk [vmem:[#allocation0] sm:$0x1] %vm39, %v38
    %s41 = scalar_lea.vmem %s0, 9
    %v42 = vld [vmem:[%s41] sm:$0x1]
    %43 = vrot.lane.b32.xlu0 %v42, 36
    %v44 = vpop.permute.xlu0 %43
    %vm45 = vcmask 326944
    %46 = vst.msk [vmem:[#allocation0] sm:$0x1] %vm45, %v44
    %s47 = scalar_lea.vmem %s0, 8
    %v48 = vld [vmem:[%s47] sm:$0x1]
    %49 = vrot.lane.b32.xlu0 %v48, 32
    %v50 = vpop.permute.xlu0 %49
    %vm51 = vcmask 294144
    %52 = vst.msk [vmem:[#allocation0] sm:$0x1] %vm51, %v50
    %s53 = scalar_lea.vmem %s0, 7
    %v54 = vld [vmem:[%s53] sm:$0x1]
    %55 = vrot.lane.b32.xlu0 %v54, 28
    %v56 = vpop.permute.xlu0 %55
    %vm57 = vcmask 261344
    %58 = vst.msk [vmem:[#allocation0] sm:$0x1] %vm57, %v56
    %s59 = scalar_lea.vmem %s0, 6
    %v60 = vld [vmem:[%s59] sm:$0x1]
    %61 = vrot.lane.b32.xlu0 %v60, 24
    %v62 = vpop.permute.xlu0 %61
    %vm63 = vcmask 228544
    %64 = vst.msk [vmem:[#allocation0] sm:$0x1] %vm63, %v62
    %s65 = scalar_lea.vmem %s0, 5
    %v66 = vld [vmem:[%s65] sm:$0x1]
    %67 = vrot.lane.b32.xlu0 %v66, 20
    %v68 = vpop.permute.xlu0 %67
    %vm69 = vcmask 195744
    %70 = vst.msk [vmem:[#allocation0] sm:$0x1] %vm69, %v68
    %s71 = scalar_lea.vmem %s0, 4
    %v72 = vld [vmem:[%s71] sm:$0x1]
    %73 = vrot.lane.b32.xlu0 %v72, 16
    %v74 = vpop.permute.xlu0 %73
    %vm75 = vcmask 162944
    %76 = vst.msk [vmem:[#allocation0] sm:$0x1] %vm75, %v74
    %s77 = scalar_lea.vmem %s0, 3
    %v78 = vld [vmem:[%s77] sm:$0x1]
    %79 = vrot.lane.b32.xlu0 %v78, 12
    %v80 = vpop.permute.xlu0 %79
    %vm81 = vcmask 130144
    %82 = vst.msk [vmem:[#allocation0] sm:$0x1] %vm81, %v80
    %s83 = scalar_lea.vmem %s0, 2
    %v84 = vld [vmem:[%s83] sm:$0x1]
    %85 = vrot.lane.b32.xlu0 %v84, 8
    %v86 = vpop.permute.xlu0 %85
    %vm87 = vcmask 97344
    %88 = vst.msk [vmem:[#allocation0] sm:$0x1] %vm87, %v86
    %s89 = scalar_lea.vmem %s0, 1
    %v90 = vld [vmem:[%s89] sm:$0x1]
    %91 = vrot.lane.b32.xlu0 %v90, 4
    %v92 = vpop.permute.xlu0 %91
    %vm93 = vcmask 64544
    %94 = vst.msk [vmem:[#allocation0] sm:$0x1] %vm93, %v92
    %s96 = ssub.s32 2, 1
    %v97 = vld [vmem:[#allocation0] sm:%s96]
    %s99 = ssub.s32 2, 1
    %100 = vst [vmem:[%s1] sm:%s99] %v97

// kernel: upsampl_forward.5
$region0: #{upsampl_forward.5}
  #allocation0 [shape = 'u32[]', space=smem, size = 0x4, offset = 0x4, fixed_abs, tag = 'smem constant byte address 0x4 - core index']
  #allocation1 [shape = 'u32[72,128]{1,0:T(1,128)}', space=vmem, size = 0x9000, scoped, tag = 'internal scratch']
  %s0 = inlined_call_operand.vmem [shape: bf16[2,8,8,8], index: 0, kind: input, shape index: {}]
  %s1 = inlined_call_operand.vmem [shape: bf16[8,8], index: 1, kind: input, shape index: {}]
  %s2 = inlined_call_operand.vmem [shape: bf16[8,8], index: 2, kind: input, shape index: {}]
  %s3 = inlined_call_operand.vmem [shape: f32[1,8], index: 3, kind: input, shape index: {}]
  %s4 = inlined_call_operand.vmem [shape: bf16[2,8,2,8,8], index: 4, kind: output, shape index: {}]
  %s5 = sld [smem:[#allocation0]]
  $region49: #{upsampl_forward.5} parent=0
    _
  %s7 = ssub.s32 1, %s5
  %s8 = scalar_select 0, %s7, %s5
  loop: start=0, step=1, limit=4
  $region2: #{upsampl_forward.5} parent=0 // loop_pre_header
    _
  $region3: #{upsampl_forward.5} parent=0 // loop_header
    %s10 = sphi 0, %s14
    %p11 = scmp.ge.s32.totalorder %s10, 4
    %s17 = sphi 0, %s29
    %s18 = sphi 0, %s25
    %s19 = sphi 0, %s17
    %s20 = sphi 0, %s18
    %s21 = sphi 0, %s19
    %s22 = sphi 0, %s20
    %s34 = sphi 0, %s36
    %s37 = sphi 0, %s34
    %s38 = sphi 0, %s37
    %s54 = sphi 0, %s38
    %s58 = sphi 0, %s58
    %s60 = sphi 0, %s58
    %s61 = sphi 0, %s60
    %s75 = sphi 0, %s61
    %s79 = sphi 0, %s79
    %s81 = sphi 0, %s79
    %s82 = sphi 0, %s81
    %s96 = sphi 0, %s82
    %s100 = sphi 0, %s100
    %s102 = sphi 0, %s100
    %s103 = sphi 0, %s102
    %s117 = sphi 0, %s103
    %s125 = sphi 0, %s127
    %s128 = sphi 0, %s125
    %s129 = sphi 0, %s128
    %s145 = sphi 0, %s129
  $region4: #{upsampl_forward.5} parent=0 // loop_header_branch
    %13 = sbr.rel (%p11) target = $region8
  $region5: #{upsampl_forward.5} parent=0 // loop_body
    %s15 = ssub.s32 %s10, 1
    %s16 = ssub.s32 %s10, 2
    %s23 = sadd.s32 1, %s18
    %p24 = scmp.ge.s32.totalorder %s23, 1
    %s25 = scalar_select %p24, 0, %s23
    %s26 = sadd.s32 1, %s17
    %s27 = scalar_select %p24, %s26, %s17
    %p28 = scmp.ge.s32.totalorder %s27, 2
    %s29 = scalar_select %p28, 0, %s27
    %s30 = ssub.s32 %s17, %s29
    %s31 = ssub.s32 %s18, %s25
    %s32 = sor.u32 %s30, %s31
    %p33 = scmp.eq.s32.totalorder %s32, 0
    %s35 = sadd.s32 %s34, 1
    %s36 = scalar_select %p33, %s34, %s35
    %p39 = pneg %p33
    %p40 = scmp.eq.s32.totalorder %s10, 1
    %p41 = por %p39, %p40
    %p42 = scmp.ne.s32.totalorder %s34, %s37
    %p43 = scmp.eq.s32.totalorder %s10, 0
    %p44 = por %p42, %p43
    %p45 = scmp.ne.s32.totalorder %s34, %s37
    %p46 = scmp.eq.s32.totalorder %s15, 1
    %p47 = por %p45, %p46
    %p48 = scmp.ne.s32.totalorder %s37, %s38
    %p49 = scmp.eq.s32.totalorder %s15, 0
    %p50 = por %p48, %p49
    %p51 = scmp.ne.s32.totalorder %s37, %s38
    %p52 = scmp.eq.s32.totalorder %s16, 1
    %p53 = por %p51, %p52
    %p55 = scmp.ne.s32.totalorder %s38, %s54
    %p56 = scmp.eq.s32.totalorder %s16, 0
    %p57 = por %p55, %p56
    %s59 = sadd.s32 %s58, 1
    %p62 = scmp.eq.s32.totalorder %s10, 1
    %p63 = scmp.ne.s32.totalorder %s58, %s60
    %p64 = scmp.eq.s32.totalorder %s10, 0
    %p65 = por %p63, %p64
    %p66 = scmp.ne.s32.totalorder %s58, %s60
    %p67 = scmp.eq.s32.totalorder %s15, 1
    %p68 = por %p66, %p67
    %p69 = scmp.ne.s32.totalorder %s60, %s61
    %p70 = scmp.eq.s32.totalorder %s15, 0
    %p71 = por %p69, %p70
    %p72 = scmp.ne.s32.totalorder %s60, %s61
    %p73 = scmp.eq.s32.totalorder %s16, 1
    %p74 = por %p72, %p73
    %p76 = scmp.ne.s32.totalorder %s61, %s75
    %p77 = scmp.eq.s32.totalorder %s16, 0
    %p78 = por %p76, %p77
    %s80 = sadd.s32 %s79, 1
    %p83 = scmp.eq.s32.totalorder %s10, 1
    %p84 = scmp.ne.s32.totalorder %s79, %s81
    %p85 = scmp.eq.s32.totalorder %s10, 0
    %p86 = por %p84, %p85
    %p87 = scmp.ne.s32.totalorder %s79, %s81
    %p88 = scmp.eq.s32.totalorder %s15, 1
    %p89 = por %p87, %p88
    %p90 = scmp.ne.s32.totalorder %s81, %s82
    %p91 = scmp.eq.s32.totalorder %s15, 0
    %p92 = por %p90, %p91
    %p93 = scmp.ne.s32.totalorder %s81, %s82
    %p94 = scmp.eq.s32.totalorder %s16, 1
    %p95 = por %p93, %p94
    %p97 = scmp.ne.s32.totalorder %s82, %s96
    %p98 = scmp.eq.s32.totalorder %s16, 0
    %p99 = por %p97, %p98
    %s101 = sadd.s32 %s100, 1
    %p104 = scmp.eq.s32.totalorder %s10, 1
    %p105 = scmp.ne.s32.totalorder %s100, %s102
    %p106 = scmp.eq.s32.totalorder %s10, 0
    %p107 = por %p105, %p106
    %p108 = scmp.ne.s32.totalorder %s100, %s102
    %p109 = scmp.eq.s32.totalorder %s15, 1
    %p110 = por %p108, %p109
    %p111 = scmp.ne.s32.totalorder %s102, %s103
    %p112 = scmp.eq.s32.totalorder %s15, 0
    %p113 = por %p111, %p112
    %p114 = scmp.ne.s32.totalorder %s102, %s103
    %p115 = scmp.eq.s32.totalorder %s16, 1
    %p116 = por %p114, %p115
    %p118 = scmp.ne.s32.totalorder %s103, %s117
    %p119 = scmp.eq.s32.totalorder %s16, 0
    %p120 = por %p118, %p119
    %s121 = ssub.s32 %s17, %s29
    %s122 = ssub.s32 %s18, %s25
    %s123 = sor.u32 %s121, %s122
    %p124 = scmp.eq.s32.totalorder %s123, 0
    %s126 = sadd.s32 %s125, 1
    %s127 = scalar_select %p124, %s125, %s126
    %p130 = pneg %p124
    %p131 = scmp.eq.s32.totalorder %s10, 1
    %p132 = por %p130, %p131
    %p133 = scmp.ne.s32.totalorder %s125, %s128
    %p134 = scmp.eq.s32.totalorder %s10, 0
    %p135 = por %p133, %p134
    %p136 = scmp.ne.s32.totalorder %s125, %s128
    %p137 = scmp.eq.s32.totalorder %s15, 1
    %p138 = por %p136, %p137
    %p139 = scmp.ne.s32.totalorder %s128, %s129
    %p140 = scmp.eq.s32.totalorder %s15, 0
    %p141 = por %p139, %p140
    %p142 = scmp.ne.s32.totalorder %s128, %s129
    %p143 = scmp.eq.s32.totalorder %s16, 1
    %p144 = por %p142, %p143
    %p146 = scmp.ne.s32.totalorder %s129, %s145
    %p147 = scmp.eq.s32.totalorder %s16, 0
    %p148 = por %p146, %p147
    %p149 = scmp.le.s32.totalorder 1, %s10
    %p150 = scmp.lt.s32.totalorder %s10, 3
    %p151 = pnand %p149, %p150
    %p152 = pneg %p151
    // Predicated region
    $region9: #{upsampl_forward.5} parent=5 // pred_check
      _
    $region10: #{upsampl_forward.5} parent=5 // pred_check_branch
      %154 = sbr.rel (%p151) target = $region12
    $region11: #{upsampl_forward.5} parent=5 // pred_region
      %s155 = ssub.s32 %s10, 1
      // Predicated region
      $region13: #{upsampl_forward.5} parent=11 // pred_check
        %p156 = pneg %p71
      $region14: #{upsampl_forward.5} parent=11 // pred_check_branch
        %158 = sbr.rel (%p156) target = $region16
      $region15: #{upsampl_forward.5} parent=11 // pred_region
        _
      $region16: #{upsampl_forward.5} parent=11 // pred_fallthru
        _
      // Predicated region
      $region17: #{upsampl_forward.5} parent=11 // pred_check
        %p159 = pneg %p92
      $region18: #{upsampl_forward.5} parent=11 // pred_check_branch
        %161 = sbr.rel (%p159) target = $region20
      $region19: #{upsampl_forward.5} parent=11 // pred_region
        _
      $region20: #{upsampl_forward.5} parent=11 // pred_fallthru
        _
      // Predicated region
      $region21: #{upsampl_forward.5} parent=11 // pred_check
        %p162 = pneg %p113
      $region22: #{upsampl_forward.5} parent=11 // pred_check_branch
        %164 = sbr.rel (%p162) target = $region24
      $region23: #{upsampl_forward.5} parent=11 // pred_region
        _
      $region24: #{upsampl_forward.5} parent=11 // pred_fallthru
        _
    $region12: #{upsampl_forward.5} parent=5 // pred_fallthru
      _
    %p165 = scmp.lt.s32.totalorder %s10, 2
    // Predicated region
    $region25: #{upsampl_forward.5} parent=5 // pred_check
      %p166 = pneg %p165
    $region26: #{upsampl_forward.5} parent=5 // pred_check_branch
      %168 = sbr.rel (%p166) target = $region28
    $region27: #{upsampl_forward.5} parent=5 // pred_region
      // Predicated region
      $region29: #{upsampl_forward.5} parent=27 // pred_check
        %p169 = pneg %p44
      $region30: #{upsampl_forward.5} parent=27 // pred_check_branch
        %171 = sbr.rel (%p169) target = $region32
      $region31: #{upsampl_forward.5} parent=27 // pred_region
        %s172 = smul.u32 8, %s18
        %p173 = scmp.lt.s32.totalorder %s17, 1
        %s174 = scalar_select %p173, %s17, 1
        %p175 = scmp.lt.s32.totalorder %s172, 7
        %s176 = scalar_select %p175, %s172, 7
        %s177 = smul.addr %s174, 8
        %s178 = sadd.s32 %s176, %s177
        %s179 = smul.addr %s178, 4
        %s180 = scalar_lea.vmem %s0, %s179
        %s181 = smul.u32 8, %s18
      $region32: #{upsampl_forward.5} parent=27 // pred_fallthru
        _
    $region28: #{upsampl_forward.5} parent=5 // pred_fallthru
      _
    %p182 = scmp.le.s32.totalorder 1, %s10
    %p183 = scmp.lt.s32.totalorder %s10, 3
    %p184 = pnand %p182, %p183
    %p185 = pneg %p184
    // Predicated region
    $region33: #{upsampl_forward.5} parent=5 // pred_check
      _
    $region34: #{upsampl_forward.5} parent=5 // pred_check_branch
      %187 = sbr.rel (%p184) target = $region36
    $region35: #{upsampl_forward.5} parent=5 // pred_region
      %s188 = ssub.s32 %s10, 1
      %s189 = smul.u32 8, %s20
      %p190 = scmp.lt.s32.totalorder %s19, 1
      %s191 = scalar_select %p190, %s19, 1
      %p192 = scmp.lt.s32.totalorder %s189, 7
      %s193 = scalar_select %p192, %s189, 7
      %s194 = smul.addr %s191, 8
      %s195 = sadd.s32 %s193, %s194
      %s196 = smul.addr %s195, 4
      %s197 = scalar_lea.vmem %s0, %s196
      %p198 = pneg %p50
      %p199 = pneg %p47
      %p200 = pneg %p71
      %p201 = pneg %p68
      %p202 = pneg %p92
      %p203 = pneg %p89
      %p204 = pneg %p113
      %p205 = pneg %p110
      %p206 = pneg %p141
      %p207 = pneg %p138
      %s208 = smul.u32 8, %s20
      %p209 = scmp.lt.s32.totalorder %s19, 1
      %s210 = scalar_select %p209, %s19, 1
      %p211 = scmp.lt.s32.totalorder %s208, 7
      %s212 = scalar_select %p211, %s208, 7
      %s213 = smul.addr %s212, 2
      %s214 = smul.addr %s210, 16
      %s215 = sadd.s32 %s213, %s214
      %s216 = smul.addr %s215, 4
      %s217 = scalar_lea.vmem %s4, %s216
      %s218 = smul.u32 8, %s20
      %p219 = scmp.lt.s32.totalorder %s19, 1
      %s220 = scalar_select %p219, %s19, 1
      %p221 = scmp.lt.s32.totalorder %s218, 7
      %s222 = scalar_select %p221, %s218, 7
      %s223 = smul.addr %s220, 8
      %s224 = sadd.s32 %s222, %s223
      %s225 = smul.addr %s224, 4
      %s226 = scalar_lea.vmem %s0, %s225
      %s227 = smul.u32 8, %s20
      %s228 = smul.u32 8, %s20
      %p229 = scmp.lt.s32.totalorder %s19, 1
      %s230 = scalar_select %p229, %s19, 1
      %p231 = scmp.lt.s32.totalorder %s228, 7
      %s232 = scalar_select %p231, %s228, 7
      %s233 = smul.addr %s232, 2
      %s234 = smul.addr %s230, 16
      %s235 = sadd.s32 %s233, %s234
      %s236 = smul.addr %s235, 4
      %s237 = scalar_lea.vmem %s4, %s236
      %s238 = smul.u32 8, %s20
      %v240 = vld [vmem:[%s226] sm:$0xf]
      %v241 = vld [vmem:[%s226 + $0x4] sm:$0xf]
      %v242 = vld [vmem:[%s226 + $0x8] sm:$0xf]
      %v243 = vld [vmem:[%s226 + $0xc] sm:$0xf]
      %v244 = vld [vmem:[%s226 + $0x10] sm:$0xf]
      %v245 = vld [vmem:[%s226 + $0x14] sm:$0xf]
      %v246 = vld [vmem:[%s226 + $0x18] sm:$0xf]
      %v247 = vld [vmem:[%s226 + $0x1c] sm:$0xf]
      %v248 = vld [vmem:[%s3] sm:$0x1]
      %v249 = vld [vmem:[%s1] sm:$0xf]
      %v251 = vperm.slane %v248, 0
      %v261 = vunpack.c.l.b16 %v240
      %v262 = vunpack.c.l.b16 %v241
      %v263 = vunpack.c.l.b16 %v242
      %v264 = vunpack.c.l.b16 %v243
      %v265 = vunpack.c.l.b16 %v244
      %v266 = vunpack.c.l.b16 %v245
      %v267 = vunpack.c.l.b16 %v246
      %v268 = vunpack.c.l.b16 %v247
      %v269 = vpack.c.b16 %v262, %v261
      %v270 = vpack.c.b16 %v264, %v263
      %v271 = vpack.c.b16 %v266, %v265
      %v272 = vpack.c.b16 %v268, %v267
      %vm273 = vcmask 64512
      %v275 = vsel %vm273, %v269, 0
      %v278 = vsel %vm273, %v270, 0
      %v281 = vsel %vm273, %v271, 0
      %v284 = vsel %vm273, %v272, 0
      %vm286 = vcmask 1043456
      %v288 = vsel %vm286, %v249, 0
      %290 = vmatpush.bf16.msra.mxu0 0
      %291 = vmatpush.bf16.msra.mxu0 0
      %292 = vmatpush.bf16.msra.mxu0 0
      %293 = vmatpush.bf16.msra.mxu0 0
      %294 = vmatpush.bf16.msra.mxu0 0
      %295 = vmatpush.bf16.msra.mxu0 0
      %296 = vmatpush.bf16.msra.mxu0 0
      %297 = vmatpush.bf16.msra.mxu0 %v288
      %298 = vmatmul.bf16.gmra.mxu0 %v275
      %v299 = vpop.f32.mrf.mxu0
      %v300 = vadd.f32 %v251, %v299
      %v301 = vpop.f32.mrf.mxu0
      %v302 = vadd.f32 %v251, %v301
      %303 = vmatmul.bf16.gmra.mxu0 %v278
      %v304 = vpop.f32.mrf.mxu0
      %v305 = vadd.f32 %v251, %v304
      %v306 = vpop.f32.mrf.mxu0
      %v307 = vadd.f32 %v251, %v306
      %308 = vmatmul.bf16.gmra.mxu0 %v281
      %v309 = vpop.f32.mrf.mxu0
      %v310 = vadd.f32 %v251, %v309
      %v311 = vpop.f32.mrf.mxu0
      %v312 = vadd.f32 %v251, %v311
      %313 = vmatmul.bf16.gmra.mxu0 %v284
      %v314 = vpop.f32.mrf.mxu0
      %v315 = vadd.f32 %v251, %v314
      %v316 = vpop.f32.mrf.mxu0
      %v317 = vadd.f32 %v251, %v316
      %318 = vdwg.mxu0
      %v319 = vld [vmem:[%s2] sm:$0xf]
      %v321 = vsel %vm286, %v319, 0
      %323 = vmatpush.bf16.msra.mxu0 0
      %324 = vmatpush.bf16.msra.mxu0 0
      %325 = vmatpush.bf16.msra.mxu0 0
      %326 = vmatpush.bf16.msra.mxu0 0
      %327 = vmatpush.bf16.msra.mxu0 0
      %328 = vmatpush.bf16.msra.mxu0 0
      %329 = vmatpush.bf16.msra.mxu0 0
      %330 = vmatpush.bf16.msra.mxu0 %v321
      %331 = vmatmul.bf16.gmra.mxu0 %v275
      %v332 = vpop.f32.mrf.mxu0
      %v333 = vadd.f32 %v251, %v332
      %v334 = vpop.f32.mrf.mxu0
      %v335 = vadd.f32 %v251, %v334
      %336 = vmatmul.bf16.gmra.mxu0 %v278
      %v337 = vpop.f32.mrf.mxu0
      %v338 = vadd.f32 %v251, %v337
      %v339 = vpop.f32.mrf.mxu0
      %v340 = vadd.f32 %v251, %v339
      %341 = vmatmul.bf16.gmra.mxu0 %v281
      %v342 = vpop.f32.mrf.mxu0
      %v343 = vadd.f32 %v251, %v342
      %v344 = vpop.f32.mrf.mxu0
      %v345 = vadd.f32 %v251, %v344
      %346 = vmatmul.bf16.gmra.mxu0 %v284
      %v347 = vpop.f32.mrf.mxu0
      %v348 = vadd.f32 %v251, %v347
      %v349 = vpop.f32.mrf.mxu0
      %v350 = vadd.f32 %v251, %v349
      %351 = vdwg.mxu0
      %v352 = vpack.c.bf16 %v300, %v300
      %v353 = vpack.c.bf16 %v302, %v302
      %v354 = vpack.c.bf16 %v305, %v305
      %v355 = vpack.c.bf16 %v307, %v307
      %v356 = vpack.c.bf16 %v310, %v310
      %v357 = vpack.c.bf16 %v312, %v312
      %v358 = vpack.c.bf16 %v315, %v315
      %v359 = vpack.c.bf16 %v317, %v317
      %vm360 = vcmask 60416
      %361 = vst.msk [vmem:[%s237] sm:$0xf] %vm360, %v352
      %362 = vst.msk [vmem:[%s237 + $0x8] sm:$0xf] %vm360, %v353
      %363 = vst.msk [vmem:[%s237 + $0x10] sm:$0xf] %vm360, %v354
      %364 = vst.msk [vmem:[%s237 + $0x18] sm:$0xf] %vm360, %v355
      %365 = vst.msk [vmem:[%s237 + $0x20] sm:$0xf] %vm360, %v356
      %366 = vst.msk [vmem:[%s237 + $0x28] sm:$0xf] %vm360, %v357
      %367 = vst.msk [vmem:[%s237 + $0x30] sm:$0xf] %vm360, %v358
      %368 = vst.msk [vmem:[%s237 + $0x38] sm:$0xf] %vm360, %v359
      %v369 = vpack.c.bf16 %v333, %v333
      %v370 = vpack.c.bf16 %v335, %v335
      %v371 = vpack.c.bf16 %v338, %v338
      %v372 = vpack.c.bf16 %v340, %v340
      %v373 = vpack.c.bf16 %v343, %v343
      %v374 = vpack.c.bf16 %v345, %v345
      %v375 = vpack.c.bf16 %v348, %v348
      %v376 = vpack.c.bf16 %v350, %v350
      %s377 = scalar_lea.vmem %s237, 4
      %378 = vst.msk [vmem:[%s377] sm:$0xf] %vm360, %v369
      %379 = vst.msk [vmem:[%s377 + $0x8] sm:$0xf] %vm360, %v370
      %380 = vst.msk [vmem:[%s377 + $0x10] sm:$0xf] %vm360, %v371
      %381 = vst.msk [vmem:[%s377 + $0x18] sm:$0xf] %vm360, %v372
      %382 = vst.msk [vmem:[%s377 + $0x20] sm:$0xf] %vm360, %v373
      %383 = vst.msk [vmem:[%s377 + $0x28] sm:$0xf] %vm360, %v374
      %384 = vst.msk [vmem:[%s377 + $0x30] sm:$0xf] %vm360, %v375
      %385 = vst.msk [vmem:[%s377 + $0x38] sm:$0xf] %vm360, %v376
      %s386 = smul.u32 8, %s20
      %p387 = scmp.lt.s32.totalorder %s19, 1
      %s388 = scalar_select %p387, %s19, 1
      %p389 = scmp.lt.s32.totalorder %s386, 7
      %s390 = scalar_select %p389, %s386, 7
      %s391 = smul.addr %s390, 2
      %s392 = smul.addr %s388, 16
      %s393 = sadd.s32 %s391, %s392
      %s394 = smul.addr %s393, 4
      %s395 = scalar_lea.vmem %s4, %s394
      // Predicated region
      $region37: #{upsampl_forward.5} parent=35 // pred_check
        %p396 = pneg %p138
      $region38: #{upsampl_forward.5} parent=35 // pred_check_branch
        %398 = sbr.rel (%p396) target = $region40
      $region39: #{upsampl_forward.5} parent=35 // pred_region
        %s399 = smul.u32 8, %s20
      $region40: #{upsampl_forward.5} parent=35 // pred_fallthru
        _
    $region36: #{upsampl_forward.5} parent=5 // pred_fallthru
      _
    %p400 = scmp.le.s32.totalorder 2, %s10
    // Predicated region
    $region41: #{upsampl_forward.5} parent=5 // pred_check
      %p401 = pneg %p400
    $region42: #{upsampl_forward.5} parent=5 // pred_check_branch
      %403 = sbr.rel (%p401) target = $region44
    $region43: #{upsampl_forward.5} parent=5 // pred_region
      %s404 = ssub.s32 %s10, 2
      // Predicated region
      $region45: #{upsampl_forward.5} parent=43 // pred_check
        %p405 = pneg %p144
      $region46: #{upsampl_forward.5} parent=43 // pred_check_branch
        %407 = sbr.rel (%p405) target = $region48
      $region47: #{upsampl_forward.5} parent=43 // pred_region
        %s408 = smul.u32 8, %s22
        %p409 = scmp.lt.s32.totalorder %s21, 1
        %s410 = scalar_select %p409, %s21, 1
        %p411 = scmp.lt.s32.totalorder %s408, 7
        %s412 = scalar_select %p411, %s408, 7
        %s413 = smul.addr %s412, 2
        %s414 = smul.addr %s410, 16
        %s415 = sadd.s32 %s413, %s414
        %s416 = smul.addr %s415, 4
        %s417 = scalar_lea.vmem %s4, %s416
      $region48: #{upsampl_forward.5} parent=43 // pred_fallthru
        _
    $region44: #{upsampl_forward.5} parent=5 // pred_fallthru
      _
  $region6: #{upsampl_forward.5} parent=0 // loop_footer
    %s14 = sadd.s32 1, %s10
  $region7: #{upsampl_forward.5} parent=0 // loop_footer_branch
    %9 = sbr.rel target = $region3
  $region8: #{upsampl_forward.5} parent=0 // loop_exit
    _

// kernel: upsampl_forward.7
$region0: #{upsampl_forward.7}
  #allocation0 [shape = 'u32[]', space=smem, size = 0x4, offset = 0x4, fixed_abs, tag = 'smem constant byte address 0x4 - core index']
  #allocation1 [shape = 'u32[72,128]{1,0:T(1,128)}', space=vmem, size = 0x9000, scoped, tag = 'internal scratch']
  %s0 = inlined_call_operand.vmem [shape: f32[2,16,64], index: 0, kind: input, shape index: {}]
  %s1 = inlined_call_operand.vmem [shape: f32[1,1,64], index: 1, kind: input, shape index: {}]
  %s2 = inlined_call_operand.vmem [shape: f32[1,1,64], index: 2, kind: input, shape index: {}]
  %s3 = inlined_call_operand.vmem [shape: bf16[2,16,64], index: 3, kind: output, shape index: {}]
  %s4 = sld [smem:[#allocation0]]
  $region45: #{upsampl_forward.7} parent=0
    _
  %s6 = ssub.s32 1, %s4
  %s7 = scalar_select 0, %s6, %s4
  loop: start=0, step=1, limit=4
  $region2: #{upsampl_forward.7} parent=0 // loop_pre_header
    _
  $region3: #{upsampl_forward.7} parent=0 // loop_header
    %s9 = sphi 0, %s13
    %p10 = scmp.ge.s32.totalorder %s9, 4
    %s16 = sphi 0, %s28
    %s17 = sphi 0, %s24
    %s18 = sphi 0, %s16
    %s19 = sphi 0, %s17
    %s20 = sphi 0, %s18
    %s21 = sphi 0, %s19
    %s33 = sphi 0, %s35
    %s36 = sphi 0, %s33
    %s37 = sphi 0, %s36
    %s53 = sphi 0, %s37
    %s57 = sphi 0, %s57
    %s59 = sphi 0, %s57
    %s60 = sphi 0, %s59
    %s74 = sphi 0, %s60
    %s78 = sphi 0, %s78
    %s80 = sphi 0, %s78
    %s81 = sphi 0, %s80
    %s95 = sphi 0, %s81
    %s103 = sphi 0, %s105
    %s106 = sphi 0, %s103
    %s107 = sphi 0, %s106
    %s123 = sphi 0, %s107
  $region4: #{upsampl_forward.7} parent=0 // loop_header_branch
    %12 = sbr.rel (%p10) target = $region8
  $region5: #{upsampl_forward.7} parent=0 // loop_body
    %s14 = ssub.s32 %s9, 1
    %s15 = ssub.s32 %s9, 2
    %s22 = sadd.s32 1, %s17
    %p23 = scmp.ge.s32.totalorder %s22, 1
    %s24 = scalar_select %p23, 0, %s22
    %s25 = sadd.s32 1, %s16
    %s26 = scalar_select %p23, %s25, %s16
    %p27 = scmp.ge.s32.totalorder %s26, 2
    %s28 = scalar_select %p27, 0, %s26
    %s29 = ssub.s32 %s16, %s28
    %s30 = ssub.s32 %s17, %s24
    %s31 = sor.u32 %s29, %s30
    %p32 = scmp.eq.s32.totalorder %s31, 0
    %s34 = sadd.s32 %s33, 1
    %s35 = scalar_select %p32, %s33, %s34
    %p38 = pneg %p32
    %p39 = scmp.eq.s32.totalorder %s9, 1
    %p40 = por %p38, %p39
    %p41 = scmp.ne.s32.totalorder %s33, %s36
    %p42 = scmp.eq.s32.totalorder %s9, 0
    %p43 = por %p41, %p42
    %p44 = scmp.ne.s32.totalorder %s33, %s36
    %p45 = scmp.eq.s32.totalorder %s14, 1
    %p46 = por %p44, %p45
    %p47 = scmp.ne.s32.totalorder %s36, %s37
    %p48 = scmp.eq.s32.totalorder %s14, 0
    %p49 = por %p47, %p48
    %p50 = scmp.ne.s32.totalorder %s36, %s37
    %p51 = scmp.eq.s32.totalorder %s15, 1
    %p52 = por %p50, %p51
    %p54 = scmp.ne.s32.totalorder %s37, %s53
    %p55 = scmp.eq.s32.totalorder %s15, 0
    %p56 = por %p54, %p55
    %s58 = sadd.s32 %s57, 1
    %p61 = scmp.eq.s32.totalorder %s9, 1
    %p62 = scmp.ne.s32.totalorder %s57, %s59
    %p63 = scmp.eq.s32.totalorder %s9, 0
    %p64 = por %p62, %p63
    %p65 = scmp.ne.s32.totalorder %s57, %s59
    %p66 = scmp.eq.s32.totalorder %s14, 1
    %p67 = por %p65, %p66
    %p68 = scmp.ne.s32.totalorder %s59, %s60
    %p69 = scmp.eq.s32.totalorder %s14, 0
    %p70 = por %p68, %p69
    %p71 = scmp.ne.s32.totalorder %s59, %s60
    %p72 = scmp.eq.s32.totalorder %s15, 1
    %p73 = por %p71, %p72
    %p75 = scmp.ne.s32.totalorder %s60, %s74
    %p76 = scmp.eq.s32.totalorder %s15, 0
    %p77 = por %p75, %p76
    %s79 = sadd.s32 %s78, 1
    %p82 = scmp.eq.s32.totalorder %s9, 1
    %p83 = scmp.ne.s32.totalorder %s78, %s80
    %p84 = scmp.eq.s32.totalorder %s9, 0
    %p85 = por %p83, %p84
    %p86 = scmp.ne.s32.totalorder %s78, %s80
    %p87 = scmp.eq.s32.totalorder %s14, 1
    %p88 = por %p86, %p87
    %p89 = scmp.ne.s32.totalorder %s80, %s81
    %p90 = scmp.eq.s32.totalorder %s14, 0
    %p91 = por %p89, %p90
    %p92 = scmp.ne.s32.totalorder %s80, %s81
    %p93 = scmp.eq.s32.totalorder %s15, 1
    %p94 = por %p92, %p93
    %p96 = scmp.ne.s32.totalorder %s81, %s95
    %p97 = scmp.eq.s32.totalorder %s15, 0
    %p98 = por %p96, %p97
    %s99 = ssub.s32 %s16, %s28
    %s100 = ssub.s32 %s17, %s24
    %s101 = sor.u32 %s99, %s100
    %p102 = scmp.eq.s32.totalorder %s101, 0
    %s104 = sadd.s32 %s103, 1
    %s105 = scalar_select %p102, %s103, %s104
    %p108 = pneg %p102
    %p109 = scmp.eq.s32.totalorder %s9, 1
    %p110 = por %p108, %p109
    %p111 = scmp.ne.s32.totalorder %s103, %s106
    %p112 = scmp.eq.s32.totalorder %s9, 0
    %p113 = por %p111, %p112
    %p114 = scmp.ne.s32.totalorder %s103, %s106
    %p115 = scmp.eq.s32.totalorder %s14, 1
    %p116 = por %p114, %p115
    %p117 = scmp.ne.s32.totalorder %s106, %s107
    %p118 = scmp.eq.s32.totalorder %s14, 0
    %p119 = por %p117, %p118
    %p120 = scmp.ne.s32.totalorder %s106, %s107
    %p121 = scmp.eq.s32.totalorder %s15, 1
    %p122 = por %p120, %p121
    %p124 = scmp.ne.s32.totalorder %s107, %s123
    %p125 = scmp.eq.s32.totalorder %s15, 0
    %p126 = por %p124, %p125
    %p127 = scmp.le.s32.totalorder 1, %s9
    %p128 = scmp.lt.s32.totalorder %s9, 3
    %p129 = pnand %p127, %p128
    %p130 = pneg %p129
    // Predicated region
    $region9: #{upsampl_forward.7} parent=5 // pred_check
      _
    $region10: #{upsampl_forward.7} parent=5 // pred_check_branch
      %132 = sbr.rel (%p129) target = $region12
    $region11: #{upsampl_forward.7} parent=5 // pred_region
      %s133 = ssub.s32 %s9, 1
      // Predicated region
      $region13: #{upsampl_forward.7} parent=11 // pred_check
        %p134 = pneg %p70
      $region14: #{upsampl_forward.7} parent=11 // pred_check_branch
        %136 = sbr.rel (%p134) target = $region16
      $region15: #{upsampl_forward.7} parent=11 // pred_region
        _
      $region16: #{upsampl_forward.7} parent=11 // pred_fallthru
        _
      // Predicated region
      $region17: #{upsampl_forward.7} parent=11 // pred_check
        %p137 = pneg %p91
      $region18: #{upsampl_forward.7} parent=11 // pred_check_branch
        %139 = sbr.rel (%p137) target = $region20
      $region19: #{upsampl_forward.7} parent=11 // pred_region
        _
      $region20: #{upsampl_forward.7} parent=11 // pred_fallthru
        _
    $region12: #{upsampl_forward.7} parent=5 // pred_fallthru
      _
    %p140 = scmp.lt.s32.totalorder %s9, 2
    // Predicated region
    $region21: #{upsampl_forward.7} parent=5 // pred_check
      %p141 = pneg %p140
    $region22: #{upsampl_forward.7} parent=5 // pred_check_branch
      %143 = sbr.rel (%p141) target = $region24
    $region23: #{upsampl_forward.7} parent=5 // pred_region
      // Predicated region
      $region25: #{upsampl_forward.7} parent=23 // pred_check
        %p144 = pneg %p43
      $region26: #{upsampl_forward.7} parent=23 // pred_check_branch
        %146 = sbr.rel (%p144) target = $region28
      $region27: #{upsampl_forward.7} parent=23 // pred_region
        %s147 = smul.u32 2, %s17
        %p148 = scmp.lt.s32.totalorder %s16, 1
        %s149 = scalar_select %p148, %s16, 1
        %p150 = scmp.lt.s32.totalorder %s147, 1
        %s151 = scalar_select %p150, %s147, 1
        %s152 = smul.addr %s149, 2
        %s153 = sadd.s32 %s151, %s152
        %s154 = smul.addr %s153, 8
        %s155 = scalar_lea.vmem %s0, %s154
        %s156 = smul.u32 2, %s17
      $region28: #{upsampl_forward.7} parent=23 // pred_fallthru
        _
    $region24: #{upsampl_forward.7} parent=5 // pred_fallthru
      _
    %p157 = scmp.le.s32.totalorder 1, %s9
    %p158 = scmp.lt.s32.totalorder %s9, 3
    %p159 = pnand %p157, %p158
    %p160 = pneg %p159
    // Predicated region
    $region29: #{upsampl_forward.7} parent=5 // pred_check
      _
    $region30: #{upsampl_forward.7} parent=5 // pred_check_branch
      %162 = sbr.rel (%p159) target = $region32
    $region31: #{upsampl_forward.7} parent=5 // pred_region
      %s163 = ssub.s32 %s9, 1
      %s164 = smul.u32 2, %s19
      %p165 = scmp.lt.s32.totalorder %s18, 1
      %s166 = scalar_select %p165, %s18, 1
      %p167 = scmp.lt.s32.totalorder %s164, 1
      %s168 = scalar_select %p167, %s164, 1
      %s169 = smul.addr %s166, 2
      %s170 = sadd.s32 %s168, %s169
      %s171 = smul.addr %s170, 8
      %s172 = scalar_lea.vmem %s0, %s171
      %p173 = pneg %p49
      %p174 = pneg %p46
      %p175 = pneg %p70
      %p176 = pneg %p67
      %p177 = pneg %p91
      %p178 = pneg %p88
      %p179 = pneg %p119
      %p180 = pneg %p116
      %s181 = smul.u32 2, %s19
      %p182 = scmp.lt.s32.totalorder %s18, 1
      %s183 = scalar_select %p182, %s18, 1
      %p184 = scmp.lt.s32.totalorder %s181, 1
      %s185 = scalar_select %p184, %s181, 1
      %s186 = smul.addr %s183, 2
      %s187 = sadd.s32 %s185, %s186
      %s188 = smul.addr %s187, 4
      %s189 = scalar_lea.vmem %s3, %s188
      %s190 = smul.u32 2, %s19
      %p191 = scmp.lt.s32.totalorder %s18, 1
      %s192 = scalar_select %p191, %s18, 1
      %p193 = scmp.lt.s32.totalorder %s190, 1
      %s194 = scalar_select %p193, %s190, 1
      %s195 = smul.addr %s192, 2
      %s196 = sadd.s32 %s194, %s195
      %s197 = smul.addr %s196, 8
      %s198 = scalar_lea.vmem %s0, %s197
      %s199 = smul.u32 2, %s19
      %s200 = smul.u32 2, %s19
      %p201 = scmp.lt.s32.totalorder %s18, 1
      %s202 = scalar_select %p201, %s18, 1
      %p203 = scmp.lt.s32.totalorder %s200, 1
      %s204 = scalar_select %p203, %s200, 1
      %s205 = smul.addr %s202, 2
      %s206 = sadd.s32 %s204, %s205
      %s207 = smul.addr %s206, 4
      %s208 = scalar_lea.vmem %s3, %s207
      %s209 = smul.u32 2, %s19
      %v210 = vld [vmem:[%s198] sm:$0xff]
      %v211 = vld [vmem:[%s198 + $0x8] sm:$0xff]
      %v212 = vld [vmem:[%s1] sm:$0x1]
      %v214 = vperm.slane %v212, 0
      %v216 = vmul.f32 %v210, %v214
      %v217 = vmul.f32 %v211, %v214
      %v218 = vld [vmem:[%s2] sm:$0x1]
      %v220 = vperm.slane %v218, 0
      %v222 = vadd.f32 %v216, %v220
      %v223 = vadd.f32 %v217, %v220
      %v224 = vmax.f32 %v222, 0.0
      %v225 = vmax.f32 %v223, 0.0
      %v226 = vpack.c.bf16 %v224, %v224
      %v227 = vpack.c.bf16 %v225, %v225
      %vm228 = vcmask 519168
      %229 = vst.msk [vmem:[%s208] sm:$0xf] %vm228, %v226
      %230 = vst.msk [vmem:[%s208 + $0x4] sm:$0xf] %vm228, %v227
      %s231 = smul.u32 2, %s19
      %p232 = scmp.lt.s32.totalorder %s18, 1
      %s233 = scalar_select %p232, %s18, 1
      %p234 = scmp.lt.s32.totalorder %s231, 1
      %s235 = scalar_select %p234, %s231, 1
      %s236 = smul.addr %s233, 2
      %s237 = sadd.s32 %s235, %s236
      %s238 = smul.addr %s237, 4
      %s239 = scalar_lea.vmem %s3, %s238
      // Predicated region
      $region33: #{upsampl_forward.7} parent=31 // pred_check
        %p240 = pneg %p116
      $region34: #{upsampl_forward.7} parent=31 // pred_check_branch
        %242 = sbr.rel (%p240) target = $region36
      $region35: #{upsampl_forward.7} parent=31 // pred_region
        %s243 = smul.u32 2, %s19
      $region36: #{upsampl_forward.7} parent=31 // pred_fallthru
        _
    $region32: #{upsampl_forward.7} parent=5 // pred_fallthru
      _
    %p244 = scmp.le.s32.totalorder 2, %s9
    // Predicated region
    $region37: #{upsampl_forward.7} parent=5 // pred_check
      %p245 = pneg %p244
    $region38: #{upsampl_forward.7} parent=5 // pred_check_branch
      %247 = sbr.rel (%p245) target = $region40
    $region39: #{upsampl_forward.7} parent=5 // pred_region
      %s248 = ssub.s32 %s9, 2
      // Predicated region
      $region41: #{upsampl_forward.7} parent=39 // pred_check
        %p249 = pneg %p122
      $region42: #{upsampl_forward.7} parent=39 // pred_check_branch
        %251 = sbr.rel (%p249) target = $region44
      $region43: #{upsampl_forward.7} parent=39 // pred_region
        %s252 = smul.u32 2, %s21
        %p253 = scmp.lt.s32.totalorder %s20, 1
        %s254 = scalar_select %p253, %s20, 1
        %p255 = scmp.lt.s32.totalorder %s252, 1
        %s256 = scalar_select %p255, %s252, 1
        %s257 = smul.addr %s254, 2
        %s258 = sadd.s32 %s256, %s257
        %s259 = smul.addr %s258, 4
        %s260 = scalar_lea.vmem %s3, %s259
      $region44: #{upsampl_forward.7} parent=39 // pred_fallthru
        _
    $region40: #{upsampl_forward.7} parent=5 // pred_fallthru
      _
  $region6: #{upsampl_forward.7} parent=0 // loop_footer
    %s13 = sadd.s32 1, %s9
  $region7: #{upsampl_forward.7} parent=0 // loop_footer_branch
    %8 = sbr.rel target = $region3
  $region8: #{upsampl_forward.7} parent=0 // loop_exit
    _

// kernel: upsampl_forward.9
$region0: #{upsampl_forward.9}
  #allocation0 [shape = 'u32[]', space=smem, size = 0x4, offset = 0x4, fixed_abs, tag = 'smem constant byte address 0x4 - core index']
  #allocation1 [shape = 'u32[72,128]{1,0:T(1,128)}', space=vmem, size = 0x9000, scoped, tag = 'internal scratch']
  %s0 = inlined_call_operand.vmem [shape: f32[2,16,64], index: 0, kind: input, shape index: {}]
  %s1 = inlined_call_operand.vmem [shape: f32[1,1,64], index: 1, kind: input, shape index: {}]
  %s2 = inlined_call_operand.vmem [shape: f32[1,1,64], index: 2, kind: input, shape index: {}]
  %s3 = inlined_call_operand.vmem [shape: f32[2,16,64], index: 3, kind: output, shape index: {}]
  %s4 = sld [smem:[#allocation0]]
  $region45: #{upsampl_forward.9} parent=0
    _
  %s6 = ssub.s32 1, %s4
  %s7 = scalar_select 0, %s6, %s4
  loop: start=0, step=1, limit=4
  $region2: #{upsampl_forward.9} parent=0 // loop_pre_header
    _
  $region3: #{upsampl_forward.9} parent=0 // loop_header
    %s9 = sphi 0, %s13
    %p10 = scmp.ge.s32.totalorder %s9, 4
    %s16 = sphi 0, %s28
    %s17 = sphi 0, %s24
    %s18 = sphi 0, %s16
    %s19 = sphi 0, %s17
    %s20 = sphi 0, %s18
    %s21 = sphi 0, %s19
    %s33 = sphi 0, %s35
    %s36 = sphi 0, %s33
    %s37 = sphi 0, %s36
    %s53 = sphi 0, %s37
    %s57 = sphi 0, %s57
    %s59 = sphi 0, %s57
    %s60 = sphi 0, %s59
    %s74 = sphi 0, %s60
    %s78 = sphi 0, %s78
    %s80 = sphi 0, %s78
    %s81 = sphi 0, %s80
    %s95 = sphi 0, %s81
    %s103 = sphi 0, %s105
    %s106 = sphi 0, %s103
    %s107 = sphi 0, %s106
    %s123 = sphi 0, %s107
  $region4: #{upsampl_forward.9} parent=0 // loop_header_branch
    %12 = sbr.rel (%p10) target = $region8
  $region5: #{upsampl_forward.9} parent=0 // loop_body
    %s14 = ssub.s32 %s9, 1
    %s15 = ssub.s32 %s9, 2
    %s22 = sadd.s32 1, %s17
    %p23 = scmp.ge.s32.totalorder %s22, 1
    %s24 = scalar_select %p23, 0, %s22
    %s25 = sadd.s32 1, %s16
    %s26 = scalar_select %p23, %s25, %s16
    %p27 = scmp.ge.s32.totalorder %s26, 2
    %s28 = scalar_select %p27, 0, %s26
    %s29 = ssub.s32 %s16, %s28
    %s30 = ssub.s32 %s17, %s24
    %s31 = sor.u32 %s29, %s30
    %p32 = scmp.eq.s32.totalorder %s31, 0
    %s34 = sadd.s32 %s33, 1
    %s35 = scalar_select %p32, %s33, %s34
    %p38 = pneg %p32
    %p39 = scmp.eq.s32.totalorder %s9, 1
    %p40 = por %p38, %p39
    %p41 = scmp.ne.s32.totalorder %s33, %s36
    %p42 = scmp.eq.s32.totalorder %s9, 0
    %p43 = por %p41, %p42
    %p44 = scmp.ne.s32.totalorder %s33, %s36
    %p45 = scmp.eq.s32.totalorder %s14, 1
    %p46 = por %p44, %p45
    %p47 = scmp.ne.s32.totalorder %s36, %s37
    %p48 = scmp.eq.s32.totalorder %s14, 0
    %p49 = por %p47, %p48
    %p50 = scmp.ne.s32.totalorder %s36, %s37
    %p51 = scmp.eq.s32.totalorder %s15, 1
    %p52 = por %p50, %p51
    %p54 = scmp.ne.s32.totalorder %s37, %s53
    %p55 = scmp.eq.s32.totalorder %s15, 0
    %p56 = por %p54, %p55
    %s58 = sadd.s32 %s57, 1
    %p61 = scmp.eq.s32.totalorder %s9, 1
    %p62 = scmp.ne.s32.totalorder %s57, %s59
    %p63 = scmp.eq.s32.totalorder %s9, 0
    %p64 = por %p62, %p63
    %p65 = scmp.ne.s32.totalorder %s57, %s59
    %p66 = scmp.eq.s32.totalorder %s14, 1
    %p67 = por %p65, %p66
    %p68 = scmp.ne.s32.totalorder %s59, %s60
    %p69 = scmp.eq.s32.totalorder %s14, 0
    %p70 = por %p68, %p69
    %p71 = scmp.ne.s32.totalorder %s59, %s60
    %p72 = scmp.eq.s32.totalorder %s15, 1
    %p73 = por %p71, %p72
    %p75 = scmp.ne.s32.totalorder %s60, %s74
    %p76 = scmp.eq.s32.totalorder %s15, 0
    %p77 = por %p75, %p76
    %s79 = sadd.s32 %s78, 1
    %p82 = scmp.eq.s32.totalorder %s9, 1
    %p83 = scmp.ne.s32.totalorder %s78, %s80
    %p84 = scmp.eq.s32.totalorder %s9, 0
    %p85 = por %p83, %p84
    %p86 = scmp.ne.s32.totalorder %s78, %s80
    %p87 = scmp.eq.s32.totalorder %s14, 1
    %p88 = por %p86, %p87
    %p89 = scmp.ne.s32.totalorder %s80, %s81
    %p90 = scmp.eq.s32.totalorder %s14, 0
    %p91 = por %p89, %p90
    %p92 = scmp.ne.s32.totalorder %s80, %s81
    %p93 = scmp.eq.s32.totalorder %s15, 1
    %p94 = por %p92, %p93
    %p96 = scmp.ne.s32.totalorder %s81, %s95
    %p97 = scmp.eq.s32.totalorder %s15, 0
    %p98 = por %p96, %p97
    %s99 = ssub.s32 %s16, %s28
    %s100 = ssub.s32 %s17, %s24
    %s101 = sor.u32 %s99, %s100
    %p102 = scmp.eq.s32.totalorder %s101, 0
    %s104 = sadd.s32 %s103, 1
    %s105 = scalar_select %p102, %s103, %s104
    %p108 = pneg %p102
    %p109 = scmp.eq.s32.totalorder %s9, 1
    %p110 = por %p108, %p109
    %p111 = scmp.ne.s32.totalorder %s103, %s106
    %p112 = scmp.eq.s32.totalorder %s9, 0
    %p113 = por %p111, %p112
    %p114 = scmp.ne.s32.totalorder %s103, %s106
    %p115 = scmp.eq.s32.totalorder %s14, 1
    %p116 = por %p114, %p115
    %p117 = scmp.ne.s32.totalorder %s106, %s107
    %p118 = scmp.eq.s32.totalorder %s14, 0
    %p119 = por %p117, %p118
    %p120 = scmp.ne.s32.totalorder %s106, %s107
    %p121 = scmp.eq.s32.totalorder %s15, 1
    %p122 = por %p120, %p121
    %p124 = scmp.ne.s32.totalorder %s107, %s123
    %p125 = scmp.eq.s32.totalorder %s15, 0
    %p126 = por %p124, %p125
    %p127 = scmp.le.s32.totalorder 1, %s9
    %p128 = scmp.lt.s32.totalorder %s9, 3
    %p129 = pnand %p127, %p128
    %p130 = pneg %p129
    // Predicated region
    $region9: #{upsampl_forward.9} parent=5 // pred_check
      _
    $region10: #{upsampl_forward.9} parent=5 // pred_check_branch
      %132 = sbr.rel (%p129) target = $region12
    $region11: #{upsampl_forward.9} parent=5 // pred_region
      %s133 = ssub.s32 %s9, 1
      // Predicated region
      $region13: #{upsampl_forward.9} parent=11 // pred_check
        %p134 = pneg %p70
      $region14: #{upsampl_forward.9} parent=11 // pred_check_branch
        %136 = sbr.rel (%p134) target = $region16
      $region15: #{upsampl_forward.9} parent=11 // pred_region
        _
      $region16: #{upsampl_forward.9} parent=11 // pred_fallthru
        _
      // Predicated region
      $region17: #{upsampl_forward.9} parent=11 // pred_check
        %p137 = pneg %p91
      $region18: #{upsampl_forward.9} parent=11 // pred_check_branch
        %139 = sbr.rel (%p137) target = $region20
      $region19: #{upsampl_forward.9} parent=11 // pred_region
        _
      $region20: #{upsampl_forward.9} parent=11 // pred_fallthru
        _
    $region12: #{upsampl_forward.9} parent=5 // pred_fallthru
      _
    %p140 = scmp.lt.s32.totalorder %s9, 2
    // Predicated region
    $region21: #{upsampl_forward.9} parent=5 // pred_check
      %p141 = pneg %p140
    $region22: #{upsampl_forward.9} parent=5 // pred_check_branch
      %143 = sbr.rel (%p141) target = $region24
    $region23: #{upsampl_forward.9} parent=5 // pred_region
      // Predicated region
      $region25: #{upsampl_forward.9} parent=23 // pred_check
        %p144 = pneg %p43
      $region26: #{upsampl_forward.9} parent=23 // pred_check_branch
        %146 = sbr.rel (%p144) target = $region28
      $region27: #{upsampl_forward.9} parent=23 // pred_region
        %s147 = smul.u32 2, %s17
        %p148 = scmp.lt.s32.totalorder %s16, 1
        %s149 = scalar_select %p148, %s16, 1
        %p150 = scmp.lt.s32.totalorder %s147, 1
        %s151 = scalar_select %p150, %s147, 1
        %s152 = smul.addr %s149, 2
        %s153 = sadd.s32 %s151, %s152
        %s154 = smul.addr %s153, 8
        %s155 = scalar_lea.vmem %s0, %s154
        %s156 = smul.u32 2, %s17
      $region28: #{upsampl_forward.9} parent=23 // pred_fallthru
        _
    $region24: #{upsampl_forward.9} parent=5 // pred_fallthru
      _
    %p157 = scmp.le.s32.totalorder 1, %s9
    %p158 = scmp.lt.s32.totalorder %s9, 3
    %p159 = pnand %p157, %p158
    %p160 = pneg %p159
    // Predicated region
    $region29: #{upsampl_forward.9} parent=5 // pred_check
      _
    $region30: #{upsampl_forward.9} parent=5 // pred_check_branch
      %162 = sbr.rel (%p159) target = $region32
    $region31: #{upsampl_forward.9} parent=5 // pred_region
      %s163 = ssub.s32 %s9, 1
      %s164 = smul.u32 2, %s19
      %p165 = scmp.lt.s32.totalorder %s18, 1
      %s166 = scalar_select %p165, %s18, 1
      %p167 = scmp.lt.s32.totalorder %s164, 1
      %s168 = scalar_select %p167, %s164, 1
      %s169 = smul.addr %s166, 2
      %s170 = sadd.s32 %s168, %s169
      %s171 = smul.addr %s170, 8
      %s172 = scalar_lea.vmem %s0, %s171
      %p173 = pneg %p49
      %p174 = pneg %p46
      %p175 = pneg %p70
      %p176 = pneg %p67
      %p177 = pneg %p91
      %p178 = pneg %p88
      %p179 = pneg %p119
      %p180 = pneg %p116
      %s181 = smul.u32 2, %s19
      %p182 = scmp.lt.s32.totalorder %s18, 1
      %s183 = scalar_select %p182, %s18, 1
      %p184 = scmp.lt.s32.totalorder %s181, 1
      %s185 = scalar_select %p184, %s181, 1
      %s186 = smul.addr %s183, 2
      %s187 = sadd.s32 %s185, %s186
      %s188 = smul.addr %s187, 8
      %s189 = scalar_lea.vmem %s3, %s188
      %s190 = smul.u32 2, %s19
      %p191 = scmp.lt.s32.totalorder %s18, 1
      %s192 = scalar_select %p191, %s18, 1
      %p193 = scmp.lt.s32.totalorder %s190, 1
      %s194 = scalar_select %p193, %s190, 1
      %s195 = smul.addr %s192, 2
      %s196 = sadd.s32 %s194, %s195
      %s197 = smul.addr %s196, 8
      %s198 = scalar_lea.vmem %s0, %s197
      %s199 = smul.u32 2, %s19
      %s200 = smul.u32 2, %s19
      %p201 = scmp.lt.s32.totalorder %s18, 1
      %s202 = scalar_select %p201, %s18, 1
      %p203 = scmp.lt.s32.totalorder %s200, 1
      %s204 = scalar_select %p203, %s200, 1
      %s205 = smul.addr %s202, 2
      %s206 = sadd.s32 %s204, %s205
      %s207 = smul.addr %s206, 8
      %s208 = scalar_lea.vmem %s3, %s207
      %s209 = smul.u32 2, %s19
      %v210 = vld [vmem:[%s198] sm:$0xff]
      %v211 = vld [vmem:[%s198 + $0x8] sm:$0xff]
      %v212 = vld [vmem:[%s1] sm:$0x1]
      %v214 = vperm.slane %v212, 0
      %v216 = vmul.f32 %v210, %v214
      %v217 = vmul.f32 %v211, %v214
      %v218 = vld [vmem:[%s2] sm:$0x1]
      %v220 = vperm.slane %v218, 0
      %v222 = vadd.f32 %v216, %v220
      %v223 = vadd.f32 %v217, %v220
      %v224 = vmax.f32 %v222, 0.0
      %v225 = vmax.f32 %v223, 0.0
      %vm226 = vcmask 523264
      %227 = vst.msk [vmem:[%s208] sm:$0xff] %vm226, %v224
      %228 = vst.msk [vmem:[%s208 + $0x8] sm:$0xff] %vm226, %v225
      %s229 = smul.u32 2, %s19
      %p230 = scmp.lt.s32.totalorder %s18, 1
      %s231 = scalar_select %p230, %s18, 1
      %p232 = scmp.lt.s32.totalorder %s229, 1
      %s233 = scalar_select %p232, %s229, 1
      %s234 = smul.addr %s231, 2
      %s235 = sadd.s32 %s233, %s234
      %s236 = smul.addr %s235, 8
      %s237 = scalar_lea.vmem %s3, %s236
      // Predicated region
      $region33: #{upsampl_forward.9} parent=31 // pred_check
        %p238 = pneg %p116
      $region34: #{upsampl_forward.9} parent=31 // pred_check_branch
        %240 = sbr.rel (%p238) target = $region36
      $region35: #{upsampl_forward.9} parent=31 // pred_region
        %s241 = smul.u32 2, %s19
      $region36: #{upsampl_forward.9} parent=31 // pred_fallthru
        _
    $region32: #{upsampl_forward.9} parent=5 // pred_fallthru
      _
    %p242 = scmp.le.s32.totalorder 2, %s9
    // Predicated region
    $region37: #{upsampl_forward.9} parent=5 // pred_check
      %p243 = pneg %p242
    $region38: #{upsampl_forward.9} parent=5 // pred_check_branch
      %245 = sbr.rel (%p243) target = $region40
    $region39: #{upsampl_forward.9} parent=5 // pred_region
      %s246 = ssub.s32 %s9, 2
      // Predicated region
      $region41: #{upsampl_forward.9} parent=39 // pred_check
        %p247 = pneg %p122
      $region42: #{upsampl_forward.9} parent=39 // pred_check_branch
        %249 = sbr.rel (%p247) target = $region44
      $region43: #{upsampl_forward.9} parent=39 // pred_region
        %s250 = smul.u32 2, %s21
        %p251 = scmp.lt.s32.totalorder %s20, 1
        %s252 = scalar_select %p251, %s20, 1
        %p253 = scmp.lt.s32.totalorder %s250, 1
        %s254 = scalar_select %p253, %s250, 1
        %s255 = smul.addr %s252, 2
        %s256 = sadd.s32 %s254, %s255
        %s257 = smul.addr %s256, 8
        %s258 = scalar_lea.vmem %s3, %s257
      $region44: #{upsampl_forward.9} parent=39 // pred_fallthru
        _
    $region40: #{upsampl_forward.9} parent=5 // pred_fallthru
      _
  $region6: #{upsampl_forward.9} parent=0 // loop_footer
    %s13 = sadd.s32 1, %s9
  $region7: #{upsampl_forward.9} parent=0 // loop_footer_branch
    %8 = sbr.rel target = $region3
  $region8: #{upsampl_forward.9} parent=0 // loop_exit
    _

// kernel: upsampl_forward.6
$region0: #{upsampl_forward.6}
  #allocation0 [shape = 'u32[]', space=smem, size = 0x4, offset = 0x4, fixed_abs, tag = 'smem constant byte address 0x4 - core index']
  #allocation1 [shape = 'u32[72,128]{1,0:T(1,128)}', space=vmem, size = 0x9000, scoped, tag = 'internal scratch']
  %s0 = inlined_call_operand.vmem [shape: bf16[2,18,18,4], index: 0, kind: input, shape index: {}]
  %s1 = inlined_call_operand.vmem [shape: bf16[2,18,18,4], index: 1, kind: input, shape index: {}]
  %s2 = inlined_call_operand.vmem [shape: bf16[36,4], index: 2, kind: input, shape index: {}]
  %s3 = inlined_call_operand.vmem [shape: bf16[36,4], index: 3, kind: input, shape index: {}]
  %s4 = inlined_call_operand.vmem [shape: f32[1,4], index: 4, kind: input, shape index: {}]
  %s5 = inlined_call_operand.vmem [shape: f32[2,16,16,4], index: 5, kind: output, shape index: {0}]
  %s6 = inlined_call_operand.vmem [shape: f32[2,2,2,4], index: 6, kind: output, shape index: {1}]
  %7 = xla_tuple %s5, %s6
  %s8 = sld [smem:[#allocation0]]
  $region61: #{upsampl_forward.6} parent=0
    _
  %s10 = ssub.s32 1, %s8
  %s11 = scalar_select 0, %s10, %s8
  loop: start=0, step=1, limit=6
  $region2: #{upsampl_forward.6} parent=0 // loop_pre_header
    _
  $region3: #{upsampl_forward.6} parent=0 // loop_header
    %s13 = sphi 0, %s17
    %p14 = scmp.ge.s32.totalorder %s13, 6
    %s20 = sphi 0, %s32
    %s21 = sphi 0, %s28
    %s22 = sphi 0, %s20
    %s23 = sphi 0, %s21
    %s24 = sphi 0, %s22
    %s25 = sphi 0, %s23
    %s35 = sphi 0, %s37
    %s38 = sphi 0, %s35
    %s39 = sphi 0, %s38
    %s55 = sphi 0, %s39
    %s61 = sphi 0, %s63
    %s64 = sphi 0, %s61
    %s65 = sphi 0, %s64
    %s81 = sphi 0, %s65
    %s85 = sphi 0, %s85
    %s87 = sphi 0, %s85
    %s88 = sphi 0, %s87
    %s102 = sphi 0, %s88
    %s106 = sphi 0, %s106
    %s108 = sphi 0, %s106
    %s109 = sphi 0, %s108
    %s123 = sphi 0, %s109
    %s127 = sphi 0, %s127
    %s129 = sphi 0, %s127
    %s130 = sphi 0, %s129
    %s144 = sphi 0, %s130
    %s152 = sphi 0, %s154
    %s155 = sphi 0, %s152
    %s156 = sphi 0, %s155
    %s172 = sphi 0, %s156
    %s180 = sphi 0, %s182
    %s183 = sphi 0, %s180
    %s184 = sphi 0, %s183
    %s200 = sphi 0, %s184
  $region4: #{upsampl_forward.6} parent=0 // loop_header_branch
    %16 = sbr.rel (%p14) target = $region8
  $region5: #{upsampl_forward.6} parent=0 // loop_body
    %s18 = ssub.s32 %s13, 1
    %s19 = ssub.s32 %s13, 2
    %s26 = sadd.s32 1, %s21
    %p27 = scmp.ge.s32.totalorder %s26, 2
    %s28 = scalar_select %p27, 0, %s26
    %s29 = sadd.s32 1, %s20
    %s30 = scalar_select %p27, %s29, %s20
    %p31 = scmp.ge.s32.totalorder %s30, 2
    %s32 = scalar_select %p31, 0, %s30
    %s33 = ssub.s32 %s20, %s32
    %p34 = scmp.eq.s32.totalorder %s33, 0
    %s36 = sadd.s32 %s35, 1
    %s37 = scalar_select %p34, %s35, %s36
    %p40 = pneg %p34
    %p41 = scmp.eq.s32.totalorder %s13, 3
    %p42 = por %p40, %p41
    %p43 = scmp.ne.s32.totalorder %s35, %s38
    %p44 = scmp.eq.s32.totalorder %s13, 0
    %p45 = por %p43, %p44
    %p46 = scmp.ne.s32.totalorder %s35, %s38
    %p47 = scmp.eq.s32.totalorder %s18, 3
    %p48 = por %p46, %p47
    %p49 = scmp.ne.s32.totalorder %s38, %s39
    %p50 = scmp.eq.s32.totalorder %s18, 0
    %p51 = por %p49, %p50
    %p52 = scmp.ne.s32.totalorder %s38, %s39
    %p53 = scmp.eq.s32.totalorder %s19, 3
    %p54 = por %p52, %p53
    %p56 = scmp.ne.s32.totalorder %s39, %s55
    %p57 = scmp.eq.s32.totalorder %s19, 0
    %p58 = por %p56, %p57
    %s59 = ssub.s32 %s20, %s32
    %p60 = scmp.eq.s32.totalorder %s59, 0
    %s62 = sadd.s32 %s61, 1
    %s63 = scalar_select %p60, %s61, %s62
    %p66 = pneg %p60
    %p67 = scmp.eq.s32.totalorder %s13, 3
    %p68 = por %p66, %p67
    %p69 = scmp.ne.s32.totalorder %s61, %s64
    %p70 = scmp.eq.s32.totalorder %s13, 0
    %p71 = por %p69, %p70
    %p72 = scmp.ne.s32.totalorder %s61, %s64
    %p73 = scmp.eq.s32.totalorder %s18, 3
    %p74 = por %p72, %p73
    %p75 = scmp.ne.s32.totalorder %s64, %s65
    %p76 = scmp.eq.s32.totalorder %s18, 0
    %p77 = por %p75, %p76
    %p78 = scmp.ne.s32.totalorder %s64, %s65
    %p79 = scmp.eq.s32.totalorder %s19, 3
    %p80 = por %p78, %p79
    %p82 = scmp.ne.s32.totalorder %s65, %s81
    %p83 = scmp.eq.s32.totalorder %s19, 0
    %p84 = por %p82, %p83
    %s86 = sadd.s32 %s85, 1
    %p89 = scmp.eq.s32.totalorder %s13, 3
    %p90 = scmp.ne.s32.totalorder %s85, %s87
    %p91 = scmp.eq.s32.totalorder %s13, 0
    %p92 = por %p90, %p91
    %p93 = scmp.ne.s32.totalorder %s85, %s87
    %p94 = scmp.eq.s32.totalorder %s18, 3
    %p95 = por %p93, %p94
    %p96 = scmp.ne.s32.totalorder %s87, %s88
    %p97 = scmp.eq.s32.totalorder %s18, 0
    %p98 = por %p96, %p97
    %p99 = scmp.ne.s32.totalorder %s87, %s88
    %p100 = scmp.eq.s32.totalorder %s19, 3
    %p101 = por %p99, %p100
    %p103 = scmp.ne.s32.totalorder %s88, %s102
    %p104 = scmp.eq.s32.totalorder %s19, 0
    %p105 = por %p103, %p104
    %s107 = sadd.s32 %s106, 1
    %p110 = scmp.eq.s32.totalorder %s13, 3
    %p111 = scmp.ne.s32.totalorder %s106, %s108
    %p112 = scmp.eq.s32.totalorder %s13, 0
    %p113 = por %p111, %p112
    %p114 = scmp.ne.s32.totalorder %s106, %s108
    %p115 = scmp.eq.s32.totalorder %s18, 3
    %p116 = por %p114, %p115
    %p117 = scmp.ne.s32.totalorder %s108, %s109
    %p118 = scmp.eq.s32.totalorder %s18, 0
    %p119 = por %p117, %p118
    %p120 = scmp.ne.s32.totalorder %s108, %s109
    %p121 = scmp.eq.s32.totalorder %s19, 3
    %p122 = por %p120, %p121
    %p124 = scmp.ne.s32.totalorder %s109, %s123
    %p125 = scmp.eq.s32.totalorder %s19, 0
    %p126 = por %p124, %p125
    %s128 = sadd.s32 %s127, 1
    %p131 = scmp.eq.s32.totalorder %s13, 3
    %p132 = scmp.ne.s32.totalorder %s127, %s129
    %p133 = scmp.eq.s32.totalorder %s13, 0
    %p134 = por %p132, %p133
    %p135 = scmp.ne.s32.totalorder %s127, %s129
    %p136 = scmp.eq.s32.totalorder %s18, 3
    %p137 = por %p135, %p136
    %p138 = scmp.ne.s32.totalorder %s129, %s130
    %p139 = scmp.eq.s32.totalorder %s18, 0
    %p140 = por %p138, %p139
    %p141 = scmp.ne.s32.totalorder %s129, %s130
    %p142 = scmp.eq.s32.totalorder %s19, 3
    %p143 = por %p141, %p142
    %p145 = scmp.ne.s32.totalorder %s130, %s144
    %p146 = scmp.eq.s32.totalorder %s19, 0
    %p147 = por %p145, %p146
    %s148 = ssub.s32 %s20, %s32
    %s149 = ssub.s32 %s21, %s28
    %s150 = sor.u32 %s148, %s149
    %p151 = scmp.eq.s32.totalorder %s150, 0
    %s153 = sadd.s32 %s152, 1
    %s154 = scalar_select %p151, %s152, %s153
    %p157 = pneg %p151
    %p158 = scmp.eq.s32.totalorder %s13, 3
    %p159 = por %p157, %p158
    %p160 = scmp.ne.s32.totalorder %s152, %s155
    %p161 = scmp.eq.s32.totalorder %s13, 0
    %p162 = por %p160, %p161
    %p163 = scmp.ne.s32.totalorder %s152, %s155
    %p164 = scmp.eq.s32.totalorder %s18, 3
    %p165 = por %p163, %p164
    %p166 = scmp.ne.s32.totalorder %s155, %s156
    %p167 = scmp.eq.s32.totalorder %s18, 0
    %p168 = por %p166, %p167
    %p169 = scmp.ne.s32.totalorder %s155, %s156
    %p170 = scmp.eq.s32.totalorder %s19, 3
    %p171 = por %p169, %p170
    %p173 = scmp.ne.s32.totalorder %s156, %s172
    %p174 = scmp.eq.s32.totalorder %s19, 0
    %p175 = por %p173, %p174
    %s176 = ssub.s32 %s20, %s32
    %s177 = ssub.s32 %s21, %s28
    %s178 = sor.u32 %s176, %s177
    %p179 = scmp.eq.s32.totalorder %s178, 0
    %s181 = sadd.s32 %s180, 1
    %s182 = scalar_select %p179, %s180, %s181
    %p185 = pneg %p179
    %p186 = scmp.eq.s32.totalorder %s13, 3
    %p187 = por %p185, %p186
    %p188 = scmp.ne.s32.totalorder %s180, %s183
    %p189 = scmp.eq.s32.totalorder %s13, 0
    %p190 = por %p188, %p189
    %p191 = scmp.ne.s32.totalorder %s180, %s183
    %p192 = scmp.eq.s32.totalorder %s18, 3
    %p193 = por %p191, %p192
    %p194 = scmp.ne.s32.totalorder %s183, %s184
    %p195 = scmp.eq.s32.totalorder %s18, 0
    %p196 = por %p194, %p195
    %p197 = scmp.ne.s32.totalorder %s183, %s184
    %p198 = scmp.eq.s32.totalorder %s19, 3
    %p199 = por %p197, %p198
    %p201 = scmp.ne.s32.totalorder %s184, %s200
    %p202 = scmp.eq.s32.totalorder %s19, 0
    %p203 = por %p201, %p202
    %p204 = scmp.le.s32.totalorder 1, %s13
    %p205 = scmp.lt.s32.totalorder %s13, 5
    %p206 = pnand %p204, %p205
    %p207 = pneg %p206
    // Predicated region
    $region9: #{upsampl_forward.6} parent=5 // pred_check
      _
    $region10: #{upsampl_forward.6} parent=5 // pred_check_branch
      %209 = sbr.rel (%p206) target = $region12
    $region11: #{upsampl_forward.6} parent=5 // pred_region
      %s210 = ssub.s32 %s13, 1
      // Predicated region
      $region13: #{upsampl_forward.6} parent=11 // pred_check
        %p211 = pneg %p98
      $region14: #{upsampl_forward.6} parent=11 // pred_check_branch
        %213 = sbr.rel (%p211) target = $region16
      $region15: #{upsampl_forward.6} parent=11 // pred_region
        _
      $region16: #{upsampl_forward.6} parent=11 // pred_fallthru
        _
      // Predicated region
      $region17: #{upsampl_forward.6} parent=11 // pred_check
        %p214 = pneg %p119
      $region18: #{upsampl_forward.6} parent=11 // pred_check_branch
        %216 = sbr.rel (%p214) target = $region20
      $region19: #{upsampl_forward.6} parent=11 // pred_region
        _
      $region20: #{upsampl_forward.6} parent=11 // pred_fallthru
        _
      // Predicated region
      $region21: #{upsampl_forward.6} parent=11 // pred_check
        %p217 = pneg %p140
      $region22: #{upsampl_forward.6} parent=11 // pred_check_branch
        %219 = sbr.rel (%p217) target = $region24
      $region23: #{upsampl_forward.6} parent=11 // pred_region
        _
      $region24: #{upsampl_forward.6} parent=11 // pred_fallthru
        _
    $region12: #{upsampl_forward.6} parent=5 // pred_fallthru
      _
    %p220 = scmp.lt.s32.totalorder %s13, 4
    // Predicated region
    $region25: #{upsampl_forward.6} parent=5 // pred_check
      %p221 = pneg %p220
    $region26: #{upsampl_forward.6} parent=5 // pred_check_branch
      %223 = sbr.rel (%p221) target = $region28
    $region27: #{upsampl_forward.6} parent=5 // pred_region
      // Predicated region
      $region29: #{upsampl_forward.6} parent=27 // pred_check
        %p224 = pneg %p45
      $region30: #{upsampl_forward.6} parent=27 // pred_check_branch
        %226 = sbr.rel (%p224) target = $region32
      $region31: #{upsampl_forward.6} parent=27 // pred_region
        %p227 = scmp.lt.s32.totalorder %s20, 1
        %s228 = scalar_select %p227, %s20, 1
        %s229 = smul.addr %s228, 54
        %s230 = smul.addr %s229, 4
        %s231 = scalar_lea.vmem %s0, %s230
      $region32: #{upsampl_forward.6} parent=27 // pred_fallthru
        _
      // Predicated region
      $region33: #{upsampl_forward.6} parent=27 // pred_check
        %p232 = pneg %p71
      $region34: #{upsampl_forward.6} parent=27 // pred_check_branch
        %234 = sbr.rel (%p232) target = $region36
      $region35: #{upsampl_forward.6} parent=27 // pred_region
        %p235 = scmp.lt.s32.totalorder %s20, 1
        %s236 = scalar_select %p235, %s20, 1
        %s237 = smul.addr %s236, 54
        %s238 = smul.addr %s237, 4
        %s239 = scalar_lea.vmem %s1, %s238
      $region36: #{upsampl_forward.6} parent=27 // pred_fallthru
        _
    $region28: #{upsampl_forward.6} parent=5 // pred_fallthru
      _
    %p240 = scmp.le.s32.totalorder 1, %s13
    %p241 = scmp.lt.s32.totalorder %s13, 5
    %p242 = pnand %p240, %p241
    %p243 = pneg %p242
    // Predicated region
    $region37: #{upsampl_forward.6} parent=5 // pred_check
      _
    $region38: #{upsampl_forward.6} parent=5 // pred_check_branch
      %245 = sbr.rel (%p242) target = $region40
    $region39: #{upsampl_forward.6} parent=5 // pred_region
      %s246 = ssub.s32 %s13, 1
      %p247 = scmp.lt.s32.totalorder %s22, 1
      %s248 = scalar_select %p247, %s22, 1
      %s249 = smul.addr %s248, 54
      %s250 = smul.addr %s249, 4
      %s251 = scalar_lea.vmem %s0, %s250
      %p252 = pneg %p51
      %p253 = pneg %p48
      %p254 = scmp.lt.s32.totalorder %s22, 1
      %s255 = scalar_select %p254, %s22, 1
      %s256 = smul.addr %s255, 54
      %s257 = smul.addr %s256, 4
      %s258 = scalar_lea.vmem %s1, %s257
      %p259 = pneg %p77
      %p260 = pneg %p74
      %p261 = pneg %p98
      %p262 = pneg %p95
      %p263 = pneg %p119
      %p264 = pneg %p116
      %p265 = pneg %p140
      %p266 = pneg %p137
      %p267 = pneg %p168
      %p268 = pneg %p165
      %s269 = smul.u32 8, %s23
      %p270 = scmp.lt.s32.totalorder %s22, 1
      %s271 = scalar_select %p270, %s22, 1
      %p272 = scmp.lt.s32.totalorder %s269, 15
      %s273 = scalar_select %p272, %s269, 15
      %s274 = smul.addr %s273, 2
      %s275 = smul.addr %s271, 32
      %s276 = sadd.s32 %s274, %s275
      %s277 = smul.addr %s276, 8
      %s278 = scalar_lea.vmem %s5, %s277
      %p279 = pneg %p196
      %p280 = pneg %p193
      %p281 = scmp.lt.s32.totalorder %s22, 1
      %s282 = scalar_select %p281, %s22, 1
      %p283 = scmp.lt.s32.totalorder %s23, 1
      %s284 = scalar_select %p283, %s23, 1
      %s285 = smul.addr %s282, 2
      %s286 = sadd.s32 %s284, %s285
      %s287 = smul.addr %s286, 2
      %s288 = scalar_lea.vmem %s6, %s287
      %p289 = scmp.lt.s32.totalorder %s22, 1
      %s290 = scalar_select %p289, %s22, 1
      %s291 = smul.addr %s290, 54
      %s292 = smul.addr %s291, 4
      %s293 = scalar_lea.vmem %s0, %s292
      %p294 = scmp.lt.s32.totalorder %s22, 1
      %s295 = scalar_select %p294, %s22, 1
      %s296 = smul.addr %s295, 54
      %s297 = smul.addr %s296, 4
      %s298 = scalar_lea.vmem %s1, %s297
      %s299 = smul.u32 8, %s23
      %p300 = scmp.lt.s32.totalorder %s22, 1
      %s301 = scalar_select %p300, %s22, 1
      %p302 = scmp.lt.s32.totalorder %s299, 15
      %s303 = scalar_select %p302, %s299, 15
      %s304 = smul.addr %s303, 2
      %s305 = smul.addr %s301, 32
      %s306 = sadd.s32 %s304, %s305
      %s307 = smul.addr %s306, 8
      %s308 = scalar_lea.vmem %s5, %s307
      %s309 = smul.u32 8, %s23
      %p310 = scmp.lt.s32.totalorder %s22, 1
      %s311 = scalar_select %p310, %s22, 1
      %p312 = scmp.lt.s32.totalorder %s23, 1
      %s313 = scalar_select %p312, %s23, 1
      %s314 = smul.addr %s311, 2
      %s315 = sadd.s32 %s313, %s314
      %s316 = smul.addr %s315, 2
      %s317 = scalar_lea.vmem %s6, %s316
      %s319 = smul.u32 %s23, 8
      %s320 = smul.u32 %s319, 3
      %s321 = smul.addr %s320, 4
      %s322 = scalar_lea.vmem %s293, %s321
      %v323 = vld [vmem:[%s322] sm:$0xf]
      %v324 = vld [vmem:[%s322 + $0x4] sm:$0xf]
      %v325 = vld [vmem:[%s322 + $0x8] sm:$0x1]
      %v326 = vld [vmem:[%s322 + $0xc] sm:$0xf]
      %v327 = vld [vmem:[%s322 + $0x10] sm:$0xf]
      %v328 = vld [vmem:[%s322 + $0x14] sm:$0x1]
      %v329 = vld [vmem:[%s322 + $0x18] sm:$0xf]
      %v330 = vld [vmem:[%s322 + $0x1c] sm:$0xf]
      %v331 = vld [vmem:[%s322 + $0x20] sm:$0x1]
      %v332 = vld [vmem:[%s322 + $0x24] sm:$0xf]
      %v333 = vld [vmem:[%s322 + $0x28] sm:$0xf]
      %v334 = vld [vmem:[%s322 + $0x2c] sm:$0x1]
      %v335 = vld [vmem:[%s322 + $0x30] sm:$0xf]
      %v336 = vld [vmem:[%s322 + $0x34] sm:$0xf]
      %v337 = vld [vmem:[%s322 + $0x38] sm:$0x1]
      %v338 = vld [vmem:[%s322 + $0x3c] sm:$0xf]
      %v339 = vld [vmem:[%s322 + $0x40] sm:$0xf]
      %v340 = vld [vmem:[%s322 + $0x44] sm:$0x1]
      %v341 = vld [vmem:[%s322 + $0x48] sm:$0xf]
      %v342 = vld [vmem:[%s322 + $0x4c] sm:$0xf]
      %v343 = vld [vmem:[%s322 + $0x50] sm:$0x1]
      %v344 = vld [vmem:[%s322 + $0x54] sm:$0xf]
      %v345 = vld [vmem:[%s322 + $0x58] sm:$0xf]
      %v346 = vld [vmem:[%s322 + $0x5c] sm:$0x1]
      %v347 = vld [vmem:[%s322 + $0x60] sm:$0xf]
      %v348 = vld [vmem:[%s322 + $0x64] sm:$0xf]
      %v349 = vld [vmem:[%s322 + $0x68] sm:$0x1]
      %v350 = vld [vmem:[%s322 + $0x6c] sm:$0xf]
      %v351 = vld [vmem:[%s322 + $0x70] sm:$0xf]
      %v352 = vld [vmem:[%s322 + $0x74] sm:$0x1]
      %v369 = vunpack.c.l.b16 %v323
      %v370 = vunpack.c.l.b16 %v324
      %v371 = vunpack.c.l.b16 %v326
      %v372 = vunpack.c.l.b16 %v327
      %v373 = vunpack.c.l.b16 %v329
      %v374 = vunpack.c.l.b16 %v330
      %v375 = vunpack.c.l.b16 %v332
      %v376 = vunpack.c.l.b16 %v333
      %v377 = vunpack.c.l.b16 %v335
      %v378 = vunpack.c.l.b16 %v336
      %v379 = vunpack.c.l.b16 %v338
      %v380 = vunpack.c.l.b16 %v339
      %v381 = vunpack.c.l.b16 %v341
      %v382 = vunpack.c.l.b16 %v342
      %v383 = vunpack.c.l.b16 %v344
      %v384 = vunpack.c.l.b16 %v345
      %v385 = vpack.c.b16 %v370, %v369
      %v386 = vpack.c.b16 %v372, %v371
      %v387 = vpack.c.b16 %v374, %v373
      %v388 = vpack.c.b16 %v376, %v375
      %v389 = vpack.c.b16 %v378, %v377
      %v390 = vpack.c.b16 %v380, %v379
      %v391 = vpack.c.b16 %v382, %v381
      %v392 = vpack.c.b16 %v384, %v383
      %v401 = vunpack.c.l.b16 %v325
      %v402 = vunpack.c.l.b16 %v328
      %v403 = vunpack.c.l.b16 %v331
      %v404 = vunpack.c.l.b16 %v334
      %v405 = vunpack.c.l.b16 %v337
      %v406 = vunpack.c.l.b16 %v340
      %v407 = vunpack.c.l.b16 %v343
      %v408 = vunpack.c.l.b16 %v346
      %v409 = vpack.c.b16 %v401, %v401
      %v410 = vpack.c.b16 %v402, %v402
      %v411 = vpack.c.b16 %v403, %v403
      %v412 = vpack.c.b16 %v404, %v404
      %v413 = vpack.c.b16 %v405, %v405
      %v414 = vpack.c.b16 %v406, %v406
      %v415 = vpack.c.b16 %v407, %v407
      %v416 = vpack.c.b16 %v408, %v408
      %vm417 = vsmask.f32 7424
      %v419 = vshrl.u32 %v385, 16
      %v421 = vshll.u32 %v385, 16
      %v423 = vrot.slane %v421, 1
      %v424 = vor.u32 %v419, %v423
      %v426 = vshll.u32 %v409, 16
      %v428 = vrot.slane %v426, 1
      %v429 = vsel %vm417, %v424, %v428
      %v431 = vshrl.u32 %v386, 16
      %v433 = vshll.u32 %v386, 16
      %v435 = vrot.slane %v433, 1
      %v436 = vor.u32 %v431, %v435
      %v438 = vshll.u32 %v410, 16
      %v440 = vrot.slane %v438, 1
      %v441 = vsel %vm417, %v436, %v440
      %v443 = vshrl.u32 %v387, 16
      %v445 = vshll.u32 %v387, 16
      %v447 = vrot.slane %v445, 1
      %v448 = vor.u32 %v443, %v447
      %v450 = vshll.u32 %v411, 16
      %v452 = vrot.slane %v450, 1
      %v453 = vsel %vm417, %v448, %v452
      %v455 = vshrl.u32 %v388, 16
      %v457 = vshll.u32 %v388, 16
      %v459 = vrot.slane %v457, 1
      %v460 = vor.u32 %v455, %v459
      %v462 = vshll.u32 %v412, 16
      %v464 = vrot.slane %v462, 1
      %v465 = vsel %vm417, %v460, %v464
      %v467 = vshrl.u32 %v389, 16
      %v469 = vshll.u32 %v389, 16
      %v471 = vrot.slane %v469, 1
      %v472 = vor.u32 %v467, %v471
      %v474 = vshll.u32 %v413, 16
      %v476 = vrot.slane %v474, 1
      %v477 = vsel %vm417, %v472, %v476
      %v479 = vshrl.u32 %v390, 16
      %v481 = vshll.u32 %v390, 16
      %v483 = vrot.slane %v481, 1
      %v484 = vor.u32 %v479, %v483
      %v486 = vshll.u32 %v414, 16
      %v488 = vrot.slane %v486, 1
      %v489 = vsel %vm417, %v484, %v488
      %v491 = vshrl.u32 %v391, 16
      %v493 = vshll.u32 %v391, 16
      %v495 = vrot.slane %v493, 1
      %v496 = vor.u32 %v491, %v495
      %v498 = vshll.u32 %v415, 16
      %v500 = vrot.slane %v498, 1
      %v501 = vsel %vm417, %v496, %v500
      %v503 = vshrl.u32 %v392, 16
      %v505 = vshll.u32 %v392, 16
      %v507 = vrot.slane %v505, 1
      %v508 = vor.u32 %v503, %v507
      %v510 = vshll.u32 %v416, 16
      %v512 = vrot.slane %v510, 1
      %v513 = vsel %vm417, %v508, %v512
      %514 = vrot.lane.b32.xlu0 %v429, 4
      %v515 = vpop.permute.xlu0 %514
      %516 = vrot.lane.b32.xlu0 %v441, 4
      %v517 = vpop.permute.xlu0 %516
      %518 = vrot.lane.b32.xlu0 %v453, 4
      %v519 = vpop.permute.xlu0 %518
      %520 = vrot.lane.b32.xlu0 %v465, 4
      %v521 = vpop.permute.xlu0 %520
      %522 = vrot.lane.b32.xlu0 %v477, 4
      %v523 = vpop.permute.xlu0 %522
      %524 = vrot.lane.b32.xlu0 %v489, 4
      %v525 = vpop.permute.xlu0 %524
      %526 = vrot.lane.b32.xlu0 %v501, 4
      %v527 = vpop.permute.xlu0 %526
      %528 = vrot.lane.b32.xlu0 %v513, 4
      %v529 = vpop.permute.xlu0 %528
      %vm530 = vcmask 1046528
      %v531 = vrot.slane %v385, 1
      %v532 = vrot.slane %v409, 1
      %v533 = vsel %vm530, %v531, %v532
      %v534 = vrot.slane %v386, 1
      %v535 = vrot.slane %v410, 1
      %v536 = vsel %vm530, %v534, %v535
      %v537 = vrot.slane %v387, 1
      %v538 = vrot.slane %v411, 1
      %v539 = vsel %vm530, %v537, %v538
      %v540 = vrot.slane %v388, 1
      %v541 = vrot.slane %v412, 1
      %v542 = vsel %vm530, %v540, %v541
      %v543 = vrot.slane %v389, 1
      %v544 = vrot.slane %v413, 1
      %v545 = vsel %vm530, %v543, %v544
      %v546 = vrot.slane %v390, 1
      %v547 = vrot.slane %v414, 1
      %v548 = vsel %vm530, %v546, %v547
      %v549 = vrot.slane %v391, 1
      %v550 = vrot.slane %v415, 1
      %v551 = vsel %vm530, %v549, %v550
      %v552 = vrot.slane %v392, 1
      %v553 = vrot.slane %v416, 1
      %v554 = vsel %vm530, %v552, %v553
      %555 = vrot.lane.b32.xlu0 %v533, 8
      %v556 = vpop.permute.xlu0 %555
      %557 = vrot.lane.b32.xlu0 %v536, 8
      %v558 = vpop.permute.xlu0 %557
      %559 = vrot.lane.b32.xlu0 %v539, 8
      %v560 = vpop.permute.xlu0 %559
      %561 = vrot.lane.b32.xlu0 %v542, 8
      %v562 = vpop.permute.xlu0 %561
      %563 = vrot.lane.b32.xlu0 %v545, 8
      %v564 = vpop.permute.xlu0 %563
      %565 = vrot.lane.b32.xlu0 %v548, 8
      %v566 = vpop.permute.xlu0 %565
      %567 = vrot.lane.b32.xlu0 %v551, 8
      %v568 = vpop.permute.xlu0 %567
      %569 = vrot.lane.b32.xlu0 %v554, 8
      %v570 = vpop.permute.xlu0 %569
      %v573 = vunpack.c.l.b16 %v347
      %v574 = vunpack.c.l.b16 %v348
      %v575 = vpack.c.b16 %v574, %v573
      %576 = vrot.lane.b32.xlu0 %v386, 12
      %v577 = vpop.permute.xlu0 %576
      %578 = vrot.lane.b32.xlu0 %v387, 12
      %v579 = vpop.permute.xlu0 %578
      %580 = vrot.lane.b32.xlu0 %v388, 12
      %v581 = vpop.permute.xlu0 %580
      %582 = vrot.lane.b32.xlu0 %v389, 12
      %v583 = vpop.permute.xlu0 %582
      %584 = vrot.lane.b32.xlu0 %v390, 12
      %v585 = vpop.permute.xlu0 %584
      %586 = vrot.lane.b32.xlu0 %v391, 12
      %v587 = vpop.permute.xlu0 %586
      %588 = vrot.lane.b32.xlu0 %v392, 12
      %v589 = vpop.permute.xlu0 %588
      %590 = vrot.lane.b32.xlu0 %v575, 12
      %v591 = vpop.permute.xlu0 %590
      %v593 = vunpack.c.l.b16 %v349
      %v594 = vpack.c.b16 %v593, %v593
      %v596 = vshrl.u32 %v575, 16
      %v598 = vshll.u32 %v575, 16
      %v600 = vrot.slane %v598, 1
      %v601 = vor.u32 %v596, %v600
      %v603 = vshll.u32 %v594, 16
      %v605 = vrot.slane %v603, 1
      %v606 = vsel %vm417, %v601, %v605
      %607 = vrot.lane.b32.xlu0 %v441, 16
      %v608 = vpop.permute.xlu0 %607
      %609 = vrot.lane.b32.xlu0 %v453, 16
      %v610 = vpop.permute.xlu0 %609
      %611 = vrot.lane.b32.xlu0 %v465, 16
      %v612 = vpop.permute.xlu0 %611
      %613 = vrot.lane.b32.xlu0 %v477, 16
      %v614 = vpop.permute.xlu0 %613
      %615 = vrot.lane.b32.xlu0 %v489, 16
      %v616 = vpop.permute.xlu0 %615
      %617 = vrot.lane.b32.xlu0 %v501, 16
      %v618 = vpop.permute.xlu0 %617
      %619 = vrot.lane.b32.xlu0 %v513, 16
      %v620 = vpop.permute.xlu0 %619
      %621 = vrot.lane.b32.xlu0 %v606, 16
      %v622 = vpop.permute.xlu0 %621
      %v623 = vrot.slane %v575, 1
      %v624 = vrot.slane %v594, 1
      %v625 = vsel %vm530, %v623, %v624
      %626 = vrot.lane.b32.xlu0 %v536, 20
      %v627 = vpop.permute.xlu0 %626
      %628 = vrot.lane.b32.xlu0 %v539, 20
      %v629 = vpop.permute.xlu0 %628
      %630 = vrot.lane.b32.xlu0 %v542, 20
      %v631 = vpop.permute.xlu0 %630
      %632 = vrot.lane.b32.xlu0 %v545, 20
      %v633 = vpop.permute.xlu0 %632
      %634 = vrot.lane.b32.xlu0 %v548, 20
      %v635 = vpop.permute.xlu0 %634
      %636 = vrot.lane.b32.xlu0 %v551, 20
      %v637 = vpop.permute.xlu0 %636
      %638 = vrot.lane.b32.xlu0 %v554, 20
      %v639 = vpop.permute.xlu0 %638
      %640 = vrot.lane.b32.xlu0 %v625, 20
      %v641 = vpop.permute.xlu0 %640
      %v644 = vunpack.c.l.b16 %v350
      %v645 = vunpack.c.l.b16 %v351
      %v646 = vpack.c.b16 %v645, %v644
      %647 = vrot.lane.b32.xlu0 %v387, 24
      %v648 = vpop.permute.xlu0 %647
      %649 = vrot.lane.b32.xlu0 %v388, 24
      %v650 = vpop.permute.xlu0 %649
      %651 = vrot.lane.b32.xlu0 %v389, 24
      %v652 = vpop.permute.xlu0 %651
      %653 = vrot.lane.b32.xlu0 %v390, 24
      %v654 = vpop.permute.xlu0 %653
      %655 = vrot.lane.b32.xlu0 %v391, 24
      %v656 = vpop.permute.xlu0 %655
      %657 = vrot.lane.b32.xlu0 %v392, 24
      %v658 = vpop.permute.xlu0 %657
      %659 = vrot.lane.b32.xlu0 %v575, 24
      %v660 = vpop.permute.xlu0 %659
      %661 = vrot.lane.b32.xlu0 %v646, 24
      %v662 = vpop.permute.xlu0 %661
      %v664 = vunpack.c.l.b16 %v352
      %v665 = vpack.c.b16 %v664, %v664
      %v667 = vshrl.u32 %v646, 16
      %v669 = vshll.u32 %v646, 16
      %v671 = vrot.slane %v669, 1
      %v672 = vor.u32 %v667, %v671
      %v674 = vshll.u32 %v665, 16
      %v676 = vrot.slane %v674, 1
      %v677 = vsel %vm417, %v672, %v676
      %678 = vrot.lane.b32.xlu0 %v453, 28
      %v679 = vpop.permute.xlu0 %678
      %680 = vrot.lane.b32.xlu0 %v465, 28
      %v681 = vpop.permute.xlu0 %680
      %682 = vrot.lane.b32.xlu0 %v477, 28
      %v683 = vpop.permute.xlu0 %682
      %684 = vrot.lane.b32.xlu0 %v489, 28
      %v685 = vpop.permute.xlu0 %684
      %686 = vrot.lane.b32.xlu0 %v501, 28
      %v687 = vpop.permute.xlu0 %686
      %688 = vrot.lane.b32.xlu0 %v513, 28
      %v689 = vpop.permute.xlu0 %688
      %690 = vrot.lane.b32.xlu0 %v606, 28
      %v691 = vpop.permute.xlu0 %690
      %692 = vrot.lane.b32.xlu0 %v677, 28
      %v693 = vpop.permute.xlu0 %692
      %v694 = vrot.slane %v646, 1
      %v695 = vrot.slane %v665, 1
      %v696 = vsel %vm530, %v694, %v695
      %697 = vrot.lane.b32.xlu0 %v539, 32
      %v698 = vpop.permute.xlu0 %697
      %699 = vrot.lane.b32.xlu0 %v542, 32
      %v700 = vpop.permute.xlu0 %699
      %701 = vrot.lane.b32.xlu0 %v545, 32
      %v702 = vpop.permute.xlu0 %701
      %703 = vrot.lane.b32.xlu0 %v548, 32
      %v704 = vpop.permute.xlu0 %703
      %705 = vrot.lane.b32.xlu0 %v551, 32
      %v706 = vpop.permute.xlu0 %705
      %707 = vrot.lane.b32.xlu0 %v554, 32
      %v708 = vpop.permute.xlu0 %707
      %709 = vrot.lane.b32.xlu0 %v625, 32
      %v710 = vpop.permute.xlu0 %709
      %711 = vrot.lane.b32.xlu0 %v696, 32
      %v712 = vpop.permute.xlu0 %711
      %vm713 = vcmask 31744
      %v715 = vsel %vm713, %v385, %v515
      %v717 = vsel %vm713, %v386, %v517
      %v719 = vsel %vm713, %v387, %v519
      %v721 = vsel %vm713, %v388, %v521
      %v723 = vsel %vm713, %v389, %v523
      %v725 = vsel %vm713, %v390, %v525
      %v727 = vsel %vm713, %v391, %v527
      %v729 = vsel %vm713, %v392, %v529
      %vm730 = vcmask 64512
      %v732 = vsel %vm730, %v715, %v556
      %v734 = vsel %vm730, %v717, %v558
      %v736 = vsel %vm730, %v719, %v560
      %v738 = vsel %vm730, %v721, %v562
      %v740 = vsel %vm730, %v723, %v564
      %v742 = vsel %vm730, %v725, %v566
      %v744 = vsel %vm730, %v727, %v568
      %v746 = vsel %vm730, %v729, %v570
      %vm747 = vcmask 97280
      %v749 = vsel %vm747, %v732, %v577
      %v751 = vsel %vm747, %v734, %v579
      %v753 = vsel %vm747, %v736, %v581
      %v755 = vsel %vm747, %v738, %v583
      %v757 = vsel %vm747, %v740, %v585
      %v759 = vsel %vm747, %v742, %v587
      %v761 = vsel %vm747, %v744, %v589
      %v763 = vsel %vm747, %v746, %v591
      %vm764 = vcmask 130048
      %v766 = vsel %vm764, %v749, %v608
      %v768 = vsel %vm764, %v751, %v610
      %v770 = vsel %vm764, %v753, %v612
      %v772 = vsel %vm764, %v755, %v614
      %v774 = vsel %vm764, %v757, %v616
      %v776 = vsel %vm764, %v759, %v618
      %v778 = vsel %vm764, %v761, %v620
      %v780 = vsel %vm764, %v763, %v622
      %vm781 = vcmask 162816
      %v783 = vsel %vm781, %v766, %v627
      %v785 = vsel %vm781, %v768, %v629
      %v787 = vsel %vm781, %v770, %v631
      %v789 = vsel %vm781, %v772, %v633
      %v791 = vsel %vm781, %v774, %v635
      %v793 = vsel %vm781, %v776, %v637
      %v795 = vsel %vm781, %v778, %v639
      %v797 = vsel %vm781, %v780, %v641
      %vm798 = vcmask 195584
      %v800 = vsel %vm798, %v783, %v648
      %v802 = vsel %vm798, %v785, %v650
      %v804 = vsel %vm798, %v787, %v652
      %v806 = vsel %vm798, %v789, %v654
      %v808 = vsel %vm798, %v791, %v656
      %v810 = vsel %vm798, %v793, %v658
      %v812 = vsel %vm798, %v795, %v660
      %v814 = vsel %vm798, %v797, %v662
      %vm815 = vcmask 228352
      %v817 = vsel %vm815, %v800, %v679
      %v819 = vsel %vm815, %v802, %v681
      %v821 = vsel %vm815, %v804, %v683
      %v823 = vsel %vm815, %v806, %v685
      %v825 = vsel %vm815, %v808, %v687
      %v827 = vsel %vm815, %v810, %v689
      %v829 = vsel %vm815, %v812, %v691
      %v831 = vsel %vm815, %v814, %v693
      %vm832 = vcmask 261120
      %v834 = vsel %vm832, %v817, %v698
      %v836 = vsel %vm832, %v819, %v700
      %v838 = vsel %vm832, %v821, %v702
      %v840 = vsel %vm832, %v823, %v704
      %v842 = vsel %vm832, %v825, %v706
      %v844 = vsel %vm832, %v827, %v708
      %v846 = vsel %vm832, %v829, %v710
      %v848 = vsel %vm832, %v831, %v712
      %v849 = vld [vmem:[%s2] sm:$0xf]
      %v850 = vld [vmem:[%s2 + $0x4] sm:$0xf]
      %v851 = vld [vmem:[%s2 + $0x8] sm:$0xf]
      %v852 = vld [vmem:[%s2 + $0xc] sm:$0xf]
      %v853 = vld [vmem:[%s2 + $0x10] sm:$0x3]
      %s854 = smul.addr %s320, 4
      %s855 = scalar_lea.vmem %s298, %s854
      %v856 = vld [vmem:[%s855] sm:$0xf]
      %v857 = vld [vmem:[%s855 + $0x4] sm:$0xf]
      %v858 = vld [vmem:[%s855 + $0x8] sm:$0x1]
      %v859 = vld [vmem:[%s855 + $0xc] sm:$0xf]
      %v860 = vld [vmem:[%s855 + $0x10] sm:$0xf]
      %v861 = vld [vmem:[%s855 + $0x14] sm:$0x1]
      %v862 = vld [vmem:[%s855 + $0x18] sm:$0xf]
      %v863 = vld [vmem:[%s855 + $0x1c] sm:$0xf]
      %v864 = vld [vmem:[%s855 + $0x20] sm:$0x1]
      %v865 = vld [vmem:[%s855 + $0x24] sm:$0xf]
      %v866 = vld [vmem:[%s855 + $0x28] sm:$0xf]
      %v867 = vld [vmem:[%s855 + $0x2c] sm:$0x1]
      %v868 = vld [vmem:[%s855 + $0x30] sm:$0xf]
      %v869 = vld [vmem:[%s855 + $0x34] sm:$0xf]
      %v870 = vld [vmem:[%s855 + $0x38] sm:$0x1]
      %v871 = vld [vmem:[%s855 + $0x3c] sm:$0xf]
      %v872 = vld [vmem:[%s855 + $0x40] sm:$0xf]
      %v873 = vld [vmem:[%s855 + $0x44] sm:$0x1]
      %v874 = vld [vmem:[%s855 + $0x48] sm:$0xf]
      %v875 = vld [vmem:[%s855 + $0x4c] sm:$0xf]
      %v876 = vld [vmem:[%s855 + $0x50] sm:$0x1]
      %v877 = vld [vmem:[%s855 + $0x54] sm:$0xf]
      %v878 = vld [vmem:[%s855 + $0x58] sm:$0xf]
      %v879 = vld [vmem:[%s855 + $0x5c] sm:$0x1]
      %v880 = vld [vmem:[%s855 + $0x60] sm:$0xf]
      %v881 = vld [vmem:[%s855 + $0x64] sm:$0xf]
      %v882 = vld [vmem:[%s855 + $0x68] sm:$0x1]
      %v883 = vld [vmem:[%s855 + $0x6c] sm:$0xf]
      %v884 = vld [vmem:[%s855 + $0x70] sm:$0xf]
      %v885 = vld [vmem:[%s855 + $0x74] sm:$0x1]
      %v902 = vunpack.c.l.b16 %v856
      %v903 = vunpack.c.l.b16 %v857
      %v904 = vunpack.c.l.b16 %v859
      %v905 = vunpack.c.l.b16 %v860
      %v906 = vunpack.c.l.b16 %v862
      %v907 = vunpack.c.l.b16 %v863
      %v908 = vunpack.c.l.b16 %v865
      %v909 = vunpack.c.l.b16 %v866
      %v910 = vunpack.c.l.b16 %v868
      %v911 = vunpack.c.l.b16 %v869
      %v912 = vunpack.c.l.b16 %v871
      %v913 = vunpack.c.l.b16 %v872
      %v914 = vunpack.c.l.b16 %v874
      %v915 = vunpack.c.l.b16 %v875
      %v916 = vunpack.c.l.b16 %v877
      %v917 = vunpack.c.l.b16 %v878
      %v918 = vpack.c.b16 %v903, %v902
      %v919 = vpack.c.b16 %v905, %v904
      %v920 = vpack.c.b16 %v907, %v906
      %v921 = vpack.c.b16 %v909, %v908
      %v922 = vpack.c.b16 %v911, %v910
      %v923 = vpack.c.b16 %v913, %v912
      %v924 = vpack.c.b16 %v915, %v914
      %v925 = vpack.c.b16 %v917, %v916
      %v934 = vunpack.c.l.b16 %v858
      %v935 = vunpack.c.l.b16 %v861
      %v936 = vunpack.c.l.b16 %v864
      %v937 = vunpack.c.l.b16 %v867
      %v938 = vunpack.c.l.b16 %v870
      %v939 = vunpack.c.l.b16 %v873
      %v940 = vunpack.c.l.b16 %v876
      %v941 = vunpack.c.l.b16 %v879
      %v942 = vpack.c.b16 %v934, %v934
      %v943 = vpack.c.b16 %v935, %v935
      %v944 = vpack.c.b16 %v936, %v936
      %v945 = vpack.c.b16 %v937, %v937
      %v946 = vpack.c.b16 %v938, %v938
      %v947 = vpack.c.b16 %v939, %v939
      %v948 = vpack.c.b16 %v940, %v940
      %v949 = vpack.c.b16 %v941, %v941
      %v951 = vshrl.u32 %v918, 16
      %v953 = vshll.u32 %v918, 16
      %v955 = vrot.slane %v953, 1
      %v956 = vor.u32 %v951, %v955
      %v958 = vshll.u32 %v942, 16
      %v960 = vrot.slane %v958, 1
      %v961 = vsel %vm417, %v956, %v960
      %v963 = vshrl.u32 %v919, 16
      %v965 = vshll.u32 %v919, 16
      %v967 = vrot.slane %v965, 1
      %v968 = vor.u32 %v963, %v967
      %v970 = vshll.u32 %v943, 16
      %v972 = vrot.slane %v970, 1
      %v973 = vsel %vm417, %v968, %v972
      %v975 = vshrl.u32 %v920, 16
      %v977 = vshll.u32 %v920, 16
      %v979 = vrot.slane %v977, 1
      %v980 = vor.u32 %v975, %v979
      %v982 = vshll.u32 %v944, 16
      %v984 = vrot.slane %v982, 1
      %v985 = vsel %vm417, %v980, %v984
      %v987 = vshrl.u32 %v921, 16
      %v989 = vshll.u32 %v921, 16
      %v991 = vrot.slane %v989, 1
      %v992 = vor.u32 %v987, %v991
      %v994 = vshll.u32 %v945, 16
      %v996 = vrot.slane %v994, 1
      %v997 = vsel %vm417, %v992, %v996
      %v999 = vshrl.u32 %v922, 16
      %v1001 = vshll.u32 %v922, 16
      %v1003 = vrot.slane %v1001, 1
      %v1004 = vor.u32 %v999, %v1003
      %v1006 = vshll.u32 %v946, 16
      %v1008 = vrot.slane %v1006, 1
      %v1009 = vsel %vm417, %v1004, %v1008
      %v1011 = vshrl.u32 %v923, 16
      %v1013 = vshll.u32 %v923, 16
      %v1015 = vrot.slane %v1013, 1
      %v1016 = vor.u32 %v1011, %v1015
      %v1018 = vshll.u32 %v947, 16
      %v1020 = vrot.slane %v1018, 1
      %v1021 = vsel %vm417, %v1016, %v1020
      %v1023 = vshrl.u32 %v924, 16
      %v1025 = vshll.u32 %v924, 16
      %v1027 = vrot.slane %v1025, 1
      %v1028 = vor.u32 %v1023, %v1027
      %v1030 = vshll.u32 %v948, 16
      %v1032 = vrot.slane %v1030, 1
      %v1033 = vsel %vm417, %v1028, %v1032
      %v1035 = vshrl.u32 %v925, 16
      %v1037 = vshll.u32 %v925, 16
      %v1039 = vrot.slane %v1037, 1
      %v1040 = vor.u32 %v1035, %v1039
      %v1042 = vshll.u32 %v949, 16
      %v1044 = vrot.slane %v1042, 1
      %v1045 = vsel %vm417, %v1040, %v1044
      %1046 = vrot.lane.b32.xlu0 %v961, 4
      %v1047 = vpop.permute.xlu0 %1046
      %1048 = vrot.lane.b32.xlu0 %v973, 4
      %v1049 = vpop.permute.xlu0 %1048
      %1050 = vrot.lane.b32.xlu0 %v985, 4
      %v1051 = vpop.permute.xlu0 %1050
      %1052 = vrot.lane.b32.xlu0 %v997, 4
      %v1053 = vpop.permute.xlu0 %1052
      %1054 = vrot.lane.b32.xlu0 %v1009, 4
      %v1055 = vpop.permute.xlu0 %1054
      %1056 = vrot.lane.b32.xlu0 %v1021, 4
      %v1057 = vpop.permute.xlu0 %1056
      %1058 = vrot.lane.b32.xlu0 %v1033, 4
      %v1059 = vpop.permute.xlu0 %1058
      %1060 = vrot.lane.b32.xlu0 %v1045, 4
      %v1061 = vpop.permute.xlu0 %1060
      %v1062 = vrot.slane %v918, 1
      %v1063 = vrot.slane %v942, 1
      %v1064 = vsel %vm530, %v1062, %v1063
      %v1065 = vrot.slane %v919, 1
      %v1066 = vrot.slane %v943, 1
      %v1067 = vsel %vm530, %v1065, %v1066
      %v1068 = vrot.slane %v920, 1
      %v1069 = vrot.slane %v944, 1
      %v1070 = vsel %vm530, %v1068, %v1069
      %v1071 = vrot.slane %v921, 1
      %v1072 = vrot.slane %v945, 1
      %v1073 = vsel %vm530, %v1071, %v1072
      %v1074 = vrot.slane %v922, 1
      %v1075 = vrot.slane %v946, 1
      %v1076 = vsel %vm530, %v1074, %v1075
      %v1077 = vrot.slane %v923, 1
      %v1078 = vrot.slane %v947, 1
      %v1079 = vsel %vm530, %v1077, %v1078
      %v1080 = vrot.slane %v924, 1
      %v1081 = vrot.slane %v948, 1
      %v1082 = vsel %vm530, %v1080, %v1081
      %v1083 = vrot.slane %v925, 1
      %v1084 = vrot.slane %v949, 1
      %v1085 = vsel %vm530, %v1083, %v1084
      %1086 = vrot.lane.b32.xlu0 %v1064, 8
      %v1087 = vpop.permute.xlu0 %1086
      %1088 = vrot.lane.b32.xlu0 %v1067, 8
      %v1089 = vpop.permute.xlu0 %1088
      %1090 = vrot.lane.b32.xlu0 %v1070, 8
      %v1091 = vpop.permute.xlu0 %1090
      %1092 = vrot.lane.b32.xlu0 %v1073, 8
      %v1093 = vpop.permute.xlu0 %1092
      %1094 = vrot.lane.b32.xlu0 %v1076, 8
      %v1095 = vpop.permute.xlu0 %1094
      %1096 = vrot.lane.b32.xlu0 %v1079, 8
      %v1097 = vpop.permute.xlu0 %1096
      %1098 = vrot.lane.b32.xlu0 %v1082, 8
      %v1099 = vpop.permute.xlu0 %1098
      %1100 = vrot.lane.b32.xlu0 %v1085, 8
      %v1101 = vpop.permute.xlu0 %1100
      %v1104 = vunpack.c.l.b16 %v880
      %v1105 = vunpack.c.l.b16 %v881
      %v1106 = vpack.c.b16 %v1105, %v1104
      %1107 = vrot.lane.b32.xlu0 %v919, 12
      %v1108 = vpop.permute.xlu0 %1107
      %1109 = vrot.lane.b32.xlu0 %v920, 12
      %v1110 = vpop.permute.xlu0 %1109
      %1111 = vrot.lane.b32.xlu0 %v921, 12
      %v1112 = vpop.permute.xlu0 %1111
      %1113 = vrot.lane.b32.xlu0 %v922, 12
      %v1114 = vpop.permute.xlu0 %1113
      %1115 = vrot.lane.b32.xlu0 %v923, 12
      %v1116 = vpop.permute.xlu0 %1115
      %1117 = vrot.lane.b32.xlu0 %v924, 12
      %v1118 = vpop.permute.xlu0 %1117
      %1119 = vrot.lane.b32.xlu0 %v925, 12
      %v1120 = vpop.permute.xlu0 %1119
      %1121 = vrot.lane.b32.xlu0 %v1106, 12
      %v1122 = vpop.permute.xlu0 %1121
      %v1124 = vunpack.c.l.b16 %v882
      %v1125 = vpack.c.b16 %v1124, %v1124
      %v1127 = vshrl.u32 %v1106, 16
      %v1129 = vshll.u32 %v1106, 16
      %v1131 = vrot.slane %v1129, 1
      %v1132 = vor.u32 %v1127, %v1131
      %v1134 = vshll.u32 %v1125, 16
      %v1136 = vrot.slane %v1134, 1
      %v1137 = vsel %vm417, %v1132, %v1136
      %1138 = vrot.lane.b32.xlu0 %v973, 16
      %v1139 = vpop.permute.xlu0 %1138
      %1140 = vrot.lane.b32.xlu0 %v985, 16
      %v1141 = vpop.permute.xlu0 %1140
      %1142 = vrot.lane.b32.xlu0 %v997, 16
      %v1143 = vpop.permute.xlu0 %1142
      %1144 = vrot.lane.b32.xlu0 %v1009, 16
      %v1145 = vpop.permute.xlu0 %1144
      %1146 = vrot.lane.b32.xlu0 %v1021, 16
      %v1147 = vpop.permute.xlu0 %1146
      %1148 = vrot.lane.b32.xlu0 %v1033, 16
      %v1149 = vpop.permute.xlu0 %1148
      %1150 = vrot.lane.b32.xlu0 %v1045, 16
      %v1151 = vpop.permute.xlu0 %1150
      %1152 = vrot.lane.b32.xlu0 %v1137, 16
      %v1153 = vpop.permute.xlu0 %1152
      %v1154 = vrot.slane %v1106, 1
      %v1155 = vrot.slane %v1125, 1
      %v1156 = vsel %vm530, %v1154, %v1155
      %1157 = vrot.lane.b32.xlu0 %v1067, 20
      %v1158 = vpop.permute.xlu0 %1157
      %1159 = vrot.lane.b32.xlu0 %v1070, 20
      %v1160 = vpop.permute.xlu0 %1159
      %1161 = vrot.lane.b32.xlu0 %v1073, 20
      %v1162 = vpop.permute.xlu0 %1161
      %1163 = vrot.lane.b32.xlu0 %v1076, 20
      %v1164 = vpop.permute.xlu0 %1163
      %1165 = vrot.lane.b32.xlu0 %v1079, 20
      %v1166 = vpop.permute.xlu0 %1165
      %1167 = vrot.lane.b32.xlu0 %v1082, 20
      %v1168 = vpop.permute.xlu0 %1167
      %1169 = vrot.lane.b32.xlu0 %v1085, 20
      %v1170 = vpop.permute.xlu0 %1169
      %1171 = vrot.lane.b32.xlu0 %v1156, 20
      %v1172 = vpop.permute.xlu0 %1171
      %v1175 = vunpack.c.l.b16 %v883
      %v1176 = vunpack.c.l.b16 %v884
      %v1177 = vpack.c.b16 %v1176, %v1175
      %1178 = vrot.lane.b32.xlu0 %v920, 24
      %v1179 = vpop.permute.xlu0 %1178
      %1180 = vrot.lane.b32.xlu0 %v921, 24
      %v1181 = vpop.permute.xlu0 %1180
      %1182 = vrot.lane.b32.xlu0 %v922, 24
      %v1183 = vpop.permute.xlu0 %1182
      %1184 = vrot.lane.b32.xlu0 %v923, 24
      %v1185 = vpop.permute.xlu0 %1184
      %1186 = vrot.lane.b32.xlu0 %v924, 24
      %v1187 = vpop.permute.xlu0 %1186
      %1188 = vrot.lane.b32.xlu0 %v925, 24
      %v1189 = vpop.permute.xlu0 %1188
      %1190 = vrot.lane.b32.xlu0 %v1106, 24
      %v1191 = vpop.permute.xlu0 %1190
      %1192 = vrot.lane.b32.xlu0 %v1177, 24
      %v1193 = vpop.permute.xlu0 %1192
      %v1195 = vunpack.c.l.b16 %v885
      %v1196 = vpack.c.b16 %v1195, %v1195
      %v1198 = vshrl.u32 %v1177, 16
      %v1200 = vshll.u32 %v1177, 16
      %v1202 = vrot.slane %v1200, 1
      %v1203 = vor.u32 %v1198, %v1202
      %v1205 = vshll.u32 %v1196, 16
      %v1207 = vrot.slane %v1205, 1
      %v1208 = vsel %vm417, %v1203, %v1207
      %1209 = vrot.lane.b32.xlu0 %v985, 28
      %v1210 = vpop.permute.xlu0 %1209
      %1211 = vrot.lane.b32.xlu0 %v997, 28
      %v1212 = vpop.permute.xlu0 %1211
      %1213 = vrot.lane.b32.xlu0 %v1009, 28
      %v1214 = vpop.permute.xlu0 %1213
      %1215 = vrot.lane.b32.xlu0 %v1021, 28
      %v1216 = vpop.permute.xlu0 %1215
      %1217 = vrot.lane.b32.xlu0 %v1033, 28
      %v1218 = vpop.permute.xlu0 %1217
      %1219 = vrot.lane.b32.xlu0 %v1045, 28
      %v1220 = vpop.permute.xlu0 %1219
      %1221 = vrot.lane.b32.xlu0 %v1137, 28
      %v1222 = vpop.permute.xlu0 %1221
      %1223 = vrot.lane.b32.xlu0 %v1208, 28
      %v1224 = vpop.permute.xlu0 %1223
      %v1225 = vrot.slane %v1177, 1
      %v1226 = vrot.slane %v1196, 1
      %v1227 = vsel %vm530, %v1225, %v1226
      %1228 = vrot.lane.b32.xlu0 %v1070, 32
      %v1229 = vpop.permute.xlu0 %1228
      %1230 = vrot.lane.b32.xlu0 %v1073, 32
      %v1231 = vpop.permute.xlu0 %1230
      %1232 = vrot.lane.b32.xlu0 %v1076, 32
      %v1233 = vpop.permute.xlu0 %1232
      %1234 = vrot.lane.b32.xlu0 %v1079, 32
      %v1235 = vpop.permute.xlu0 %1234
      %1236 = vrot.lane.b32.xlu0 %v1082, 32
      %v1237 = vpop.permute.xlu0 %1236
      %1238 = vrot.lane.b32.xlu0 %v1085, 32
      %v1239 = vpop.permute.xlu0 %1238
      %1240 = vrot.lane.b32.xlu0 %v1156, 32
      %v1241 = vpop.permute.xlu0 %1240
      %1242 = vrot.lane.b32.xlu0 %v1227, 32
      %v1243 = vpop.permute.xlu0 %1242
      %v1245 = vsel %vm713, %v918, %v1047
      %v1247 = vsel %vm713, %v919, %v1049
      %v1249 = vsel %vm713, %v920, %v1051
      %v1251 = vsel %vm713, %v921, %v1053
      %v1253 = vsel %vm713, %v922, %v1055
      %v1255 = vsel %vm713, %v923, %v1057
      %v1257 = vsel %vm713, %v924, %v1059
      %v1259 = vsel %vm713, %v925, %v1061
      %v1261 = vsel %vm730, %v1245, %v1087
      %v1263 = vsel %vm730, %v1247, %v1089
      %v1265 = vsel %vm730, %v1249, %v1091
      %v1267 = vsel %vm730, %v1251, %v1093
      %v1269 = vsel %vm730, %v1253, %v1095
      %v1271 = vsel %vm730, %v1255, %v1097
      %v1273 = vsel %vm730, %v1257, %v1099
      %v1275 = vsel %vm730, %v1259, %v1101
      %v1277 = vsel %vm747, %v1261, %v1108
      %v1279 = vsel %vm747, %v1263, %v1110
      %v1281 = vsel %vm747, %v1265, %v1112
      %v1283 = vsel %vm747, %v1267, %v1114
      %v1285 = vsel %vm747, %v1269, %v1116
      %v1287 = vsel %vm747, %v1271, %v1118
      %v1289 = vsel %vm747, %v1273, %v1120
      %v1291 = vsel %vm747, %v1275, %v1122
      %v1293 = vsel %vm764, %v1277, %v1139
      %v1295 = vsel %vm764, %v1279, %v1141
      %v1297 = vsel %vm764, %v1281, %v1143
      %v1299 = vsel %vm764, %v1283, %v1145
      %v1301 = vsel %vm764, %v1285, %v1147
      %v1303 = vsel %vm764, %v1287, %v1149
      %v1305 = vsel %vm764, %v1289, %v1151
      %v1307 = vsel %vm764, %v1291, %v1153
      %v1309 = vsel %vm781, %v1293, %v1158
      %v1311 = vsel %vm781, %v1295, %v1160
      %v1313 = vsel %vm781, %v1297, %v1162
      %v1315 = vsel %vm781, %v1299, %v1164
      %v1317 = vsel %vm781, %v1301, %v1166
      %v1319 = vsel %vm781, %v1303, %v1168
      %v1321 = vsel %vm781, %v1305, %v1170
      %v1323 = vsel %vm781, %v1307, %v1172
      %v1325 = vsel %vm798, %v1309, %v1179
      %v1327 = vsel %vm798, %v1311, %v1181
      %v1329 = vsel %vm798, %v1313, %v1183
      %v1331 = vsel %vm798, %v1315, %v1185
      %v1333 = vsel %vm798, %v1317, %v1187
      %v1335 = vsel %vm798, %v1319, %v1189
      %v1337 = vsel %vm798, %v1321, %v1191
      %v1339 = vsel %vm798, %v1323, %v1193
      %v1341 = vsel %vm815, %v1325, %v1210
      %v1343 = vsel %vm815, %v1327, %v1212
      %v1345 = vsel %vm815, %v1329, %v1214
      %v1347 = vsel %vm815, %v1331, %v1216
      %v1349 = vsel %vm815, %v1333, %v1218
      %v1351 = vsel %vm815, %v1335, %v1220
      %v1353 = vsel %vm815, %v1337, %v1222
      %v1355 = vsel %vm815, %v1339, %v1224
      %v1357 = vsel %vm832, %v1341, %v1229
      %v1359 = vsel %vm832, %v1343, %v1231
      %v1361 = vsel %vm832, %v1345, %v1233
      %v1363 = vsel %vm832, %v1347, %v1235
      %v1365 = vsel %vm832, %v1349, %v1237
      %v1367 = vsel %vm832, %v1351, %v1239
      %v1369 = vsel %vm832, %v1353, %v1241
      %v1371 = vsel %vm832, %v1355, %v1243
      %v1372 = vld [vmem:[%s3] sm:$0xf]
      %v1373 = vld [vmem:[%s3 + $0x4] sm:$0xf]
      %v1374 = vld [vmem:[%s3 + $0x8] sm:$0xf]
      %v1375 = vld [vmem:[%s3 + $0xc] sm:$0xf]
      %v1376 = vld [vmem:[%s3 + $0x10] sm:$0x3]
      %v1382 = vunpack.c.l.b16 %v1372
      %v1383 = vunpack.c.l.b16 %v1373
      %v1384 = vunpack.c.l.b16 %v1374
      %v1385 = vunpack.c.l.b16 %v1375
      %v1386 = vunpack.c.l.b16 %v1376
      %v1387 = vpack.c.b16 %v1383, %v1382
      %v1388 = vpack.c.b16 %v1385, %v1384
      %v1389 = vpack.c.b16 %v1386, %v1386
      %vm1392 = vcmask 293888
      %v1393 = vsel %vm1392, %v1357, 0
      %v1395 = vsel %vm1392, %v1359, 0
      %v1397 = vsel %vm1392, %v1361, 0
      %v1399 = vsel %vm1392, %v1363, 0
      %v1401 = vsel %vm1392, %v1365, 0
      %v1403 = vsel %vm1392, %v1367, 0
      %v1405 = vsel %vm1392, %v1369, 0
      %v1407 = vsel %vm1392, %v1371, 0
      %vm1409 = vcmask 1041408
      %v1411 = vsel %vm1409, %v1389, 0
      %1413 = vmatpush.bf16.msra.mxu0 0
      %1414 = vmatpush.bf16.msra.mxu0 0
      %1415 = vmatpush.bf16.msra.mxu0 0
      %1416 = vmatpush.bf16.msra.mxu0 0
      %1417 = vmatpush.bf16.msra.mxu0 0
      %1418 = vmatpush.bf16.msra.mxu0 %v1411
      %1419 = vmatpush.bf16.msra.mxu0 %v1388
      %1420 = vmatpush.bf16.msra.mxu0 %v1387
      %1421 = vmatmul.bf16.gmra.mxu0 %v1393
      %v1422 = vpop.f32.mrf.mxu0
      %v1423 = vadd.f32 0.0, %v1422
      %v1424 = vpop.f32.mrf.mxu0
      %v1425 = vadd.f32 0.0, %v1424
      %1426 = vmatmul.bf16.gmra.mxu0 %v1395
      %v1427 = vpop.f32.mrf.mxu0
      %v1428 = vadd.f32 0.0, %v1427
      %v1429 = vpop.f32.mrf.mxu0
      %v1430 = vadd.f32 0.0, %v1429
      %1431 = vmatmul.bf16.gmra.mxu0 %v1397
      %v1432 = vpop.f32.mrf.mxu0
      %v1433 = vadd.f32 0.0, %v1432
      %v1434 = vpop.f32.mrf.mxu0
      %v1435 = vadd.f32 0.0, %v1434
      %1436 = vmatmul.bf16.gmra.mxu0 %v1399
      %v1437 = vpop.f32.mrf.mxu0
      %v1438 = vadd.f32 0.0, %v1437
      %v1439 = vpop.f32.mrf.mxu0
      %v1440 = vadd.f32 0.0, %v1439
      %1441 = vmatmul.bf16.gmra.mxu0 %v1401
      %v1442 = vpop.f32.mrf.mxu0
      %v1443 = vadd.f32 0.0, %v1442
      %v1444 = vpop.f32.mrf.mxu0
      %v1445 = vadd.f32 0.0, %v1444
      %1446 = vmatmul.bf16.gmra.mxu0 %v1403
      %v1447 = vpop.f32.mrf.mxu0
      %v1448 = vadd.f32 0.0, %v1447
      %v1449 = vpop.f32.mrf.mxu0
      %v1450 = vadd.f32 0.0, %v1449
      %1451 = vmatmul.bf16.gmra.mxu0 %v1405
      %v1452 = vpop.f32.mrf.mxu0
      %v1453 = vadd.f32 0.0, %v1452
      %v1454 = vpop.f32.mrf.mxu0
      %v1455 = vadd.f32 0.0, %v1454
      %1456 = vmatmul.bf16.gmra.mxu0 %v1407
      %v1457 = vpop.f32.mrf.mxu0
      %v1458 = vadd.f32 0.0, %v1457
      %v1459 = vpop.f32.mrf.mxu0
      %v1460 = vadd.f32 0.0, %v1459
      %1461 = vdwg.mxu0
      %v1467 = vunpack.c.l.b16 %v849
      %v1468 = vunpack.c.l.b16 %v850
      %v1469 = vunpack.c.l.b16 %v851
      %v1470 = vunpack.c.l.b16 %v852
      %v1471 = vunpack.c.l.b16 %v853
      %v1472 = vpack.c.b16 %v1468, %v1467
      %v1473 = vpack.c.b16 %v1470, %v1469
      %v1474 = vpack.c.b16 %v1471, %v1471
      %v1477 = vsel %vm1392, %v834, 0
      %v1479 = vsel %vm1392, %v836, 0
      %v1481 = vsel %vm1392, %v838, 0
      %v1483 = vsel %vm1392, %v840, 0
      %v1485 = vsel %vm1392, %v842, 0
      %v1487 = vsel %vm1392, %v844, 0
      %v1489 = vsel %vm1392, %v846, 0
      %v1491 = vsel %vm1392, %v848, 0
      %v1494 = vsel %vm1409, %v1474, 0
      %1496 = vmatpush.bf16.msra.mxu0 0
      %1497 = vmatpush.bf16.msra.mxu0 0
      %1498 = vmatpush.bf16.msra.mxu0 0
      %1499 = vmatpush.bf16.msra.mxu0 0
      %1500 = vmatpush.bf16.msra.mxu0 0
      %1501 = vmatpush.bf16.msra.mxu0 %v1494
      %1502 = vmatpush.bf16.msra.mxu0 %v1473
      %1503 = vmatpush.bf16.msra.mxu0 %v1472
      %1504 = vmatmul.bf16.gmra.mxu0 %v1477
      %v1505 = vpop.f32.mrf.mxu0
      %v1506 = vadd.f32 %v1423, %v1505
      %v1507 = vpop.f32.mrf.mxu0
      %v1508 = vadd.f32 %v1425, %v1507
      %1509 = vmatmul.bf16.gmra.mxu0 %v1479
      %v1510 = vpop.f32.mrf.mxu0
      %v1511 = vadd.f32 %v1428, %v1510
      %v1512 = vpop.f32.mrf.mxu0
      %v1513 = vadd.f32 %v1430, %v1512
      %1514 = vmatmul.bf16.gmra.mxu0 %v1481
      %v1515 = vpop.f32.mrf.mxu0
      %v1516 = vadd.f32 %v1433, %v1515
      %v1517 = vpop.f32.mrf.mxu0
      %v1518 = vadd.f32 %v1435, %v1517
      %1519 = vmatmul.bf16.gmra.mxu0 %v1483
      %v1520 = vpop.f32.mrf.mxu0
      %v1521 = vadd.f32 %v1438, %v1520
      %v1522 = vpop.f32.mrf.mxu0
      %v1523 = vadd.f32 %v1440, %v1522
      %1524 = vmatmul.bf16.gmra.mxu0 %v1485
      %v1525 = vpop.f32.mrf.mxu0
      %v1526 = vadd.f32 %v1443, %v1525
      %v1527 = vpop.f32.mrf.mxu0
      %v1528 = vadd.f32 %v1445, %v1527
      %1529 = vmatmul.bf16.gmra.mxu0 %v1487
      %v1530 = vpop.f32.mrf.mxu0
      %v1531 = vadd.f32 %v1448, %v1530
      %v1532 = vpop.f32.mrf.mxu0
      %v1533 = vadd.f32 %v1450, %v1532
      %1534 = vmatmul.bf16.gmra.mxu0 %v1489
      %v1535 = vpop.f32.mrf.mxu0
      %v1536 = vadd.f32 %v1453, %v1535
      %v1537 = vpop.f32.mrf.mxu0
      %v1538 = vadd.f32 %v1455, %v1537
      %1539 = vmatmul.bf16.gmra.mxu0 %v1491
      %v1540 = vpop.f32.mrf.mxu0
      %v1541 = vadd.f32 %v1458, %v1540
      %v1542 = vpop.f32.mrf.mxu0
      %v1543 = vadd.f32 %v1460, %v1542
      %1544 = vdwg.mxu0
      %v1545 = vld [vmem:[%s4] sm:$0x1]
      %v1547 = vperm.slane %v1545, 0
      %v1549 = vadd.f32 %v1506, %v1547
      %v1550 = vadd.f32 %v1508, %v1547
      %v1551 = vadd.f32 %v1511, %v1547
      %v1552 = vadd.f32 %v1513, %v1547
      %v1553 = vadd.f32 %v1516, %v1547
      %v1554 = vadd.f32 %v1518, %v1547
      %v1555 = vadd.f32 %v1521, %v1547
      %v1556 = vadd.f32 %v1523, %v1547
      %v1557 = vadd.f32 %v1526, %v1547
      %v1558 = vadd.f32 %v1528, %v1547
      %v1559 = vadd.f32 %v1531, %v1547
      %v1560 = vadd.f32 %v1533, %v1547
      %v1561 = vadd.f32 %v1536, %v1547
      %v1562 = vadd.f32 %v1538, %v1547
      %v1563 = vadd.f32 %v1541, %v1547
      %v1564 = vadd.f32 %v1543, %v1547
      %1565 = vst.msk [vmem:[%s308] sm:$0xff] %vm713, %v1549
      %1566 = vst.msk [vmem:[%s308 + $0x8] sm:$0xff] %vm713, %v1550
      %1567 = vst.msk [vmem:[%s308 + $0x10] sm:$0xff] %vm713, %v1551
      %1568 = vst.msk [vmem:[%s308 + $0x18] sm:$0xff] %vm713, %v1552
      %1569 = vst.msk [vmem:[%s308 + $0x20] sm:$0xff] %vm713, %v1553
      %1570 = vst.msk [vmem:[%s308 + $0x28] sm:$0xff] %vm713, %v1554
      %1571 = vst.msk [vmem:[%s308 + $0x30] sm:$0xff] %vm713, %v1555
      %1572 = vst.msk [vmem:[%s308 + $0x38] sm:$0xff] %vm713, %v1556
      %1573 = vst.msk [vmem:[%s308 + $0x40] sm:$0xff] %vm713, %v1557
      %1574 = vst.msk [vmem:[%s308 + $0x48] sm:$0xff] %vm713, %v1558
      %1575 = vst.msk [vmem:[%s308 + $0x50] sm:$0xff] %vm713, %v1559
      %1576 = vst.msk [vmem:[%s308 + $0x58] sm:$0xff] %vm713, %v1560
      %1577 = vst.msk [vmem:[%s308 + $0x60] sm:$0xff] %vm713, %v1561
      %1578 = vst.msk [vmem:[%s308 + $0x68] sm:$0xff] %vm713, %v1562
      %1579 = vst.msk [vmem:[%s308 + $0x70] sm:$0xff] %vm713, %v1563
      %1580 = vst.msk [vmem:[%s308 + $0x78] sm:$0xff] %vm713, %v1564
      %v1581 = vsel %vm713, %v1549, 0.0
      %v1582 = vsel %vm713, %v1550, 0.0
      %v1583 = vadd.f32 %v1581, %v1582
      %v1584 = vsel %vm713, %v1551, 0.0
      %v1585 = vadd.f32 %v1583, %v1584
      %v1586 = vsel %vm713, %v1552, 0.0
      %v1587 = vadd.f32 %v1585, %v1586
      %v1588 = vsel %vm713, %v1553, 0.0
      %v1589 = vadd.f32 %v1587, %v1588
      %v1590 = vsel %vm713, %v1554, 0.0
      %v1591 = vadd.f32 %v1589, %v1590
      %v1592 = vsel %vm713, %v1555, 0.0
      %v1593 = vadd.f32 %v1591, %v1592
      %v1594 = vsel %vm713, %v1556, 0.0
      %v1595 = vadd.f32 %v1593, %v1594
      %v1596 = vsel %vm713, %v1557, 0.0
      %v1597 = vadd.f32 %v1595, %v1596
      %v1598 = vsel %vm713, %v1558, 0.0
      %v1599 = vadd.f32 %v1597, %v1598
      %v1600 = vsel %vm713, %v1559, 0.0
      %v1601 = vadd.f32 %v1599, %v1600
      %v1602 = vsel %vm713, %v1560, 0.0
      %v1603 = vadd.f32 %v1601, %v1602
      %v1604 = vsel %vm713, %v1561, 0.0
      %v1605 = vadd.f32 %v1603, %v1604
      %v1606 = vsel %vm713, %v1562, 0.0
      %v1607 = vadd.f32 %v1605, %v1606
      %v1608 = vsel %vm713, %v1563, 0.0
      %v1609 = vadd.f32 %v1607, %v1608
      %v1610 = vsel %vm713, %v1564, 0.0
      %v1611 = vadd.f32 %v1609, %v1610
      %v1612 = vrot.slane %v1611, 4
      %v1613 = vadd.f32 %v1611, %v1612
      %v1614 = vrot.slane %v1613, 2
      %v1615 = vadd.f32 %v1613, %v1614
      %v1616 = vrot.slane %v1615, 1
      %v1617 = vadd.f32 %v1615, %v1616
      %v1618 = vmul.f32 %v1549, %v1549
      %v1619 = vmul.f32 %v1550, %v1550
      %v1620 = vmul.f32 %v1551, %v1551
      %v1621 = vmul.f32 %v1552, %v1552
      %v1622 = vmul.f32 %v1553, %v1553
      %v1623 = vmul.f32 %v1554, %v1554
      %v1624 = vmul.f32 %v1555, %v1555
      %v1625 = vmul.f32 %v1556, %v1556
      %v1626 = vmul.f32 %v1557, %v1557
      %v1627 = vmul.f32 %v1558, %v1558
      %v1628 = vmul.f32 %v1559, %v1559
      %v1629 = vmul.f32 %v1560, %v1560
      %v1630 = vmul.f32 %v1561, %v1561
      %v1631 = vmul.f32 %v1562, %v1562
      %v1632 = vmul.f32 %v1563, %v1563
      %v1633 = vmul.f32 %v1564, %v1564
      %v1634 = vsel %vm713, %v1618, 0.0
      %v1635 = vsel %vm713, %v1619, 0.0
      %v1636 = vadd.f32 %v1634, %v1635
      %v1637 = vsel %vm713, %v1620, 0.0
      %v1638 = vadd.f32 %v1636, %v1637
      %v1639 = vsel %vm713, %v1621, 0.0
      %v1640 = vadd.f32 %v1638, %v1639
      %v1641 = vsel %vm713, %v1622, 0.0
      %v1642 = vadd.f32 %v1640, %v1641
      %v1643 = vsel %vm713, %v1623, 0.0
      %v1644 = vadd.f32 %v1642, %v1643
      %v1645 = vsel %vm713, %v1624, 0.0
      %v1646 = vadd.f32 %v1644, %v1645
      %v1647 = vsel %vm713, %v1625, 0.0
      %v1648 = vadd.f32 %v1646, %v1647
      %v1649 = vsel %vm713, %v1626, 0.0
      %v1650 = vadd.f32 %v1648, %v1649
      %v1651 = vsel %vm713, %v1627, 0.0
      %v1652 = vadd.f32 %v1650, %v1651
      %v1653 = vsel %vm713, %v1628, 0.0
      %v1654 = vadd.f32 %v1652, %v1653
      %v1655 = vsel %vm713, %v1629, 0.0
      %v1656 = vadd.f32 %v1654, %v1655
      %v1657 = vsel %vm713, %v1630, 0.0
      %v1658 = vadd.f32 %v1656, %v1657
      %v1659 = vsel %vm713, %v1631, 0.0
      %v1660 = vadd.f32 %v1658, %v1659
      %v1661 = vsel %vm713, %v1632, 0.0
      %v1662 = vadd.f32 %v1660, %v1661
      %v1663 = vsel %vm713, %v1633, 0.0
      %v1664 = vadd.f32 %v1662, %v1663
      %v1665 = vrot.slane %v1664, 4
      %v1666 = vadd.f32 %v1664, %v1665
      %v1667 = vrot.slane %v1666, 2
      %v1668 = vadd.f32 %v1666, %v1667
      %v1669 = vrot.slane %v1668, 1
      %v1670 = vadd.f32 %v1668, %v1669
      %vm1671 = vcmask 1040384
      %v1672 = vsel %vm1671, %v1617, %v1670
      %vm1673 = vcmask 25600
      %1674 = vst.msk [vmem:[%s317] sm:$0x3] %vm1673, %v1672
      %s1675 = smul.u32 8, %s23
      %p1676 = scmp.lt.s32.totalorder %s22, 1
      %s1677 = scalar_select %p1676, %s22, 1
      %p1678 = scmp.lt.s32.totalorder %s1675, 15
      %s1679 = scalar_select %p1678, %s1675, 15
      %s1680 = smul.addr %s1679, 2
      %s1681 = smul.addr %s1677, 32
      %s1682 = sadd.s32 %s1680, %s1681
      %s1683 = smul.addr %s1682, 8
      %s1684 = scalar_lea.vmem %s5, %s1683
      %p1685 = scmp.lt.s32.totalorder %s22, 1
      %s1686 = scalar_select %p1685, %s22, 1
      %p1687 = scmp.lt.s32.totalorder %s23, 1
      %s1688 = scalar_select %p1687, %s23, 1
      %s1689 = smul.addr %s1686, 2
      %s1690 = sadd.s32 %s1688, %s1689
      %s1691 = smul.addr %s1690, 2
      %s1692 = scalar_lea.vmem %s6, %s1691
      // Predicated region
      $region41: #{upsampl_forward.6} parent=39 // pred_check
        %p1693 = pneg %p165
      $region42: #{upsampl_forward.6} parent=39 // pred_check_branch
        %1695 = sbr.rel (%p1693) target = $region44
      $region43: #{upsampl_forward.6} parent=39 // pred_region
        %s1696 = smul.u32 8, %s23
      $region44: #{upsampl_forward.6} parent=39 // pred_fallthru
        _
      // Predicated region
      $region45: #{upsampl_forward.6} parent=39 // pred_check
        %p1697 = pneg %p193
      $region46: #{upsampl_forward.6} parent=39 // pred_check_branch
        %1699 = sbr.rel (%p1697) target = $region48
      $region47: #{upsampl_forward.6} parent=39 // pred_region
        _
      $region48: #{upsampl_forward.6} parent=39 // pred_fallthru
        _
    $region40: #{upsampl_forward.6} parent=5 // pred_fallthru
      _
    %p1700 = scmp.le.s32.totalorder 2, %s13
    // Predicated region
    $region49: #{upsampl_forward.6} parent=5 // pred_check
      %p1701 = pneg %p1700
    $region50: #{upsampl_forward.6} parent=5 // pred_check_branch
      %1703 = sbr.rel (%p1701) target = $region52
    $region51: #{upsampl_forward.6} parent=5 // pred_region
      %s1704 = ssub.s32 %s13, 2
      // Predicated region
      $region53: #{upsampl_forward.6} parent=51 // pred_check
        %p1705 = pneg %p171
      $region54: #{upsampl_forward.6} parent=51 // pred_check_branch
        %1707 = sbr.rel (%p1705) target = $region56
      $region55: #{upsampl_forward.6} parent=51 // pred_region
        %s1708 = smul.u32 8, %s25
        %p1709 = scmp.lt.s32.totalorder %s24, 1
        %s1710 = scalar_select %p1709, %s24, 1
        %p1711 = scmp.lt.s32.totalorder %s1708, 15
        %s1712 = scalar_select %p1711, %s1708, 15
        %s1713 = smul.addr %s1712, 2
        %s1714 = smul.addr %s1710, 32
        %s1715 = sadd.s32 %s1713, %s1714
        %s1716 = smul.addr %s1715, 8
        %s1717 = scalar_lea.vmem %s5, %s1716
      $region56: #{upsampl_forward.6} parent=51 // pred_fallthru
        _
      // Predicated region
      $region57: #{upsampl_forward.6} parent=51 // pred_check
        %p1718 = pneg %p199
      $region58: #{upsampl_forward.6} parent=51 // pred_check_branch
        %1720 = sbr.rel (%p1718) target = $region60
      $region59: #{upsampl_forward.6} parent=51 // pred_region
        %p1721 = scmp.lt.s32.totalorder %s24, 1
        %s1722 = scalar_select %p1721, %s24, 1
        %p1723 = scmp.lt.s32.totalorder %s25, 1
        %s1724 = scalar_select %p1723, %s25, 1
        %s1725 = smul.addr %s1722, 2
        %s1726 = sadd.s32 %s1724, %s1725
        %s1727 = smul.addr %s1726, 2
        %s1728 = scalar_lea.vmem %s6, %s1727
      $region60: #{upsampl_forward.6} parent=51 // pred_fallthru
        _
    $region52: #{upsampl_forward.6} parent=5 // pred_fallthru
      _
  $region6: #{upsampl_forward.6} parent=0 // loop_footer
    %s17 = sadd.s32 1, %s13
  $region7: #{upsampl_forward.6} parent=0 // loop_footer_branch
    %12 = sbr.rel target = $region3
  $region8: #{upsampl_forward.6} parent=0 // loop_exit
    _

// kernel: upsampl_forward.8
$region0: #{upsampl_forward.8}
  #allocation0 [shape = 'u32[]', space=smem, size = 0x4, offset = 0x4, fixed_abs, tag = 'smem constant byte address 0x4 - core index']
  #allocation1 [shape = 'u32[72,128]{1,0:T(1,128)}', space=vmem, size = 0x9000, scoped, tag = 'internal scratch']
  %s0 = inlined_call_operand.vmem [shape: bf16[2,18,18,4], index: 0, kind: input, shape index: {}]
  %s1 = inlined_call_operand.vmem [shape: bf16[36,4], index: 1, kind: input, shape index: {}]
  %s2 = inlined_call_operand.vmem [shape: f32[1,4], index: 2, kind: input, shape index: {}]
  %s3 = inlined_call_operand.vmem [shape: f32[2,16,16,4], index: 3, kind: output, shape index: {0}]
  %s4 = inlined_call_operand.vmem [shape: f32[2,2,2,4], index: 4, kind: output, shape index: {1}]
  %5 = xla_tuple %s3, %s4
  %s6 = sld [smem:[#allocation0]]
  $region53: #{upsampl_forward.8} parent=0
    _
  %s8 = ssub.s32 1, %s6
  %s9 = scalar_select 0, %s8, %s6
  loop: start=0, step=1, limit=6
  $region2: #{upsampl_forward.8} parent=0 // loop_pre_header
    _
  $region3: #{upsampl_forward.8} parent=0 // loop_header
    %s11 = sphi 0, %s15
    %p12 = scmp.ge.s32.totalorder %s11, 6
    %s18 = sphi 0, %s30
    %s19 = sphi 0, %s26
    %s20 = sphi 0, %s18
    %s21 = sphi 0, %s19
    %s22 = sphi 0, %s20
    %s23 = sphi 0, %s21
    %s33 = sphi 0, %s35
    %s36 = sphi 0, %s33
    %s37 = sphi 0, %s36
    %s53 = sphi 0, %s37
    %s57 = sphi 0, %s57
    %s59 = sphi 0, %s57
    %s60 = sphi 0, %s59
    %s74 = sphi 0, %s60
    %s78 = sphi 0, %s78
    %s80 = sphi 0, %s78
    %s81 = sphi 0, %s80
    %s95 = sphi 0, %s81
    %s103 = sphi 0, %s105
    %s106 = sphi 0, %s103
    %s107 = sphi 0, %s106
    %s123 = sphi 0, %s107
    %s131 = sphi 0, %s133
    %s134 = sphi 0, %s131
    %s135 = sphi 0, %s134
    %s151 = sphi 0, %s135
  $region4: #{upsampl_forward.8} parent=0 // loop_header_branch
    %14 = sbr.rel (%p12) target = $region8
  $region5: #{upsampl_forward.8} parent=0 // loop_body
    %s16 = ssub.s32 %s11, 1
    %s17 = ssub.s32 %s11, 2
    %s24 = sadd.s32 1, %s19
    %p25 = scmp.ge.s32.totalorder %s24, 2
    %s26 = scalar_select %p25, 0, %s24
    %s27 = sadd.s32 1, %s18
    %s28 = scalar_select %p25, %s27, %s18
    %p29 = scmp.ge.s32.totalorder %s28, 2
    %s30 = scalar_select %p29, 0, %s28
    %s31 = ssub.s32 %s18, %s30
    %p32 = scmp.eq.s32.totalorder %s31, 0
    %s34 = sadd.s32 %s33, 1
    %s35 = scalar_select %p32, %s33, %s34
    %p38 = pneg %p32
    %p39 = scmp.eq.s32.totalorder %s11, 3
    %p40 = por %p38, %p39
    %p41 = scmp.ne.s32.totalorder %s33, %s36
    %p42 = scmp.eq.s32.totalorder %s11, 0
    %p43 = por %p41, %p42
    %p44 = scmp.ne.s32.totalorder %s33, %s36
    %p45 = scmp.eq.s32.totalorder %s16, 3
    %p46 = por %p44, %p45
    %p47 = scmp.ne.s32.totalorder %s36, %s37
    %p48 = scmp.eq.s32.totalorder %s16, 0
    %p49 = por %p47, %p48
    %p50 = scmp.ne.s32.totalorder %s36, %s37
    %p51 = scmp.eq.s32.totalorder %s17, 3
    %p52 = por %p50, %p51
    %p54 = scmp.ne.s32.totalorder %s37, %s53
    %p55 = scmp.eq.s32.totalorder %s17, 0
    %p56 = por %p54, %p55
    %s58 = sadd.s32 %s57, 1
    %p61 = scmp.eq.s32.totalorder %s11, 3
    %p62 = scmp.ne.s32.totalorder %s57, %s59
    %p63 = scmp.eq.s32.totalorder %s11, 0
    %p64 = por %p62, %p63
    %p65 = scmp.ne.s32.totalorder %s57, %s59
    %p66 = scmp.eq.s32.totalorder %s16, 3
    %p67 = por %p65, %p66
    %p68 = scmp.ne.s32.totalorder %s59, %s60
    %p69 = scmp.eq.s32.totalorder %s16, 0
    %p70 = por %p68, %p69
    %p71 = scmp.ne.s32.totalorder %s59, %s60
    %p72 = scmp.eq.s32.totalorder %s17, 3
    %p73 = por %p71, %p72
    %p75 = scmp.ne.s32.totalorder %s60, %s74
    %p76 = scmp.eq.s32.totalorder %s17, 0
    %p77 = por %p75, %p76
    %s79 = sadd.s32 %s78, 1
    %p82 = scmp.eq.s32.totalorder %s11, 3
    %p83 = scmp.ne.s32.totalorder %s78, %s80
    %p84 = scmp.eq.s32.totalorder %s11, 0
    %p85 = por %p83, %p84
    %p86 = scmp.ne.s32.totalorder %s78, %s80
    %p87 = scmp.eq.s32.totalorder %s16, 3
    %p88 = por %p86, %p87
    %p89 = scmp.ne.s32.totalorder %s80, %s81
    %p90 = scmp.eq.s32.totalorder %s16, 0
    %p91 = por %p89, %p90
    %p92 = scmp.ne.s32.totalorder %s80, %s81
    %p93 = scmp.eq.s32.totalorder %s17, 3
    %p94 = por %p92, %p93
    %p96 = scmp.ne.s32.totalorder %s81, %s95
    %p97 = scmp.eq.s32.totalorder %s17, 0
    %p98 = por %p96, %p97
    %s99 = ssub.s32 %s18, %s30
    %s100 = ssub.s32 %s19, %s26
    %s101 = sor.u32 %s99, %s100
    %p102 = scmp.eq.s32.totalorder %s101, 0
    %s104 = sadd.s32 %s103, 1
    %s105 = scalar_select %p102, %s103, %s104
    %p108 = pneg %p102
    %p109 = scmp.eq.s32.totalorder %s11, 3
    %p110 = por %p108, %p109
    %p111 = scmp.ne.s32.totalorder %s103, %s106
    %p112 = scmp.eq.s32.totalorder %s11, 0
    %p113 = por %p111, %p112
    %p114 = scmp.ne.s32.totalorder %s103, %s106
    %p115 = scmp.eq.s32.totalorder %s16, 3
    %p116 = por %p114, %p115
    %p117 = scmp.ne.s32.totalorder %s106, %s107
    %p118 = scmp.eq.s32.totalorder %s16, 0
    %p119 = por %p117, %p118
    %p120 = scmp.ne.s32.totalorder %s106, %s107
    %p121 = scmp.eq.s32.totalorder %s17, 3
    %p122 = por %p120, %p121
    %p124 = scmp.ne.s32.totalorder %s107, %s123
    %p125 = scmp.eq.s32.totalorder %s17, 0
    %p126 = por %p124, %p125
    %s127 = ssub.s32 %s18, %s30
    %s128 = ssub.s32 %s19, %s26
    %s129 = sor.u32 %s127, %s128
    %p130 = scmp.eq.s32.totalorder %s129, 0
    %s132 = sadd.s32 %s131, 1
    %s133 = scalar_select %p130, %s131, %s132
    %p136 = pneg %p130
    %p137 = scmp.eq.s32.totalorder %s11, 3
    %p138 = por %p136, %p137
    %p139 = scmp.ne.s32.totalorder %s131, %s134
    %p140 = scmp.eq.s32.totalorder %s11, 0
    %p141 = por %p139, %p140
    %p142 = scmp.ne.s32.totalorder %s131, %s134
    %p143 = scmp.eq.s32.totalorder %s16, 3
    %p144 = por %p142, %p143
    %p145 = scmp.ne.s32.totalorder %s134, %s135
    %p146 = scmp.eq.s32.totalorder %s16, 0
    %p147 = por %p145, %p146
    %p148 = scmp.ne.s32.totalorder %s134, %s135
    %p149 = scmp.eq.s32.totalorder %s17, 3
    %p150 = por %p148, %p149
    %p152 = scmp.ne.s32.totalorder %s135, %s151
    %p153 = scmp.eq.s32.totalorder %s17, 0
    %p154 = por %p152, %p153
    %p155 = scmp.le.s32.totalorder 1, %s11
    %p156 = scmp.lt.s32.totalorder %s11, 5
    %p157 = pnand %p155, %p156
    %p158 = pneg %p157
    // Predicated region
    $region9: #{upsampl_forward.8} parent=5 // pred_check
      _
    $region10: #{upsampl_forward.8} parent=5 // pred_check_branch
      %160 = sbr.rel (%p157) target = $region12
    $region11: #{upsampl_forward.8} parent=5 // pred_region
      %s161 = ssub.s32 %s11, 1
      // Predicated region
      $region13: #{upsampl_forward.8} parent=11 // pred_check
        %p162 = pneg %p70
      $region14: #{upsampl_forward.8} parent=11 // pred_check_branch
        %164 = sbr.rel (%p162) target = $region16
      $region15: #{upsampl_forward.8} parent=11 // pred_region
        _
      $region16: #{upsampl_forward.8} parent=11 // pred_fallthru
        _
      // Predicated region
      $region17: #{upsampl_forward.8} parent=11 // pred_check
        %p165 = pneg %p91
      $region18: #{upsampl_forward.8} parent=11 // pred_check_branch
        %167 = sbr.rel (%p165) target = $region20
      $region19: #{upsampl_forward.8} parent=11 // pred_region
        _
      $region20: #{upsampl_forward.8} parent=11 // pred_fallthru
        _
    $region12: #{upsampl_forward.8} parent=5 // pred_fallthru
      _
    %p168 = scmp.lt.s32.totalorder %s11, 4
    // Predicated region
    $region21: #{upsampl_forward.8} parent=5 // pred_check
      %p169 = pneg %p168
    $region22: #{upsampl_forward.8} parent=5 // pred_check_branch
      %171 = sbr.rel (%p169) target = $region24
    $region23: #{upsampl_forward.8} parent=5 // pred_region
      // Predicated region
      $region25: #{upsampl_forward.8} parent=23 // pred_check
        %p172 = pneg %p43
      $region26: #{upsampl_forward.8} parent=23 // pred_check_branch
        %174 = sbr.rel (%p172) target = $region28
      $region27: #{upsampl_forward.8} parent=23 // pred_region
        %p175 = scmp.lt.s32.totalorder %s18, 1
        %s176 = scalar_select %p175, %s18, 1
        %s177 = smul.addr %s176, 54
        %s178 = smul.addr %s177, 4
        %s179 = scalar_lea.vmem %s0, %s178
      $region28: #{upsampl_forward.8} parent=23 // pred_fallthru
        _
    $region24: #{upsampl_forward.8} parent=5 // pred_fallthru
      _
    %p180 = scmp.le.s32.totalorder 1, %s11
    %p181 = scmp.lt.s32.totalorder %s11, 5
    %p182 = pnand %p180, %p181
    %p183 = pneg %p182
    // Predicated region
    $region29: #{upsampl_forward.8} parent=5 // pred_check
      _
    $region30: #{upsampl_forward.8} parent=5 // pred_check_branch
      %185 = sbr.rel (%p182) target = $region32
    $region31: #{upsampl_forward.8} parent=5 // pred_region
      %s186 = ssub.s32 %s11, 1
      %p187 = scmp.lt.s32.totalorder %s20, 1
      %s188 = scalar_select %p187, %s20, 1
      %s189 = smul.addr %s188, 54
      %s190 = smul.addr %s189, 4
      %s191 = scalar_lea.vmem %s0, %s190
      %p192 = pneg %p49
      %p193 = pneg %p46
      %p194 = pneg %p70
      %p195 = pneg %p67
      %p196 = pneg %p91
      %p197 = pneg %p88
      %p198 = pneg %p119
      %p199 = pneg %p116
      %s200 = smul.u32 8, %s21
      %p201 = scmp.lt.s32.totalorder %s20, 1
      %s202 = scalar_select %p201, %s20, 1
      %p203 = scmp.lt.s32.totalorder %s200, 15
      %s204 = scalar_select %p203, %s200, 15
      %s205 = smul.addr %s204, 2
      %s206 = smul.addr %s202, 32
      %s207 = sadd.s32 %s205, %s206
      %s208 = smul.addr %s207, 8
      %s209 = scalar_lea.vmem %s3, %s208
      %p210 = pneg %p147
      %p211 = pneg %p144
      %p212 = scmp.lt.s32.totalorder %s20, 1
      %s213 = scalar_select %p212, %s20, 1
      %p214 = scmp.lt.s32.totalorder %s21, 1
      %s215 = scalar_select %p214, %s21, 1
      %s216 = smul.addr %s213, 2
      %s217 = sadd.s32 %s215, %s216
      %s218 = smul.addr %s217, 2
      %s219 = scalar_lea.vmem %s4, %s218
      %p220 = scmp.lt.s32.totalorder %s20, 1
      %s221 = scalar_select %p220, %s20, 1
      %s222 = smul.addr %s221, 54
      %s223 = smul.addr %s222, 4
      %s224 = scalar_lea.vmem %s0, %s223
      %s225 = smul.u32 8, %s21
      %p226 = scmp.lt.s32.totalorder %s20, 1
      %s227 = scalar_select %p226, %s20, 1
      %p228 = scmp.lt.s32.totalorder %s225, 15
      %s229 = scalar_select %p228, %s225, 15
      %s230 = smul.addr %s229, 2
      %s231 = smul.addr %s227, 32
      %s232 = sadd.s32 %s230, %s231
      %s233 = smul.addr %s232, 8
      %s234 = scalar_lea.vmem %s3, %s233
      %s235 = smul.u32 8, %s21
      %p236 = scmp.lt.s32.totalorder %s20, 1
      %s237 = scalar_select %p236, %s20, 1
      %p238 = scmp.lt.s32.totalorder %s21, 1
      %s239 = scalar_select %p238, %s21, 1
      %s240 = smul.addr %s237, 2
      %s241 = sadd.s32 %s239, %s240
      %s242 = smul.addr %s241, 2
      %s243 = scalar_lea.vmem %s4, %s242
      %s245 = smul.u32 %s21, 8
      %s246 = smul.u32 %s245, 3
      %s247 = smul.addr %s246, 4
      %s248 = scalar_lea.vmem %s224, %s247
      %v249 = vld [vmem:[%s248] sm:$0xf]
      %v250 = vld [vmem:[%s248 + $0x4] sm:$0xf]
      %v251 = vld [vmem:[%s248 + $0x8] sm:$0x1]
      %v252 = vld [vmem:[%s248 + $0xc] sm:$0xf]
      %v253 = vld [vmem:[%s248 + $0x10] sm:$0xf]
      %v254 = vld [vmem:[%s248 + $0x14] sm:$0x1]
      %v255 = vld [vmem:[%s248 + $0x18] sm:$0xf]
      %v256 = vld [vmem:[%s248 + $0x1c] sm:$0xf]
      %v257 = vld [vmem:[%s248 + $0x20] sm:$0x1]
      %v258 = vld [vmem:[%s248 + $0x24] sm:$0xf]
      %v259 = vld [vmem:[%s248 + $0x28] sm:$0xf]
      %v260 = vld [vmem:[%s248 + $0x2c] sm:$0x1]
      %v261 = vld [vmem:[%s248 + $0x30] sm:$0xf]
      %v262 = vld [vmem:[%s248 + $0x34] sm:$0xf]
      %v263 = vld [vmem:[%s248 + $0x38] sm:$0x1]
      %v264 = vld [vmem:[%s248 + $0x3c] sm:$0xf]
      %v265 = vld [vmem:[%s248 + $0x40] sm:$0xf]
      %v266 = vld [vmem:[%s248 + $0x44] sm:$0x1]
      %v267 = vld [vmem:[%s248 + $0x48] sm:$0xf]
      %v268 = vld [vmem:[%s248 + $0x4c] sm:$0xf]
      %v269 = vld [vmem:[%s248 + $0x50] sm:$0x1]
      %v270 = vld [vmem:[%s248 + $0x54] sm:$0xf]
      %v271 = vld [vmem:[%s248 + $0x58] sm:$0xf]
      %v272 = vld [vmem:[%s248 + $0x5c] sm:$0x1]
      %v273 = vld [vmem:[%s248 + $0x60] sm:$0xf]
      %v274 = vld [vmem:[%s248 + $0x64] sm:$0xf]
      %v275 = vld [vmem:[%s248 + $0x68] sm:$0x1]
      %v276 = vld [vmem:[%s248 + $0x6c] sm:$0xf]
      %v277 = vld [vmem:[%s248 + $0x70] sm:$0xf]
      %v278 = vld [vmem:[%s248 + $0x74] sm:$0x1]
      %v295 = vunpack.c.l.b16 %v249
      %v296 = vunpack.c.l.b16 %v250
      %v297 = vunpack.c.l.b16 %v252
      %v298 = vunpack.c.l.b16 %v253
      %v299 = vunpack.c.l.b16 %v255
      %v300 = vunpack.c.l.b16 %v256
      %v301 = vunpack.c.l.b16 %v258
      %v302 = vunpack.c.l.b16 %v259
      %v303 = vunpack.c.l.b16 %v261
      %v304 = vunpack.c.l.b16 %v262
      %v305 = vunpack.c.l.b16 %v264
      %v306 = vunpack.c.l.b16 %v265
      %v307 = vunpack.c.l.b16 %v267
      %v308 = vunpack.c.l.b16 %v268
      %v309 = vunpack.c.l.b16 %v270
      %v310 = vunpack.c.l.b16 %v271
      %v311 = vpack.c.b16 %v296, %v295
      %v312 = vpack.c.b16 %v298, %v297
      %v313 = vpack.c.b16 %v300, %v299
      %v314 = vpack.c.b16 %v302, %v301
      %v315 = vpack.c.b16 %v304, %v303
      %v316 = vpack.c.b16 %v306, %v305
      %v317 = vpack.c.b16 %v308, %v307
      %v318 = vpack.c.b16 %v310, %v309
      %v327 = vunpack.c.l.b16 %v251
      %v328 = vunpack.c.l.b16 %v254
      %v329 = vunpack.c.l.b16 %v257
      %v330 = vunpack.c.l.b16 %v260
      %v331 = vunpack.c.l.b16 %v263
      %v332 = vunpack.c.l.b16 %v266
      %v333 = vunpack.c.l.b16 %v269
      %v334 = vunpack.c.l.b16 %v272
      %v335 = vpack.c.b16 %v327, %v327
      %v336 = vpack.c.b16 %v328, %v328
      %v337 = vpack.c.b16 %v329, %v329
      %v338 = vpack.c.b16 %v330, %v330
      %v339 = vpack.c.b16 %v331, %v331
      %v340 = vpack.c.b16 %v332, %v332
      %v341 = vpack.c.b16 %v333, %v333
      %v342 = vpack.c.b16 %v334, %v334
      %vm343 = vsmask.f32 7424
      %v345 = vshrl.u32 %v311, 16
      %v347 = vshll.u32 %v311, 16
      %v349 = vrot.slane %v347, 1
      %v350 = vor.u32 %v345, %v349
      %v352 = vshll.u32 %v335, 16
      %v354 = vrot.slane %v352, 1
      %v355 = vsel %vm343, %v350, %v354
      %v357 = vshrl.u32 %v312, 16
      %v359 = vshll.u32 %v312, 16
      %v361 = vrot.slane %v359, 1
      %v362 = vor.u32 %v357, %v361
      %v364 = vshll.u32 %v336, 16
      %v366 = vrot.slane %v364, 1
      %v367 = vsel %vm343, %v362, %v366
      %v369 = vshrl.u32 %v313, 16
      %v371 = vshll.u32 %v313, 16
      %v373 = vrot.slane %v371, 1
      %v374 = vor.u32 %v369, %v373
      %v376 = vshll.u32 %v337, 16
      %v378 = vrot.slane %v376, 1
      %v379 = vsel %vm343, %v374, %v378
      %v381 = vshrl.u32 %v314, 16
      %v383 = vshll.u32 %v314, 16
      %v385 = vrot.slane %v383, 1
      %v386 = vor.u32 %v381, %v385
      %v388 = vshll.u32 %v338, 16
      %v390 = vrot.slane %v388, 1
      %v391 = vsel %vm343, %v386, %v390
      %v393 = vshrl.u32 %v315, 16
      %v395 = vshll.u32 %v315, 16
      %v397 = vrot.slane %v395, 1
      %v398 = vor.u32 %v393, %v397
      %v400 = vshll.u32 %v339, 16
      %v402 = vrot.slane %v400, 1
      %v403 = vsel %vm343, %v398, %v402
      %v405 = vshrl.u32 %v316, 16
      %v407 = vshll.u32 %v316, 16
      %v409 = vrot.slane %v407, 1
      %v410 = vor.u32 %v405, %v409
      %v412 = vshll.u32 %v340, 16
      %v414 = vrot.slane %v412, 1
      %v415 = vsel %vm343, %v410, %v414
      %v417 = vshrl.u32 %v317, 16
      %v419 = vshll.u32 %v317, 16
      %v421 = vrot.slane %v419, 1
      %v422 = vor.u32 %v417, %v421
      %v424 = vshll.u32 %v341, 16
      %v426 = vrot.slane %v424, 1
      %v427 = vsel %vm343, %v422, %v426
      %v429 = vshrl.u32 %v318, 16
      %v431 = vshll.u32 %v318, 16
      %v433 = vrot.slane %v431, 1
      %v434 = vor.u32 %v429, %v433
      %v436 = vshll.u32 %v342, 16
      %v438 = vrot.slane %v436, 1
      %v439 = vsel %vm343, %v434, %v438
      %440 = vrot.lane.b32.xlu0 %v355, 4
      %v441 = vpop.permute.xlu0 %440
      %442 = vrot.lane.b32.xlu0 %v367, 4
      %v443 = vpop.permute.xlu0 %442
      %444 = vrot.lane.b32.xlu0 %v379, 4
      %v445 = vpop.permute.xlu0 %444
      %446 = vrot.lane.b32.xlu0 %v391, 4
      %v447 = vpop.permute.xlu0 %446
      %448 = vrot.lane.b32.xlu0 %v403, 4
      %v449 = vpop.permute.xlu0 %448
      %450 = vrot.lane.b32.xlu0 %v415, 4
      %v451 = vpop.permute.xlu0 %450
      %452 = vrot.lane.b32.xlu0 %v427, 4
      %v453 = vpop.permute.xlu0 %452
      %454 = vrot.lane.b32.xlu0 %v439, 4
      %v455 = vpop.permute.xlu0 %454
      %vm456 = vcmask 1046528
      %v457 = vrot.slane %v311, 1
      %v458 = vrot.slane %v335, 1
      %v459 = vsel %vm456, %v457, %v458
      %v460 = vrot.slane %v312, 1
      %v461 = vrot.slane %v336, 1
      %v462 = vsel %vm456, %v460, %v461
      %v463 = vrot.slane %v313, 1
      %v464 = vrot.slane %v337, 1
      %v465 = vsel %vm456, %v463, %v464
      %v466 = vrot.slane %v314, 1
      %v467 = vrot.slane %v338, 1
      %v468 = vsel %vm456, %v466, %v467
      %v469 = vrot.slane %v315, 1
      %v470 = vrot.slane %v339, 1
      %v471 = vsel %vm456, %v469, %v470
      %v472 = vrot.slane %v316, 1
      %v473 = vrot.slane %v340, 1
      %v474 = vsel %vm456, %v472, %v473
      %v475 = vrot.slane %v317, 1
      %v476 = vrot.slane %v341, 1
      %v477 = vsel %vm456, %v475, %v476
      %v478 = vrot.slane %v318, 1
      %v479 = vrot.slane %v342, 1
      %v480 = vsel %vm456, %v478, %v479
      %481 = vrot.lane.b32.xlu0 %v459, 8
      %v482 = vpop.permute.xlu0 %481
      %483 = vrot.lane.b32.xlu0 %v462, 8
      %v484 = vpop.permute.xlu0 %483
      %485 = vrot.lane.b32.xlu0 %v465, 8
      %v486 = vpop.permute.xlu0 %485
      %487 = vrot.lane.b32.xlu0 %v468, 8
      %v488 = vpop.permute.xlu0 %487
      %489 = vrot.lane.b32.xlu0 %v471, 8
      %v490 = vpop.permute.xlu0 %489
      %491 = vrot.lane.b32.xlu0 %v474, 8
      %v492 = vpop.permute.xlu0 %491
      %493 = vrot.lane.b32.xlu0 %v477, 8
      %v494 = vpop.permute.xlu0 %493
      %495 = vrot.lane.b32.xlu0 %v480, 8
      %v496 = vpop.permute.xlu0 %495
      %v499 = vunpack.c.l.b16 %v273
      %v500 = vunpack.c.l.b16 %v274
      %v501 = vpack.c.b16 %v500, %v499
      %502 = vrot.lane.b32.xlu0 %v312, 12
      %v503 = vpop.permute.xlu0 %502
      %504 = vrot.lane.b32.xlu0 %v313, 12
      %v505 = vpop.permute.xlu0 %504
      %506 = vrot.lane.b32.xlu0 %v314, 12
      %v507 = vpop.permute.xlu0 %506
      %508 = vrot.lane.b32.xlu0 %v315, 12
      %v509 = vpop.permute.xlu0 %508
      %510 = vrot.lane.b32.xlu0 %v316, 12
      %v511 = vpop.permute.xlu0 %510
      %512 = vrot.lane.b32.xlu0 %v317, 12
      %v513 = vpop.permute.xlu0 %512
      %514 = vrot.lane.b32.xlu0 %v318, 12
      %v515 = vpop.permute.xlu0 %514
      %516 = vrot.lane.b32.xlu0 %v501, 12
      %v517 = vpop.permute.xlu0 %516
      %v519 = vunpack.c.l.b16 %v275
      %v520 = vpack.c.b16 %v519, %v519
      %v522 = vshrl.u32 %v501, 16
      %v524 = vshll.u32 %v501, 16
      %v526 = vrot.slane %v524, 1
      %v527 = vor.u32 %v522, %v526
      %v529 = vshll.u32 %v520, 16
      %v531 = vrot.slane %v529, 1
      %v532 = vsel %vm343, %v527, %v531
      %533 = vrot.lane.b32.xlu0 %v367, 16
      %v534 = vpop.permute.xlu0 %533
      %535 = vrot.lane.b32.xlu0 %v379, 16
      %v536 = vpop.permute.xlu0 %535
      %537 = vrot.lane.b32.xlu0 %v391, 16
      %v538 = vpop.permute.xlu0 %537
      %539 = vrot.lane.b32.xlu0 %v403, 16
      %v540 = vpop.permute.xlu0 %539
      %541 = vrot.lane.b32.xlu0 %v415, 16
      %v542 = vpop.permute.xlu0 %541
      %543 = vrot.lane.b32.xlu0 %v427, 16
      %v544 = vpop.permute.xlu0 %543
      %545 = vrot.lane.b32.xlu0 %v439, 16
      %v546 = vpop.permute.xlu0 %545
      %547 = vrot.lane.b32.xlu0 %v532, 16
      %v548 = vpop.permute.xlu0 %547
      %v549 = vrot.slane %v501, 1
      %v550 = vrot.slane %v520, 1
      %v551 = vsel %vm456, %v549, %v550
      %552 = vrot.lane.b32.xlu0 %v462, 20
      %v553 = vpop.permute.xlu0 %552
      %554 = vrot.lane.b32.xlu0 %v465, 20
      %v555 = vpop.permute.xlu0 %554
      %556 = vrot.lane.b32.xlu0 %v468, 20
      %v557 = vpop.permute.xlu0 %556
      %558 = vrot.lane.b32.xlu0 %v471, 20
      %v559 = vpop.permute.xlu0 %558
      %560 = vrot.lane.b32.xlu0 %v474, 20
      %v561 = vpop.permute.xlu0 %560
      %562 = vrot.lane.b32.xlu0 %v477, 20
      %v563 = vpop.permute.xlu0 %562
      %564 = vrot.lane.b32.xlu0 %v480, 20
      %v565 = vpop.permute.xlu0 %564
      %566 = vrot.lane.b32.xlu0 %v551, 20
      %v567 = vpop.permute.xlu0 %566
      %v570 = vunpack.c.l.b16 %v276
      %v571 = vunpack.c.l.b16 %v277
      %v572 = vpack.c.b16 %v571, %v570
      %573 = vrot.lane.b32.xlu0 %v313, 24
      %v574 = vpop.permute.xlu0 %573
      %575 = vrot.lane.b32.xlu0 %v314, 24
      %v576 = vpop.permute.xlu0 %575
      %577 = vrot.lane.b32.xlu0 %v315, 24
      %v578 = vpop.permute.xlu0 %577
      %579 = vrot.lane.b32.xlu0 %v316, 24
      %v580 = vpop.permute.xlu0 %579
      %581 = vrot.lane.b32.xlu0 %v317, 24
      %v582 = vpop.permute.xlu0 %581
      %583 = vrot.lane.b32.xlu0 %v318, 24
      %v584 = vpop.permute.xlu0 %583
      %585 = vrot.lane.b32.xlu0 %v501, 24
      %v586 = vpop.permute.xlu0 %585
      %587 = vrot.lane.b32.xlu0 %v572, 24
      %v588 = vpop.permute.xlu0 %587
      %v590 = vunpack.c.l.b16 %v278
      %v591 = vpack.c.b16 %v590, %v590
      %v593 = vshrl.u32 %v572, 16
      %v595 = vshll.u32 %v572, 16
      %v597 = vrot.slane %v595, 1
      %v598 = vor.u32 %v593, %v597
      %v600 = vshll.u32 %v591, 16
      %v602 = vrot.slane %v600, 1
      %v603 = vsel %vm343, %v598, %v602
      %604 = vrot.lane.b32.xlu0 %v379, 28
      %v605 = vpop.permute.xlu0 %604
      %606 = vrot.lane.b32.xlu0 %v391, 28
      %v607 = vpop.permute.xlu0 %606
      %608 = vrot.lane.b32.xlu0 %v403, 28
      %v609 = vpop.permute.xlu0 %608
      %610 = vrot.lane.b32.xlu0 %v415, 28
      %v611 = vpop.permute.xlu0 %610
      %612 = vrot.lane.b32.xlu0 %v427, 28
      %v613 = vpop.permute.xlu0 %612
      %614 = vrot.lane.b32.xlu0 %v439, 28
      %v615 = vpop.permute.xlu0 %614
      %616 = vrot.lane.b32.xlu0 %v532, 28
      %v617 = vpop.permute.xlu0 %616
      %618 = vrot.lane.b32.xlu0 %v603, 28
      %v619 = vpop.permute.xlu0 %618
      %v620 = vrot.slane %v572, 1
      %v621 = vrot.slane %v591, 1
      %v622 = vsel %vm456, %v620, %v621
      %623 = vrot.lane.b32.xlu0 %v465, 32
      %v624 = vpop.permute.xlu0 %623
      %625 = vrot.lane.b32.xlu0 %v468, 32
      %v626 = vpop.permute.xlu0 %625
      %627 = vrot.lane.b32.xlu0 %v471, 32
      %v628 = vpop.permute.xlu0 %627
      %629 = vrot.lane.b32.xlu0 %v474, 32
      %v630 = vpop.permute.xlu0 %629
      %631 = vrot.lane.b32.xlu0 %v477, 32
      %v632 = vpop.permute.xlu0 %631
      %633 = vrot.lane.b32.xlu0 %v480, 32
      %v634 = vpop.permute.xlu0 %633
      %635 = vrot.lane.b32.xlu0 %v551, 32
      %v636 = vpop.permute.xlu0 %635
      %637 = vrot.lane.b32.xlu0 %v622, 32
      %v638 = vpop.permute.xlu0 %637
      %vm639 = vcmask 31744
      %v641 = vsel %vm639, %v311, %v441
      %v643 = vsel %vm639, %v312, %v443
      %v645 = vsel %vm639, %v313, %v445
      %v647 = vsel %vm639, %v314, %v447
      %v649 = vsel %vm639, %v315, %v449
      %v651 = vsel %vm639, %v316, %v451
      %v653 = vsel %vm639, %v317, %v453
      %v655 = vsel %vm639, %v318, %v455
      %vm656 = vcmask 64512
      %v658 = vsel %vm656, %v641, %v482
      %v660 = vsel %vm656, %v643, %v484
      %v662 = vsel %vm656, %v645, %v486
      %v664 = vsel %vm656, %v647, %v488
      %v666 = vsel %vm656, %v649, %v490
      %v668 = vsel %vm656, %v651, %v492
      %v670 = vsel %vm656, %v653, %v494
      %v672 = vsel %vm656, %v655, %v496
      %vm673 = vcmask 97280
      %v675 = vsel %vm673, %v658, %v503
      %v677 = vsel %vm673, %v660, %v505
      %v679 = vsel %vm673, %v662, %v507
      %v681 = vsel %vm673, %v664, %v509
      %v683 = vsel %vm673, %v666, %v511
      %v685 = vsel %vm673, %v668, %v513
      %v687 = vsel %vm673, %v670, %v515
      %v689 = vsel %vm673, %v672, %v517
      %vm690 = vcmask 130048
      %v692 = vsel %vm690, %v675, %v534
      %v694 = vsel %vm690, %v677, %v536
      %v696 = vsel %vm690, %v679, %v538
      %v698 = vsel %vm690, %v681, %v540
      %v700 = vsel %vm690, %v683, %v542
      %v702 = vsel %vm690, %v685, %v544
      %v704 = vsel %vm690, %v687, %v546
      %v706 = vsel %vm690, %v689, %v548
      %vm707 = vcmask 162816
      %v709 = vsel %vm707, %v692, %v553
      %v711 = vsel %vm707, %v694, %v555
      %v713 = vsel %vm707, %v696, %v557
      %v715 = vsel %vm707, %v698, %v559
      %v717 = vsel %vm707, %v700, %v561
      %v719 = vsel %vm707, %v702, %v563
      %v721 = vsel %vm707, %v704, %v565
      %v723 = vsel %vm707, %v706, %v567
      %vm724 = vcmask 195584
      %v726 = vsel %vm724, %v709, %v574
      %v728 = vsel %vm724, %v711, %v576
      %v730 = vsel %vm724, %v713, %v578
      %v732 = vsel %vm724, %v715, %v580
      %v734 = vsel %vm724, %v717, %v582
      %v736 = vsel %vm724, %v719, %v584
      %v738 = vsel %vm724, %v721, %v586
      %v740 = vsel %vm724, %v723, %v588
      %vm741 = vcmask 228352
      %v743 = vsel %vm741, %v726, %v605
      %v745 = vsel %vm741, %v728, %v607
      %v747 = vsel %vm741, %v730, %v609
      %v749 = vsel %vm741, %v732, %v611
      %v751 = vsel %vm741, %v734, %v613
      %v753 = vsel %vm741, %v736, %v615
      %v755 = vsel %vm741, %v738, %v617
      %v757 = vsel %vm741, %v740, %v619
      %vm758 = vcmask 261120
      %v760 = vsel %vm758, %v743, %v624
      %v762 = vsel %vm758, %v745, %v626
      %v764 = vsel %vm758, %v747, %v628
      %v766 = vsel %vm758, %v749, %v630
      %v768 = vsel %vm758, %v751, %v632
      %v770 = vsel %vm758, %v753, %v634
      %v772 = vsel %vm758, %v755, %v636
      %v774 = vsel %vm758, %v757, %v638
      %v775 = vld [vmem:[%s1] sm:$0xf]
      %v776 = vld [vmem:[%s1 + $0x4] sm:$0xf]
      %v777 = vld [vmem:[%s1 + $0x8] sm:$0xf]
      %v778 = vld [vmem:[%s1 + $0xc] sm:$0xf]
      %v779 = vld [vmem:[%s1 + $0x10] sm:$0x3]
      %v780 = vld [vmem:[%s2] sm:$0x1]
      %v782 = vperm.slane %v780, 0
      %v789 = vunpack.c.l.b16 %v775
      %v790 = vunpack.c.l.b16 %v776
      %v791 = vunpack.c.l.b16 %v777
      %v792 = vunpack.c.l.b16 %v778
      %v793 = vunpack.c.l.b16 %v779
      %v794 = vpack.c.b16 %v790, %v789
      %v795 = vpack.c.b16 %v792, %v791
      %v796 = vpack.c.b16 %v793, %v793
      %vm799 = vcmask 293888
      %v800 = vsel %vm799, %v760, 0
      %v802 = vsel %vm799, %v762, 0
      %v804 = vsel %vm799, %v764, 0
      %v806 = vsel %vm799, %v766, 0
      %v808 = vsel %vm799, %v768, 0
      %v810 = vsel %vm799, %v770, 0
      %v812 = vsel %vm799, %v772, 0
      %v814 = vsel %vm799, %v774, 0
      %vm816 = vcmask 1041408
      %v818 = vsel %vm816, %v796, 0
      %820 = vmatpush.bf16.msra.mxu0 0
      %821 = vmatpush.bf16.msra.mxu0 0
      %822 = vmatpush.bf16.msra.mxu0 0
      %823 = vmatpush.bf16.msra.mxu0 0
      %824 = vmatpush.bf16.msra.mxu0 0
      %825 = vmatpush.bf16.msra.mxu0 %v818
      %826 = vmatpush.bf16.msra.mxu0 %v795
      %827 = vmatpush.bf16.msra.mxu0 %v794
      %828 = vmatmul.bf16.gmra.mxu0 %v800
      %v829 = vpop.f32.mrf.mxu0
      %v830 = vadd.f32 %v782, %v829
      %v831 = vpop.f32.mrf.mxu0
      %v832 = vadd.f32 %v782, %v831
      %833 = vmatmul.bf16.gmra.mxu0 %v802
      %v834 = vpop.f32.mrf.mxu0
      %v835 = vadd.f32 %v782, %v834
      %v836 = vpop.f32.mrf.mxu0
      %v837 = vadd.f32 %v782, %v836
      %838 = vmatmul.bf16.gmra.mxu0 %v804
      %v839 = vpop.f32.mrf.mxu0
      %v840 = vadd.f32 %v782, %v839
      %v841 = vpop.f32.mrf.mxu0
      %v842 = vadd.f32 %v782, %v841
      %843 = vmatmul.bf16.gmra.mxu0 %v806
      %v844 = vpop.f32.mrf.mxu0
      %v845 = vadd.f32 %v782, %v844
      %v846 = vpop.f32.mrf.mxu0
      %v847 = vadd.f32 %v782, %v846
      %848 = vmatmul.bf16.gmra.mxu0 %v808
      %v849 = vpop.f32.mrf.mxu0
      %v850 = vadd.f32 %v782, %v849
      %v851 = vpop.f32.mrf.mxu0
      %v852 = vadd.f32 %v782, %v851
      %853 = vmatmul.bf16.gmra.mxu0 %v810
      %v854 = vpop.f32.mrf.mxu0
      %v855 = vadd.f32 %v782, %v854
      %v856 = vpop.f32.mrf.mxu0
      %v857 = vadd.f32 %v782, %v856
      %858 = vmatmul.bf16.gmra.mxu0 %v812
      %v859 = vpop.f32.mrf.mxu0
      %v860 = vadd.f32 %v782, %v859
      %v861 = vpop.f32.mrf.mxu0
      %v862 = vadd.f32 %v782, %v861
      %863 = vmatmul.bf16.gmra.mxu0 %v814
      %v864 = vpop.f32.mrf.mxu0
      %v865 = vadd.f32 %v782, %v864
      %v866 = vpop.f32.mrf.mxu0
      %v867 = vadd.f32 %v782, %v866
      %868 = vdwg.mxu0
      %869 = vst.msk [vmem:[%s234] sm:$0xff] %vm639, %v830
      %870 = vst.msk [vmem:[%s234 + $0x8] sm:$0xff] %vm639, %v832
      %871 = vst.msk [vmem:[%s234 + $0x10] sm:$0xff] %vm639, %v835
      %872 = vst.msk [vmem:[%s234 + $0x18] sm:$0xff] %vm639, %v837
      %873 = vst.msk [vmem:[%s234 + $0x20] sm:$0xff] %vm639, %v840
      %874 = vst.msk [vmem:[%s234 + $0x28] sm:$0xff] %vm639, %v842
      %875 = vst.msk [vmem:[%s234 + $0x30] sm:$0xff] %vm639, %v845
      %876 = vst.msk [vmem:[%s234 + $0x38] sm:$0xff] %vm639, %v847
      %877 = vst.msk [vmem:[%s234 + $0x40] sm:$0xff] %vm639, %v850
      %878 = vst.msk [vmem:[%s234 + $0x48] sm:$0xff] %vm639, %v852
      %879 = vst.msk [vmem:[%s234 + $0x50] sm:$0xff] %vm639, %v855
      %880 = vst.msk [vmem:[%s234 + $0x58] sm:$0xff] %vm639, %v857
      %881 = vst.msk [vmem:[%s234 + $0x60] sm:$0xff] %vm639, %v860
      %882 = vst.msk [vmem:[%s234 + $0x68] sm:$0xff] %vm639, %v862
      %883 = vst.msk [vmem:[%s234 + $0x70] sm:$0xff] %vm639, %v865
      %884 = vst.msk [vmem:[%s234 + $0x78] sm:$0xff] %vm639, %v867
      %v885 = vsel %vm639, %v830, 0.0
      %v886 = vsel %vm639, %v832, 0.0
      %v887 = vadd.f32 %v885, %v886
      %v888 = vsel %vm639, %v835, 0.0
      %v889 = vadd.f32 %v887, %v888
      %v890 = vsel %vm639, %v837, 0.0
      %v891 = vadd.f32 %v889, %v890
      %v892 = vsel %vm639, %v840, 0.0
      %v893 = vadd.f32 %v891, %v892
      %v894 = vsel %vm639, %v842, 0.0
      %v895 = vadd.f32 %v893, %v894
      %v896 = vsel %vm639, %v845, 0.0
      %v897 = vadd.f32 %v895, %v896
      %v898 = vsel %vm639, %v847, 0.0
      %v899 = vadd.f32 %v897, %v898
      %v900 = vsel %vm639, %v850, 0.0
      %v901 = vadd.f32 %v899, %v900
      %v902 = vsel %vm639, %v852, 0.0
      %v903 = vadd.f32 %v901, %v902
      %v904 = vsel %vm639, %v855, 0.0
      %v905 = vadd.f32 %v903, %v904
      %v906 = vsel %vm639, %v857, 0.0
      %v907 = vadd.f32 %v905, %v906
      %v908 = vsel %vm639, %v860, 0.0
      %v909 = vadd.f32 %v907, %v908
      %v910 = vsel %vm639, %v862, 0.0
      %v911 = vadd.f32 %v909, %v910
      %v912 = vsel %vm639, %v865, 0.0
      %v913 = vadd.f32 %v911, %v912
      %v914 = vsel %vm639, %v867, 0.0
      %v915 = vadd.f32 %v913, %v914
      %v916 = vrot.slane %v915, 4
      %v917 = vadd.f32 %v915, %v916
      %v918 = vrot.slane %v917, 2
      %v919 = vadd.f32 %v917, %v918
      %v920 = vrot.slane %v919, 1
      %v921 = vadd.f32 %v919, %v920
      %v922 = vmul.f32 %v830, %v830
      %v923 = vmul.f32 %v832, %v832
      %v924 = vmul.f32 %v835, %v835
      %v925 = vmul.f32 %v837, %v837
      %v926 = vmul.f32 %v840, %v840
      %v927 = vmul.f32 %v842, %v842
      %v928 = vmul.f32 %v845, %v845
      %v929 = vmul.f32 %v847, %v847
      %v930 = vmul.f32 %v850, %v850
      %v931 = vmul.f32 %v852, %v852
      %v932 = vmul.f32 %v855, %v855
      %v933 = vmul.f32 %v857, %v857
      %v934 = vmul.f32 %v860, %v860
      %v935 = vmul.f32 %v862, %v862
      %v936 = vmul.f32 %v865, %v865
      %v937 = vmul.f32 %v867, %v867
      %v938 = vsel %vm639, %v922, 0.0
      %v939 = vsel %vm639, %v923, 0.0
      %v940 = vadd.f32 %v938, %v939
      %v941 = vsel %vm639, %v924, 0.0
      %v942 = vadd.f32 %v940, %v941
      %v943 = vsel %vm639, %v925, 0.0
      %v944 = vadd.f32 %v942, %v943
      %v945 = vsel %vm639, %v926, 0.0
      %v946 = vadd.f32 %v944, %v945
      %v947 = vsel %vm639, %v927, 0.0
      %v948 = vadd.f32 %v946, %v947
      %v949 = vsel %vm639, %v928, 0.0
      %v950 = vadd.f32 %v948, %v949
      %v951 = vsel %vm639, %v929, 0.0
      %v952 = vadd.f32 %v950, %v951
      %v953 = vsel %vm639, %v930, 0.0
      %v954 = vadd.f32 %v952, %v953
      %v955 = vsel %vm639, %v931, 0.0
      %v956 = vadd.f32 %v954, %v955
      %v957 = vsel %vm639, %v932, 0.0
      %v958 = vadd.f32 %v956, %v957
      %v959 = vsel %vm639, %v933, 0.0
      %v960 = vadd.f32 %v958, %v959
      %v961 = vsel %vm639, %v934, 0.0
      %v962 = vadd.f32 %v960, %v961
      %v963 = vsel %vm639, %v935, 0.0
      %v964 = vadd.f32 %v962, %v963
      %v965 = vsel %vm639, %v936, 0.0
      %v966 = vadd.f32 %v964, %v965
      %v967 = vsel %vm639, %v937, 0.0
      %v968 = vadd.f32 %v966, %v967
      %v969 = vrot.slane %v968, 4
      %v970 = vadd.f32 %v968, %v969
      %v971 = vrot.slane %v970, 2
      %v972 = vadd.f32 %v970, %v971
      %v973 = vrot.slane %v972, 1
      %v974 = vadd.f32 %v972, %v973
      %vm975 = vcmask 1040384
      %v976 = vsel %vm975, %v921, %v974
      %vm977 = vcmask 25600
      %978 = vst.msk [vmem:[%s243] sm:$0x3] %vm977, %v976
      %s979 = smul.u32 8, %s21
      %p980 = scmp.lt.s32.totalorder %s20, 1
      %s981 = scalar_select %p980, %s20, 1
      %p982 = scmp.lt.s32.totalorder %s979, 15
      %s983 = scalar_select %p982, %s979, 15
      %s984 = smul.addr %s983, 2
      %s985 = smul.addr %s981, 32
      %s986 = sadd.s32 %s984, %s985
      %s987 = smul.addr %s986, 8
      %s988 = scalar_lea.vmem %s3, %s987
      %p989 = scmp.lt.s32.totalorder %s20, 1
      %s990 = scalar_select %p989, %s20, 1
      %p991 = scmp.lt.s32.totalorder %s21, 1
      %s992 = scalar_select %p991, %s21, 1
      %s993 = smul.addr %s990, 2
      %s994 = sadd.s32 %s992, %s993
      %s995 = smul.addr %s994, 2
      %s996 = scalar_lea.vmem %s4, %s995
      // Predicated region
      $region33: #{upsampl_forward.8} parent=31 // pred_check
        %p997 = pneg %p116
      $region34: #{upsampl_forward.8} parent=31 // pred_check_branch
        %999 = sbr.rel (%p997) target = $region36
      $region35: #{upsampl_forward.8} parent=31 // pred_region
        %s1000 = smul.u32 8, %s21
      $region36: #{upsampl_forward.8} parent=31 // pred_fallthru
        _
      // Predicated region
      $region37: #{upsampl_forward.8} parent=31 // pred_check
        %p1001 = pneg %p144
      $region38: #{upsampl_forward.8} parent=31 // pred_check_branch
        %1003 = sbr.rel (%p1001) target = $region40
      $region39: #{upsampl_forward.8} parent=31 // pred_region
        _
      $region40: #{upsampl_forward.8} parent=31 // pred_fallthru
        _
    $region32: #{upsampl_forward.8} parent=5 // pred_fallthru
      _
    %p1004 = scmp.le.s32.totalorder 2, %s11
    // Predicated region
    $region41: #{upsampl_forward.8} parent=5 // pred_check
      %p1005 = pneg %p1004
    $region42: #{upsampl_forward.8} parent=5 // pred_check_branch
      %1007 = sbr.rel (%p1005) target = $region44
    $region43: #{upsampl_forward.8} parent=5 // pred_region
      %s1008 = ssub.s32 %s11, 2
      // Predicated region
      $region45: #{upsampl_forward.8} parent=43 // pred_check
        %p1009 = pneg %p122
      $region46: #{upsampl_forward.8} parent=43 // pred_check_branch
        %1011 = sbr.rel (%p1009) target = $region48
      $region47: #{upsampl_forward.8} parent=43 // pred_region
        %s1012 = smul.u32 8, %s23
        %p1013 = scmp.lt.s32.totalorder %s22, 1
        %s1014 = scalar_select %p1013, %s22, 1
        %p1015 = scmp.lt.s32.totalorder %s1012, 15
        %s1016 = scalar_select %p1015, %s1012, 15
        %s1017 = smul.addr %s1016, 2
        %s1018 = smul.addr %s1014, 32
        %s1019 = sadd.s32 %s1017, %s1018
        %s1020 = smul.addr %s1019, 8
        %s1021 = scalar_lea.vmem %s3, %s1020
      $region48: #{upsampl_forward.8} parent=43 // pred_fallthru
        _
      // Predicated region
      $region49: #{upsampl_forward.8} parent=43 // pred_check
        %p1022 = pneg %p150
      $region50: #{upsampl_forward.8} parent=43 // pred_check_branch
        %1024 = sbr.rel (%p1022) target = $region52
      $region51: #{upsampl_forward.8} parent=43 // pred_region
        %p1025 = scmp.lt.s32.totalorder %s22, 1
        %s1026 = scalar_select %p1025, %s22, 1
        %p1027 = scmp.lt.s32.totalorder %s23, 1
        %s1028 = scalar_select %p1027, %s23, 1
        %s1029 = smul.addr %s1026, 2
        %s1030 = sadd.s32 %s1028, %s1029
        %s1031 = smul.addr %s1030, 2
        %s1032 = scalar_lea.vmem %s4, %s1031
      $region52: #{upsampl_forward.8} parent=43 // pred_fallthru
        _
    $region44: #{upsampl_forward.8} parent=5 // pred_fallthru
      _
  $region6: #{upsampl_forward.8} parent=0 // loop_footer
    %s15 = sadd.s32 1, %s11
  $region7: #{upsampl_forward.8} parent=0 // loop_footer_branch
    %10 = sbr.rel target = $region3
  $region8: #{upsampl_forward.8} parent=0 // loop_exit
    _

</llo_original>
